<compile_context>
chip_gen: v7x
topology: tpu7x:2x2x1
jax: 0.10.0
libtpu: 0.0.40
codegen_flags: <defaults>
</compile_context>

<pallas_src>
import jax
import jax.numpy as jnp
from jax import lax
from jax.experimental import pallas as pl
from jax.experimental.pallas import tpu as pltpu

C_IN, C_OUT, K = 3, 8, 3
N_PAIR = C_OUT // 2          # two output channels packed per 128 lanes
N_TAP = C_IN * K * K         # 27


def conv3x3_kernel(x_ref, w_ref, b_ref, o_ref):
    """3x3 SAME conv; channel pairs are lane-packed during compute only.

    x_ref: (C_IN, H, 2W)       f32 VMEM  input image duplicated across lane halves
    w_ref: (n_pairs, 27, 2W)   f32 VMEM  lane-packed taps: [...,:W]=ch 2p, [...,W:]=ch 2p+1
    b_ref: (n_pairs, 1, 2W)    f32 VMEM  lane-packed bias
    o_ref: (2*n_pairs, H, W)   f32 VMEM  NCHW-layout output channels
    """
    n_pairs = w_ref.shape[0]
    H, L = x_ref.shape[1], x_ref.shape[2]
    W = L // 2

    # Border masks (shared by every tap / channel), built once.
    col = lax.broadcasted_iota(jnp.int32, (H, L), 1) % W
    row = lax.broadcasted_iota(jnp.int32, (H, L), 0)
    col_ok = {-1: col != 0, 1: col != W - 1}
    row_ok = {-1: row != 0, 1: row != H - 1}
    zero = jnp.zeros((H, L), jnp.float32)

    # Live pair accumulators (<= 4 x 8 vregs), initialized with the bias.
    acc = [jnp.broadcast_to(b_ref[p], (H, L)) for p in range(n_pairs)]

    # Tap-outer loop: build each shifted + masked plane once, FMA it into every
    # pair accumulator, then let it die.  At most ~2 planes are live at a time.
    for ci in range(C_IN):
        for kw in range(K):
            dw = kw - 1
            base = x_ref[ci]                                   # (H, L) cheap reload
            if dw == 0:
                cvar = base
            else:
                cvar = jnp.where(col_ok[dw],
                                 pltpu.roll(base, shift=(-dw) % L, axis=1),
                                 zero)
            for kh in range(K):
                dh = kh - 1
                if dh == 0:
                    plane = cvar
                else:
                    plane = jnp.where(row_ok[dh],
                                      pltpu.roll(cvar, shift=(-dh) % H, axis=0),
                                      zero)
                t = ci * (K * K) + kh * K + kw                 # OIHW tap index
                for p in range(n_pairs):
                    acc[p] = acc[p] + plane * w_ref[p, t][None, :]

    # Un-pack channel pairs in-kernel: one lane roll per pair, then direct
    # NCHW stores (no post-kernel transpose / extra HBM round trip).
    for p in range(n_pairs):
        a = acc[p]
        hi = pltpu.roll(a, shift=W, axis=1)                    # lanes W.. -> 0..
        o_ref[2 * p] = a[:, :W]
        o_ref[2 * p + 1] = hi[:, :W]


def pack_conv_params(w, b, W):
    """One-time lane packing of the static conv params for channel pairs."""
    w_flat = w.reshape(C_OUT, N_TAP).astype(jnp.float32)                     # (8, 27)
    w_pairs = jnp.transpose(w_flat.reshape(N_PAIR, 2, N_TAP), (0, 2, 1))     # (4, 27, 2)
    w_lane = jnp.repeat(w_pairs, W, axis=2)                                  # (4, 27, 2W)
    b_lane = jnp.repeat(b.astype(jnp.float32).reshape(N_PAIR, 1, 2), W, axis=2)  # (4, 1, 2W)
    return w_lane, b_lane


def _conv2d_forward(x, w_lane, b_lane, pairs_per_step):
    """x: (1, C_IN, H, W) NCHW f32; w_lane/b_lane from pack_conv_params."""
    n, c, H, W = x.shape
    assert n == 1 and c == C_IN and N_PAIR % pairs_per_step == 0
    # Lane-dense input: duplicate the image across the two 64-lane halves.
    x_dup = jnp.concatenate([x[0], x[0]], axis=-1).astype(jnp.float32)       # (3, H, 2W)
    n_steps = N_PAIR // pairs_per_step

    out = pl.pallas_call(
        conv3x3_kernel,
        out_shape=jax.ShapeDtypeStruct((C_OUT, H, W), jnp.float32),
        grid=(n_steps,),
        in_specs=[
            pl.BlockSpec((C_IN, H, 2 * W), lambda g: (0, 0, 0)),
            pl.BlockSpec((pairs_per_step, N_TAP, 2 * W), lambda g: (g, 0, 0)),
            pl.BlockSpec((pairs_per_step, 1, 2 * W), lambda g: (g, 0, 0)),
        ],
        out_specs=pl.BlockSpec((2 * pairs_per_step, H, W), lambda g: (g, 0, 0)),
        compiler_params=pltpu.CompilerParams(
            dimension_semantics=("parallel",)),
    )(x_dup, w_lane, b_lane)
    return out[None]                                                          # (1, 8, H, W)


conv2d_forward = jax.jit(_conv2d_forward, static_argnums=(3,))


def _pairs_per_step():
    # v7x has 2 TensorCores per chip: split the channel pairs across a parallel
    # grid axis there.  v5e / v6e (1 TC) keep the single-step kernel, where an
    # extra grid step would only add overhead and duplicate the tap-plane work.
    try:
        kind = jax.devices()[0].device_kind.lower().replace(" ", "")
    except Exception:
        return N_PAIR
    if "v7" in kind or "tpu7" in kind:
        return max(1, N_PAIR // 2)
    return N_PAIR


def conv2d_reference(x, w, b):
    y = lax.conv_general_dilated(
        x, w, window_strides=(1, 1), padding="SAME",
        dimension_numbers=("NCHW", "OIHW", "NCHW"))
    return y + b[None, :, None, None]


if __name__ == "__main__":
    key = jax.random.PRNGKey(0)
    kx, kw, kb = jax.random.split(key, 3)

    H = W = 64   # matches the module's x = torch.randn(1, 3, 64, 64)
    x = jax.random.normal(kx, (1, C_IN, H, W), dtype=jnp.float32)

    # Deterministic Conv2d(3, 8, 3) parameters (PyTorch-style uniform init).
    fan_in = C_IN * K * K
    bound = 1.0 / (fan_in ** 0.5)
    w = jax.random.uniform(kw, (C_OUT, C_IN, K, K), jnp.float32, -bound, bound)
    b = jax.random.uniform(kb, (C_OUT,), jnp.float32, -bound, bound)

    # One-time (static-weight) lane packing, hoisted out of the forward path.
    w_lane, b_lane = jax.block_until_ready(pack_conv_params(w, b, W))

    y = conv2d_forward(x, w_lane, b_lane, _pairs_per_step())
    jax.block_until_ready(y)

    y_ref = conv2d_reference(x, w, b)
    assert y.shape == (1, C_OUT, H, W)
    assert jnp.allclose(y, y_ref, atol=1e-4, rtol=1e-4), "mismatch vs reference conv"

    print("KERNEL_OK")
</pallas_src>

<mosaic_0001>
module attributes {stable_mosaic.version = 11 : i64} {
  func.func @conv3x3_kernel(%arg0: i32, %arg1: memref<3x64x128xf32, #tpu.memory_space<vmem>>, %arg2: memref<4x27x128xf32, #tpu.memory_space<vmem>>, %arg3: memref<4x1x128xf32, #tpu.memory_space<vmem>>, %arg4: memref<8x64x64xf32, #tpu.memory_space<vmem>>) attributes {dimension_semantics = [#tpu.dimension_semantics<parallel>], iteration_bounds = array<i64: 1>, scalar_prefetch = 0 : i64, scratch_operands = 0 : i64, tpu.core_type = #tpu.core_type<tc>, window_params = [{pipeline_mode = #tpu.pipeline_mode<synchronous>, transform_indices = @transform_0, window_bounds = array<i64: 3, 64, 128>}, {transform_indices = @transform_1, window_bounds = array<i64: 4, 27, 128>}, {transform_indices = @transform_2, window_bounds = array<i64: 4, 1, 128>}, {transform_indices = @transform_3, window_bounds = array<i64: 8, 64, 64>}]} {
    %0 = tpu.iota {dimensions = array<i32: 1>} : vector<64x128xi32>
    %c64_i32 = arith.constant 64 : i32
    %c0_i32 = arith.constant 0 : i32
    %1 = arith.cmpi eq, %c64_i32, %c0_i32 : i32
    %c1_i32 = arith.constant 1 : i32
    %2 = arith.select %1, %c1_i32, %c64_i32 : i32
    %3 = vector.broadcast %2 : i32 to vector<64x128xi32>
    %4 = arith.remsi %0, %3 : vector<64x128xi32>
    %c0_i32_0 = arith.constant 0 : i32
    %5 = vector.broadcast %c0_i32_0 : i32 to vector<64x128xi32>
    %6 = arith.cmpi ne, %4, %5 : vector<64x128xi32>
    %c0_i32_1 = arith.constant 0 : i32
    %7 = vector.broadcast %c0_i32_1 : i32 to vector<64x128xi32>
    %8 = arith.cmpi slt, %4, %7 : vector<64x128xi32>
    %c0_i32_2 = arith.constant 0 : i32
    %9 = arith.cmpi slt, %2, %c0_i32_2 : i32
    %10 = vector.broadcast %9 : i1 to vector<64x128xi1>
    %11 = vector.broadcast %10 : vector<64x128xi1> to vector<64x128xi1>
    %12 = arith.xori %8, %11 : vector<64x128xi1>
    %13 = arith.andi %12, %6 : vector<64x128xi1>
    %14 = vector.broadcast %2 : i32 to vector<64x128xi32>
    %15 = arith.addi %4, %14 : vector<64x128xi32>
    %16 = arith.select %13, %15, %4 : vector<64x128xi1>, vector<64x128xi32>
    %17 = tpu.iota {dimensions = array<i32: 0>} : vector<64x128xi32>
    %c0_i32_3 = arith.constant 0 : i32
    %18 = vector.broadcast %c0_i32_3 : i32 to vector<64x128xi32>
    %19 = arith.cmpi ne, %16, %18 : vector<64x128xi32>
    %c63_i32 = arith.constant 63 : i32
    %20 = vector.broadcast %c63_i32 : i32 to vector<64x128xi32>
    %21 = arith.cmpi ne, %16, %20 : vector<64x128xi32>
    %c0_i32_4 = arith.constant 0 : i32
    %22 = vector.broadcast %c0_i32_4 : i32 to vector<64x128xi32>
    %23 = arith.cmpi ne, %17, %22 : vector<64x128xi32>
    %c63_i32_5 = arith.constant 63 : i32
    %24 = vector.broadcast %c63_i32_5 : i32 to vector<64x128xi32>
    %25 = arith.cmpi ne, %17, %24 : vector<64x128xi32>
    %cst = arith.constant 0.000000e+00 : f32
    %26 = vector.broadcast %cst : f32 to vector<64x128xf32>
    %c0 = arith.constant 0 : index
    %c0_6 = arith.constant 0 : index
    %c0_7 = arith.constant 0 : index
    %27 = vector.load %arg3[%c0, %c0_6, %c0_7] : memref<4x1x128xf32, #tpu.memory_space<vmem>>, vector<1x1x128xf32>
    %28 = vector.shape_cast %27 : vector<1x1x128xf32> to vector<1x128xf32>
    %29 = vector.shape_cast %28 : vector<1x128xf32> to vector<1x128xf32>
    %30 = vector.broadcast %29 : vector<1x128xf32> to vector<64x128xf32>
    %c1 = arith.constant 1 : index
    %c0_8 = arith.constant 0 : index
    %c0_9 = arith.constant 0 : index
    %31 = vector.load %arg3[%c1, %c0_8, %c0_9] : memref<4x1x128xf32, #tpu.memory_space<vmem>>, vector<1x1x128xf32>
    %32 = vector.shape_cast %31 : vector<1x1x128xf32> to vector<1x128xf32>
    %33 = vector.shape_cast %32 : vector<1x128xf32> to vector<1x128xf32>
    %34 = vector.broadcast %33 : vector<1x128xf32> to vector<64x128xf32>
    %c2 = arith.constant 2 : index
    %c0_10 = arith.constant 0 : index
    %c0_11 = arith.constant 0 : index
    %35 = vector.load %arg3[%c2, %c0_10, %c0_11] : memref<4x1x128xf32, #tpu.memory_space<vmem>>, vector<1x1x128xf32>
    %36 = vector.shape_cast %35 : vector<1x1x128xf32> to vector<1x128xf32>
    %37 = vector.shape_cast %36 : vector<1x128xf32> to vector<1x128xf32>
    %38 = vector.broadcast %37 : vector<1x128xf32> to vector<64x128xf32>
    %c3 = arith.constant 3 : index
    %c0_12 = arith.constant 0 : index
    %c0_13 = arith.constant 0 : index
    %39 = vector.load %arg3[%c3, %c0_12, %c0_13] : memref<4x1x128xf32, #tpu.memory_space<vmem>>, vector<1x1x128xf32>
    %40 = vector.shape_cast %39 : vector<1x1x128xf32> to vector<1x128xf32>
    %41 = vector.shape_cast %40 : vector<1x128xf32> to vector<1x128xf32>
    %42 = vector.broadcast %41 : vector<1x128xf32> to vector<64x128xf32>
    %c0_14 = arith.constant 0 : index
    %c0_15 = arith.constant 0 : index
    %c0_16 = arith.constant 0 : index
    %43 = vector.load %arg1[%c0_14, %c0_15, %c0_16] : memref<3x64x128xf32, #tpu.memory_space<vmem>>, vector<1x64x128xf32>
    %44 = vector.shape_cast %43 : vector<1x64x128xf32> to vector<64x128xf32>
    %c1_i32_17 = arith.constant 1 : i32
    %45 = tpu.dynamic_rotate %44 by %c1_i32_17 dim 1 : vector<64x128xf32>, i32 -> vector<64x128xf32>
    %46 = arith.select %19, %45, %26 : vector<64x128xi1>, vector<64x128xf32>
    %c1_i32_18 = arith.constant 1 : i32
    %47 = tpu.dynamic_rotate %46 by %c1_i32_18 dim 0 : vector<64x128xf32>, i32 -> vector<64x128xf32>
    %48 = arith.select %23, %47, %26 : vector<64x128xi1>, vector<64x128xf32>
    %c0_19 = arith.constant 0 : index
    %c0_20 = arith.constant 0 : index
    %c0_21 = arith.constant 0 : index
    %49 = vector.load %arg2[%c0_19, %c0_20, %c0_21] : memref<4x27x128xf32, #tpu.memory_space<vmem>>, vector<1x1x128xf32>
    %50 = vector.shape_cast %49 : vector<1x1x128xf32> to vector<128xf32>
    %51 = vector.shape_cast %50 : vector<128xf32> to vector<1x128xf32>
    %52 = vector.broadcast %51 : vector<1x128xf32> to vector<64x128xf32>
    %53 = arith.mulf %48, %52 : vector<64x128xf32>
    %54 = arith.addf %30, %53 : vector<64x128xf32>
    %c1_22 = arith.constant 1 : index
    %c0_23 = arith.constant 0 : index
    %c0_24 = arith.constant 0 : index
    %55 = vector.load %arg2[%c1_22, %c0_23, %c0_24] : memref<4x27x128xf32, #tpu.memory_space<vmem>>, vector<1x1x128xf32>
    %56 = vector.shape_cast %55 : vector<1x1x128xf32> to vector<128xf32>
    %57 = vector.shape_cast %56 : vector<128xf32> to vector<1x128xf32>
    %58 = vector.broadcast %57 : vector<1x128xf32> to vector<64x128xf32>
    %59 = arith.mulf %48, %58 : vector<64x128xf32>
    %60 = arith.addf %34, %59 : vector<64x128xf32>
    %c2_25 = arith.constant 2 : index
    %c0_26 = arith.constant 0 : index
    %c0_27 = arith.constant 0 : index
    %61 = vector.load %arg2[%c2_25, %c0_26, %c0_27] : memref<4x27x128xf32, #tpu.memory_space<vmem>>, vector<1x1x128xf32>
    %62 = vector.shape_cast %61 : vector<1x1x128xf32> to vector<128xf32>
    %63 = vector.shape_cast %62 : vector<128xf32> to vector<1x128xf32>
    %64 = vector.broadcast %63 : vector<1x128xf32> to vector<64x128xf32>
    %65 = arith.mulf %48, %64 : vector<64x128xf32>
    %66 = arith.addf %38, %65 : vector<64x128xf32>
    %c3_28 = arith.constant 3 : index
    %c0_29 = arith.constant 0 : index
    %c0_30 = arith.constant 0 : index
    %67 = vector.load %arg2[%c3_28, %c0_29, %c0_30] : memref<4x27x128xf32, #tpu.memory_space<vmem>>, vector<1x1x128xf32>
    %68 = vector.shape_cast %67 : vector<1x1x128xf32> to vector<128xf32>
    %69 = vector.shape_cast %68 : vector<128xf32> to vector<1x128xf32>
    %70 = vector.broadcast %69 : vector<1x128xf32> to vector<64x128xf32>
    %71 = arith.mulf %48, %70 : vector<64x128xf32>
    %72 = arith.addf %42, %71 : vector<64x128xf32>
    %c0_31 = arith.constant 0 : index
    %c3_32 = arith.constant 3 : index
    %c0_33 = arith.constant 0 : index
    %73 = vector.load %arg2[%c0_31, %c3_32, %c0_33] : memref<4x27x128xf32, #tpu.memory_space<vmem>>, vector<1x1x128xf32>
    %74 = vector.shape_cast %73 : vector<1x1x128xf32> to vector<128xf32>
    %75 = vector.shape_cast %74 : vector<128xf32> to vector<1x128xf32>
    %76 = vector.broadcast %75 : vector<1x128xf32> to vector<64x128xf32>
    %77 = arith.mulf %46, %76 : vector<64x128xf32>
    %78 = arith.addf %54, %77 : vector<64x128xf32>
    %c1_34 = arith.constant 1 : index
    %c3_35 = arith.constant 3 : index
    %c0_36 = arith.constant 0 : index
    %79 = vector.load %arg2[%c1_34, %c3_35, %c0_36] : memref<4x27x128xf32, #tpu.memory_space<vmem>>, vector<1x1x128xf32>
    %80 = vector.shape_cast %79 : vector<1x1x128xf32> to vector<128xf32>
    %81 = vector.shape_cast %80 : vector<128xf32> to vector<1x128xf32>
    %82 = vector.broadcast %81 : vector<1x128xf32> to vector<64x128xf32>
    %83 = arith.mulf %46, %82 : vector<64x128xf32>
    %84 = arith.addf %60, %83 : vector<64x128xf32>
    %c2_37 = arith.constant 2 : index
    %c3_38 = arith.constant 3 : index
    %c0_39 = arith.constant 0 : index
    %85 = vector.load %arg2[%c2_37, %c3_38, %c0_39] : memref<4x27x128xf32, #tpu.memory_space<vmem>>, vector<1x1x128xf32>
    %86 = vector.shape_cast %85 : vector<1x1x128xf32> to vector<128xf32>
    %87 = vector.shape_cast %86 : vector<128xf32> to vector<1x128xf32>
    %88 = vector.broadcast %87 : vector<1x128xf32> to vector<64x128xf32>
    %89 = arith.mulf %46, %88 : vector<64x128xf32>
    %90 = arith.addf %66, %89 : vector<64x128xf32>
    %c3_40 = arith.constant 3 : index
    %c3_41 = arith.constant 3 : index
    %c0_42 = arith.constant 0 : index
    %91 = vector.load %arg2[%c3_40, %c3_41, %c0_42] : memref<4x27x128xf32, #tpu.memory_space<vmem>>, vector<1x1x128xf32>
    %92 = vector.shape_cast %91 : vector<1x1x128xf32> to vector<128xf32>
    %93 = vector.shape_cast %92 : vector<128xf32> to vector<1x128xf32>
    %94 = vector.broadcast %93 : vector<1x128xf32> to vector<64x128xf32>
    %95 = arith.mulf %46, %94 : vector<64x128xf32>
    %96 = arith.addf %72, %95 : vector<64x128xf32>
    %c63_i32_43 = arith.constant 63 : i32
    %97 = tpu.dynamic_rotate %46 by %c63_i32_43 dim 0 : vector<64x128xf32>, i32 -> vector<64x128xf32>
    %98 = arith.select %25, %97, %26 : vector<64x128xi1>, vector<64x128xf32>
    %c0_44 = arith.constant 0 : index
    %c6 = arith.constant 6 : index
    %c0_45 = arith.constant 0 : index
    %99 = vector.load %arg2[%c0_44, %c6, %c0_45] : memref<4x27x128xf32, #tpu.memory_space<vmem>>, vector<1x1x128xf32>
    %100 = vector.shape_cast %99 : vector<1x1x128xf32> to vector<128xf32>
    %101 = vector.shape_cast %100 : vector<128xf32> to vector<1x128xf32>
    %102 = vector.broadcast %101 : vector<1x128xf32> to vector<64x128xf32>
    %103 = arith.mulf %98, %102 : vector<64x128xf32>
    %104 = arith.addf %78, %103 : vector<64x128xf32>
    %c1_46 = arith.constant 1 : index
    %c6_47 = arith.constant 6 : index
    %c0_48 = arith.constant 0 : index
    %105 = vector.load %arg2[%c1_46, %c6_47, %c0_48] : memref<4x27x128xf32, #tpu.memory_space<vmem>>, vector<1x1x128xf32>
    %106 = vector.shape_cast %105 : vector<1x1x128xf32> to vector<128xf32>
    %107 = vector.shape_cast %106 : vector<128xf32> to vector<1x128xf32>
    %108 = vector.broadcast %107 : vector<1x128xf32> to vector<64x128xf32>
    %109 = arith.mulf %98, %108 : vector<64x128xf32>
    %110 = arith.addf %84, %109 : vector<64x128xf32>
    %c2_49 = arith.constant 2 : index
    %c6_50 = arith.constant 6 : index
    %c0_51 = arith.constant 0 : index
    %111 = vector.load %arg2[%c2_49, %c6_50, %c0_51] : memref<4x27x128xf32, #tpu.memory_space<vmem>>, vector<1x1x128xf32>
    %112 = vector.shape_cast %111 : vector<1x1x128xf32> to vector<128xf32>
    %113 = vector.shape_cast %112 : vector<128xf32> to vector<1x128xf32>
    %114 = vector.broadcast %113 : vector<1x128xf32> to vector<64x128xf32>
    %115 = arith.mulf %98, %114 : vector<64x128xf32>
    %116 = arith.addf %90, %115 : vector<64x128xf32>
    %c3_52 = arith.constant 3 : index
    %c6_53 = arith.constant 6 : index
    %c0_54 = arith.constant 0 : index
    %117 = vector.load %arg2[%c3_52, %c6_53, %c0_54] : memref<4x27x128xf32, #tpu.memory_space<vmem>>, vector<1x1x128xf32>
    %118 = vector.shape_cast %117 : vector<1x1x128xf32> to vector<128xf32>
    %119 = vector.shape_cast %118 : vector<128xf32> to vector<1x128xf32>
    %120 = vector.broadcast %119 : vector<1x128xf32> to vector<64x128xf32>
    %121 = arith.mulf %98, %120 : vector<64x128xf32>
    %122 = arith.addf %96, %121 : vector<64x128xf32>
    %c0_55 = arith.constant 0 : index
    %c0_56 = arith.constant 0 : index
    %c0_57 = arith.constant 0 : index
    %123 = vector.load %arg1[%c0_55, %c0_56, %c0_57] : memref<3x64x128xf32, #tpu.memory_space<vmem>>, vector<1x64x128xf32>
    %124 = vector.shape_cast %123 : vector<1x64x128xf32> to vector<64x128xf32>
    %c1_i32_58 = arith.constant 1 : i32
    %125 = tpu.dynamic_rotate %124 by %c1_i32_58 dim 0 : vector<64x128xf32>, i32 -> vector<64x128xf32>
    %126 = arith.select %23, %125, %26 : vector<64x128xi1>, vector<64x128xf32>
    %c0_59 = arith.constant 0 : index
    %c1_60 = arith.constant 1 : index
    %c0_61 = arith.constant 0 : index
    %127 = vector.load %arg2[%c0_59, %c1_60, %c0_61] : memref<4x27x128xf32, #tpu.memory_space<vmem>>, vector<1x1x128xf32>
    %128 = vector.shape_cast %127 : vector<1x1x128xf32> to vector<128xf32>
    %129 = vector.shape_cast %128 : vector<128xf32> to vector<1x128xf32>
    %130 = vector.broadcast %129 : vector<1x128xf32> to vector<64x128xf32>
    %131 = arith.mulf %126, %130 : vector<64x128xf32>
    %132 = arith.addf %104, %131 : vector<64x128xf32>
    %c1_62 = arith.constant 1 : index
    %c1_63 = arith.constant 1 : index
    %c0_64 = arith.constant 0 : index
    %133 = vector.load %arg2[%c1_62, %c1_63, %c0_64] : memref<4x27x128xf32, #tpu.memory_space<vmem>>, vector<1x1x128xf32>
    %134 = vector.shape_cast %133 : vector<1x1x128xf32> to vector<128xf32>
    %135 = vector.shape_cast %134 : vector<128xf32> to vector<1x128xf32>
    %136 = vector.broadcast %135 : vector<1x128xf32> to vector<64x128xf32>
    %137 = arith.mulf %126, %136 : vector<64x128xf32>
    %138 = arith.addf %110, %137 : vector<64x128xf32>
    %c2_65 = arith.constant 2 : index
    %c1_66 = arith.constant 1 : index
    %c0_67 = arith.constant 0 : index
    %139 = vector.load %arg2[%c2_65, %c1_66, %c0_67] : memref<4x27x128xf32, #tpu.memory_space<vmem>>, vector<1x1x128xf32>
    %140 = vector.shape_cast %139 : vector<1x1x128xf32> to vector<128xf32>
    %141 = vector.shape_cast %140 : vector<128xf32> to vector<1x128xf32>
    %142 = vector.broadcast %141 : vector<1x128xf32> to vector<64x128xf32>
    %143 = arith.mulf %126, %142 : vector<64x128xf32>
    %144 = arith.addf %116, %143 : vector<64x128xf32>
    %c3_68 = arith.constant 3 : index
    %c1_69 = arith.constant 1 : index
    %c0_70 = arith.constant 0 : index
    %145 = vector.load %arg2[%c3_68, %c1_69, %c0_70] : memref<4x27x128xf32, #tpu.memory_space<vmem>>, vector<1x1x128xf32>
    %146 = vector.shape_cast %145 : vector<1x1x128xf32> to vector<128xf32>
    %147 = vector.shape_cast %146 : vector<128xf32> to vector<1x128xf32>
    %148 = vector.broadcast %147 : vector<1x128xf32> to vector<64x128xf32>
    %149 = arith.mulf %126, %148 : vector<64x128xf32>
    %150 = arith.addf %122, %149 : vector<64x128xf32>
    %c0_71 = arith.constant 0 : index
    %c4 = arith.constant 4 : index
    %c0_72 = arith.constant 0 : index
    %151 = vector.load %arg2[%c0_71, %c4, %c0_72] : memref<4x27x128xf32, #tpu.memory_space<vmem>>, vector<1x1x128xf32>
    %152 = vector.shape_cast %151 : vector<1x1x128xf32> to vector<128xf32>
    %153 = vector.shape_cast %152 : vector<128xf32> to vector<1x128xf32>
    %154 = vector.broadcast %153 : vector<1x128xf32> to vector<64x128xf32>
    %155 = arith.mulf %124, %154 : vector<64x128xf32>
    %156 = arith.addf %132, %155 : vector<64x128xf32>
    %c1_73 = arith.constant 1 : index
    %c4_74 = arith.constant 4 : index
    %c0_75 = arith.constant 0 : index
    %157 = vector.load %arg2[%c1_73, %c4_74, %c0_75] : memref<4x27x128xf32, #tpu.memory_space<vmem>>, vector<1x1x128xf32>
    %158 = vector.shape_cast %157 : vector<1x1x128xf32> to vector<128xf32>
    %159 = vector.shape_cast %158 : vector<128xf32> to vector<1x128xf32>
    %160 = vector.broadcast %159 : vector<1x128xf32> to vector<64x128xf32>
    %161 = arith.mulf %124, %160 : vector<64x128xf32>
    %162 = arith.addf %138, %161 : vector<64x128xf32>
    %c2_76 = arith.constant 2 : index
    %c4_77 = arith.constant 4 : index
    %c0_78 = arith.constant 0 : index
    %163 = vector.load %arg2[%c2_76, %c4_77, %c0_78] : memref<4x27x128xf32, #tpu.memory_space<vmem>>, vector<1x1x128xf32>
    %164 = vector.shape_cast %163 : vector<1x1x128xf32> to vector<128xf32>
    %165 = vector.shape_cast %164 : vector<128xf32> to vector<1x128xf32>
    %166 = vector.broadcast %165 : vector<1x128xf32> to vector<64x128xf32>
    %167 = arith.mulf %124, %166 : vector<64x128xf32>
    %168 = arith.addf %144, %167 : vector<64x128xf32>
    %c3_79 = arith.constant 3 : index
    %c4_80 = arith.constant 4 : index
    %c0_81 = arith.constant 0 : index
    %169 = vector.load %arg2[%c3_79, %c4_80, %c0_81] : memref<4x27x128xf32, #tpu.memory_space<vmem>>, vector<1x1x128xf32>
    %170 = vector.shape_cast %169 : vector<1x1x128xf32> to vector<128xf32>
    %171 = vector.shape_cast %170 : vector<128xf32> to vector<1x128xf32>
    %172 = vector.broadcast %171 : vector<1x128xf32> to vector<64x128xf32>
    %173 = arith.mulf %124, %172 : vector<64x128xf32>
    %174 = arith.addf %150, %173 : vector<64x128xf32>
    %c63_i32_82 = arith.constant 63 : i32
    %175 = tpu.dynamic_rotate %124 by %c63_i32_82 dim 0 : vector<64x128xf32>, i32 -> vector<64x128xf32>
    %176 = arith.select %25, %175, %26 : vector<64x128xi1>, vector<64x128xf32>
    %c0_83 = arith.constant 0 : index
    %c7 = arith.constant 7 : index
    %c0_84 = arith.constant 0 : index
    %177 = vector.load %arg2[%c0_83, %c7, %c0_84] : memref<4x27x128xf32, #tpu.memory_space<vmem>>, vector<1x1x128xf32>
    %178 = vector.shape_cast %177 : vector<1x1x128xf32> to vector<128xf32>
    %179 = vector.shape_cast %178 : vector<128xf32> to vector<1x128xf32>
    %180 = vector.broadcast %179 : vector<1x128xf32> to vector<64x128xf32>
    %181 = arith.mulf %176, %180 : vector<64x128xf32>
    %182 = arith.addf %156, %181 : vector<64x128xf32>
    %c1_85 = arith.constant 1 : index
    %c7_86 = arith.constant 7 : index
    %c0_87 = arith.constant 0 : index
    %183 = vector.load %arg2[%c1_85, %c7_86, %c0_87] : memref<4x27x128xf32, #tpu.memory_space<vmem>>, vector<1x1x128xf32>
    %184 = vector.shape_cast %183 : vector<1x1x128xf32> to vector<128xf32>
    %185 = vector.shape_cast %184 : vector<128xf32> to vector<1x128xf32>
    %186 = vector.broadcast %185 : vector<1x128xf32> to vector<64x128xf32>
    %187 = arith.mulf %176, %186 : vector<64x128xf32>
    %188 = arith.addf %162, %187 : vector<64x128xf32>
    %c2_88 = arith.constant 2 : index
    %c7_89 = arith.constant 7 : index
    %c0_90 = arith.constant 0 : index
    %189 = vector.load %arg2[%c2_88, %c7_89, %c0_90] : memref<4x27x128xf32, #tpu.memory_space<vmem>>, vector<1x1x128xf32>
    %190 = vector.shape_cast %189 : vector<1x1x128xf32> to vector<128xf32>
    %191 = vector.shape_cast %190 : vector<128xf32> to vector<1x128xf32>
    %192 = vector.broadcast %191 : vector<1x128xf32> to vector<64x128xf32>
    %193 = arith.mulf %176, %192 : vector<64x128xf32>
    %194 = arith.addf %168, %193 : vector<64x128xf32>
    %c3_91 = arith.constant 3 : index
    %c7_92 = arith.constant 7 : index
    %c0_93 = arith.constant 0 : index
    %195 = vector.load %arg2[%c3_91, %c7_92, %c0_93] : memref<4x27x128xf32, #tpu.memory_space<vmem>>, vector<1x1x128xf32>
    %196 = vector.shape_cast %195 : vector<1x1x128xf32> to vector<128xf32>
    %197 = vector.shape_cast %196 : vector<128xf32> to vector<1x128xf32>
    %198 = vector.broadcast %197 : vector<1x128xf32> to vector<64x128xf32>
    %199 = arith.mulf %176, %198 : vector<64x128xf32>
    %200 = arith.addf %174, %199 : vector<64x128xf32>
    %c0_94 = arith.constant 0 : index
    %c0_95 = arith.constant 0 : index
    %c0_96 = arith.constant 0 : index
    %201 = vector.load %arg1[%c0_94, %c0_95, %c0_96] : memref<3x64x128xf32, #tpu.memory_space<vmem>>, vector<1x64x128xf32>
    %202 = vector.shape_cast %201 : vector<1x64x128xf32> to vector<64x128xf32>
    %c127_i32 = arith.constant 127 : i32
    %203 = tpu.dynamic_rotate %202 by %c127_i32 dim 1 : vector<64x128xf32>, i32 -> vector<64x128xf32>
    %204 = arith.select %21, %203, %26 : vector<64x128xi1>, vector<64x128xf32>
    %c1_i32_97 = arith.constant 1 : i32
    %205 = tpu.dynamic_rotate %204 by %c1_i32_97 dim 0 : vector<64x128xf32>, i32 -> vector<64x128xf32>
    %206 = arith.select %23, %205, %26 : vector<64x128xi1>, vector<64x128xf32>
    %c0_98 = arith.constant 0 : index
    %c2_99 = arith.constant 2 : index
    %c0_100 = arith.constant 0 : index
    %207 = vector.load %arg2[%c0_98, %c2_99, %c0_100] : memref<4x27x128xf32, #tpu.memory_space<vmem>>, vector<1x1x128xf32>
    %208 = vector.shape_cast %207 : vector<1x1x128xf32> to vector<128xf32>
    %209 = vector.shape_cast %208 : vector<128xf32> to vector<1x128xf32>
    %210 = vector.broadcast %209 : vector<1x128xf32> to vector<64x128xf32>
    %211 = arith.mulf %206, %210 : vector<64x128xf32>
    %212 = arith.addf %182, %211 : vector<64x128xf32>
    %c1_101 = arith.constant 1 : index
    %c2_102 = arith.constant 2 : index
    %c0_103 = arith.constant 0 : index
    %213 = vector.load %arg2[%c1_101, %c2_102, %c0_103] : memref<4x27x128xf32, #tpu.memory_space<vmem>>, vector<1x1x128xf32>
    %214 = vector.shape_cast %213 : vector<1x1x128xf32> to vector<128xf32>
    %215 = vector.shape_cast %214 : vector<128xf32> to vector<1x128xf32>
    %216 = vector.broadcast %215 : vector<1x128xf32> to vector<64x128xf32>
    %217 = arith.mulf %206, %216 : vector<64x128xf32>
    %218 = arith.addf %188, %217 : vector<64x128xf32>
    %c2_104 = arith.constant 2 : index
    %c2_105 = arith.constant 2 : index
    %c0_106 = arith.constant 0 : index
    %219 = vector.load %arg2[%c2_104, %c2_105, %c0_106] : memref<4x27x128xf32, #tpu.memory_space<vmem>>, vector<1x1x128xf32>
    %220 = vector.shape_cast %219 : vector<1x1x128xf32> to vector<128xf32>
    %221 = vector.shape_cast %220 : vector<128xf32> to vector<1x128xf32>
    %222 = vector.broadcast %221 : vector<1x128xf32> to vector<64x128xf32>
    %223 = arith.mulf %206, %222 : vector<64x128xf32>
    %224 = arith.addf %194, %223 : vector<64x128xf32>
    %c3_107 = arith.constant 3 : index
    %c2_108 = arith.constant 2 : index
    %c0_109 = arith.constant 0 : index
    %225 = vector.load %arg2[%c3_107, %c2_108, %c0_109] : memref<4x27x128xf32, #tpu.memory_space<vmem>>, vector<1x1x128xf32>
    %226 = vector.shape_cast %225 : vector<1x1x128xf32> to vector<128xf32>
    %227 = vector.shape_cast %226 : vector<128xf32> to vector<1x128xf32>
    %228 = vector.broadcast %227 : vector<1x128xf32> to vector<64x128xf32>
    %229 = arith.mulf %206, %228 : vector<64x128xf32>
    %230 = arith.addf %200, %229 : vector<64x128xf32>
    %c0_110 = arith.constant 0 : index
    %c5 = arith.constant 5 : index
    %c0_111 = arith.constant 0 : index
    %231 = vector.load %arg2[%c0_110, %c5, %c0_111] : memref<4x27x128xf32, #tpu.memory_space<vmem>>, vector<1x1x128xf32>
    %232 = vector.shape_cast %231 : vector<1x1x128xf32> to vector<128xf32>
    %233 = vector.shape_cast %232 : vector<128xf32> to vector<1x128xf32>
    %234 = vector.broadcast %233 : vector<1x128xf32> to vector<64x128xf32>
    %235 = arith.mulf %204, %234 : vector<64x128xf32>
    %236 = arith.addf %212, %235 : vector<64x128xf32>
    %c1_112 = arith.constant 1 : index
    %c5_113 = arith.constant 5 : index
    %c0_114 = arith.constant 0 : index
    %237 = vector.load %arg2[%c1_112, %c5_113, %c0_114] : memref<4x27x128xf32, #tpu.memory_space<vmem>>, vector<1x1x128xf32>
    %238 = vector.shape_cast %237 : vector<1x1x128xf32> to vector<128xf32>
    %239 = vector.shape_cast %238 : vector<128xf32> to vector<1x128xf32>
    %240 = vector.broadcast %239 : vector<1x128xf32> to vector<64x128xf32>
    %241 = arith.mulf %204, %240 : vector<64x128xf32>
    %242 = arith.addf %218, %241 : vector<64x128xf32>
    %c2_115 = arith.constant 2 : index
    %c5_116 = arith.constant 5 : index
    %c0_117 = arith.constant 0 : index
    %243 = vector.load %arg2[%c2_115, %c5_116, %c0_117] : memref<4x27x128xf32, #tpu.memory_space<vmem>>, vector<1x1x128xf32>
    %244 = vector.shape_cast %243 : vector<1x1x128xf32> to vector<128xf32>
    %245 = vector.shape_cast %244 : vector<128xf32> to vector<1x128xf32>
    %246 = vector.broadcast %245 : vector<1x128xf32> to vector<64x128xf32>
    %247 = arith.mulf %204, %246 : vector<64x128xf32>
    %248 = arith.addf %224, %247 : vector<64x128xf32>
    %c3_118 = arith.constant 3 : index
    %c5_119 = arith.constant 5 : index
    %c0_120 = arith.constant 0 : index
    %249 = vector.load %arg2[%c3_118, %c5_119, %c0_120] : memref<4x27x128xf32, #tpu.memory_space<vmem>>, vector<1x1x128xf32>
    %250 = vector.shape_cast %249 : vector<1x1x128xf32> to vector<128xf32>
    %251 = vector.shape_cast %250 : vector<128xf32> to vector<1x128xf32>
    %252 = vector.broadcast %251 : vector<1x128xf32> to vector<64x128xf32>
    %253 = arith.mulf %204, %252 : vector<64x128xf32>
    %254 = arith.addf %230, %253 : vector<64x128xf32>
    %c63_i32_121 = arith.constant 63 : i32
    %255 = tpu.dynamic_rotate %204 by %c63_i32_121 dim 0 : vector<64x128xf32>, i32 -> vector<64x128xf32>
    %256 = arith.select %25, %255, %26 : vector<64x128xi1>, vector<64x128xf32>
    %c0_122 = arith.constant 0 : index
    %c8 = arith.constant 8 : index
    %c0_123 = arith.constant 0 : index
    %257 = vector.load %arg2[%c0_122, %c8, %c0_123] : memref<4x27x128xf32, #tpu.memory_space<vmem>>, vector<1x1x128xf32>
    %258 = vector.shape_cast %257 : vector<1x1x128xf32> to vector<128xf32>
    %259 = vector.shape_cast %258 : vector<128xf32> to vector<1x128xf32>
    %260 = vector.broadcast %259 : vector<1x128xf32> to vector<64x128xf32>
    %261 = arith.mulf %256, %260 : vector<64x128xf32>
    %262 = arith.addf %236, %261 : vector<64x128xf32>
    %c1_124 = arith.constant 1 : index
    %c8_125 = arith.constant 8 : index
    %c0_126 = arith.constant 0 : index
    %263 = vector.load %arg2[%c1_124, %c8_125, %c0_126] : memref<4x27x128xf32, #tpu.memory_space<vmem>>, vector<1x1x128xf32>
    %264 = vector.shape_cast %263 : vector<1x1x128xf32> to vector<128xf32>
    %265 = vector.shape_cast %264 : vector<128xf32> to vector<1x128xf32>
    %266 = vector.broadcast %265 : vector<1x128xf32> to vector<64x128xf32>
    %267 = arith.mulf %256, %266 : vector<64x128xf32>
    %268 = arith.addf %242, %267 : vector<64x128xf32>
    %c2_127 = arith.constant 2 : index
    %c8_128 = arith.constant 8 : index
    %c0_129 = arith.constant 0 : index
    %269 = vector.load %arg2[%c2_127, %c8_128, %c0_129] : memref<4x27x128xf32, #tpu.memory_space<vmem>>, vector<1x1x128xf32>
    %270 = vector.shape_cast %269 : vector<1x1x128xf32> to vector<128xf32>
    %271 = vector.shape_cast %270 : vector<128xf32> to vector<1x128xf32>
    %272 = vector.broadcast %271 : vector<1x128xf32> to vector<64x128xf32>
    %273 = arith.mulf %256, %272 : vector<64x128xf32>
    %274 = arith.addf %248, %273 : vector<64x128xf32>
    %c3_130 = arith.constant 3 : index
    %c8_131 = arith.constant 8 : index
    %c0_132 = arith.constant 0 : index
    %275 = vector.load %arg2[%c3_130, %c8_131, %c0_132] : memref<4x27x128xf32, #tpu.memory_space<vmem>>, vector<1x1x128xf32>
    %276 = vector.shape_cast %275 : vector<1x1x128xf32> to vector<128xf32>
    %277 = vector.shape_cast %276 : vector<128xf32> to vector<1x128xf32>
    %278 = vector.broadcast %277 : vector<1x128xf32> to vector<64x128xf32>
    %279 = arith.mulf %256, %278 : vector<64x128xf32>
    %280 = arith.addf %254, %279 : vector<64x128xf32>
    %c1_133 = arith.constant 1 : index
    %c0_134 = arith.constant 0 : index
    %c0_135 = arith.constant 0 : index
    %281 = vector.load %arg1[%c1_133, %c0_134, %c0_135] : memref<3x64x128xf32, #tpu.memory_space<vmem>>, vector<1x64x128xf32>
    %282 = vector.shape_cast %281 : vector<1x64x128xf32> to vector<64x128xf32>
    %c1_i32_136 = arith.constant 1 : i32
    %283 = tpu.dynamic_rotate %282 by %c1_i32_136 dim 1 : vector<64x128xf32>, i32 -> vector<64x128xf32>
    %284 = arith.select %19, %283, %26 : vector<64x128xi1>, vector<64x128xf32>
    %c1_i32_137 = arith.constant 1 : i32
    %285 = tpu.dynamic_rotate %284 by %c1_i32_137 dim 0 : vector<64x128xf32>, i32 -> vector<64x128xf32>
    %286 = arith.select %23, %285, %26 : vector<64x128xi1>, vector<64x128xf32>
    %c0_138 = arith.constant 0 : index
    %c9 = arith.constant 9 : index
    %c0_139 = arith.constant 0 : index
    %287 = vector.load %arg2[%c0_138, %c9, %c0_139] : memref<4x27x128xf32, #tpu.memory_space<vmem>>, vector<1x1x128xf32>
    %288 = vector.shape_cast %287 : vector<1x1x128xf32> to vector<128xf32>
    %289 = vector.shape_cast %288 : vector<128xf32> to vector<1x128xf32>
    %290 = vector.broadcast %289 : vector<1x128xf32> to vector<64x128xf32>
    %291 = arith.mulf %286, %290 : vector<64x128xf32>
    %292 = arith.addf %262, %291 : vector<64x128xf32>
    %c1_140 = arith.constant 1 : index
    %c9_141 = arith.constant 9 : index
    %c0_142 = arith.constant 0 : index
    %293 = vector.load %arg2[%c1_140, %c9_141, %c0_142] : memref<4x27x128xf32, #tpu.memory_space<vmem>>, vector<1x1x128xf32>
    %294 = vector.shape_cast %293 : vector<1x1x128xf32> to vector<128xf32>
    %295 = vector.shape_cast %294 : vector<128xf32> to vector<1x128xf32>
    %296 = vector.broadcast %295 : vector<1x128xf32> to vector<64x128xf32>
    %297 = arith.mulf %286, %296 : vector<64x128xf32>
    %298 = arith.addf %268, %297 : vector<64x128xf32>
    %c2_143 = arith.constant 2 : index
    %c9_144 = arith.constant 9 : index
    %c0_145 = arith.constant 0 : index
    %299 = vector.load %arg2[%c2_143, %c9_144, %c0_145] : memref<4x27x128xf32, #tpu.memory_space<vmem>>, vector<1x1x128xf32>
    %300 = vector.shape_cast %299 : vector<1x1x128xf32> to vector<128xf32>
    %301 = vector.shape_cast %300 : vector<128xf32> to vector<1x128xf32>
    %302 = vector.broadcast %301 : vector<1x128xf32> to vector<64x128xf32>
    %303 = arith.mulf %286, %302 : vector<64x128xf32>
    %304 = arith.addf %274, %303 : vector<64x128xf32>
    %c3_146 = arith.constant 3 : index
    %c9_147 = arith.constant 9 : index
    %c0_148 = arith.constant 0 : index
    %305 = vector.load %arg2[%c3_146, %c9_147, %c0_148] : memref<4x27x128xf32, #tpu.memory_space<vmem>>, vector<1x1x128xf32>
    %306 = vector.shape_cast %305 : vector<1x1x128xf32> to vector<128xf32>
    %307 = vector.shape_cast %306 : vector<128xf32> to vector<1x128xf32>
    %308 = vector.broadcast %307 : vector<1x128xf32> to vector<64x128xf32>
    %309 = arith.mulf %286, %308 : vector<64x128xf32>
    %310 = arith.addf %280, %309 : vector<64x128xf32>
    %c0_149 = arith.constant 0 : index
    %c12 = arith.constant 12 : index
    %c0_150 = arith.constant 0 : index
    %311 = vector.load %arg2[%c0_149, %c12, %c0_150] : memref<4x27x128xf32, #tpu.memory_space<vmem>>, vector<1x1x128xf32>
    %312 = vector.shape_cast %311 : vector<1x1x128xf32> to vector<128xf32>
    %313 = vector.shape_cast %312 : vector<128xf32> to vector<1x128xf32>
    %314 = vector.broadcast %313 : vector<1x128xf32> to vector<64x128xf32>
    %315 = arith.mulf %284, %314 : vector<64x128xf32>
    %316 = arith.addf %292, %315 : vector<64x128xf32>
    %c1_151 = arith.constant 1 : index
    %c12_152 = arith.constant 12 : index
    %c0_153 = arith.constant 0 : index
    %317 = vector.load %arg2[%c1_151, %c12_152, %c0_153] : memref<4x27x128xf32, #tpu.memory_space<vmem>>, vector<1x1x128xf32>
    %318 = vector.shape_cast %317 : vector<1x1x128xf32> to vector<128xf32>
    %319 = vector.shape_cast %318 : vector<128xf32> to vector<1x128xf32>
    %320 = vector.broadcast %319 : vector<1x128xf32> to vector<64x128xf32>
    %321 = arith.mulf %284, %320 : vector<64x128xf32>
    %322 = arith.addf %298, %321 : vector<64x128xf32>
    %c2_154 = arith.constant 2 : index
    %c12_155 = arith.constant 12 : index
    %c0_156 = arith.constant 0 : index
    %323 = vector.load %arg2[%c2_154, %c12_155, %c0_156] : memref<4x27x128xf32, #tpu.memory_space<vmem>>, vector<1x1x128xf32>
    %324 = vector.shape_cast %323 : vector<1x1x128xf32> to vector<128xf32>
    %325 = vector.shape_cast %324 : vector<128xf32> to vector<1x128xf32>
    %326 = vector.broadcast %325 : vector<1x128xf32> to vector<64x128xf32>
    %327 = arith.mulf %284, %326 : vector<64x128xf32>
    %328 = arith.addf %304, %327 : vector<64x128xf32>
    %c3_157 = arith.constant 3 : index
    %c12_158 = arith.constant 12 : index
    %c0_159 = arith.constant 0 : index
    %329 = vector.load %arg2[%c3_157, %c12_158, %c0_159] : memref<4x27x128xf32, #tpu.memory_space<vmem>>, vector<1x1x128xf32>
    %330 = vector.shape_cast %329 : vector<1x1x128xf32> to vector<128xf32>
    %331 = vector.shape_cast %330 : vector<128xf32> to vector<1x128xf32>
    %332 = vector.broadcast %331 : vector<1x128xf32> to vector<64x128xf32>
    %333 = arith.mulf %284, %332 : vector<64x128xf32>
    %334 = arith.addf %310, %333 : vector<64x128xf32>
    %c63_i32_160 = arith.constant 63 : i32
    %335 = tpu.dynamic_rotate %284 by %c63_i32_160 dim 0 : vector<64x128xf32>, i32 -> vector<64x128xf32>
    %336 = arith.select %25, %335, %26 : vector<64x128xi1>, vector<64x128xf32>
    %c0_161 = arith.constant 0 : index
    %c15 = arith.constant 15 : index
    %c0_162 = arith.constant 0 : index
    %337 = vector.load %arg2[%c0_161, %c15, %c0_162] : memref<4x27x128xf32, #tpu.memory_space<vmem>>, vector<1x1x128xf32>
    %338 = vector.shape_cast %337 : vector<1x1x128xf32> to vector<128xf32>
    %339 = vector.shape_cast %338 : vector<128xf32> to vector<1x128xf32>
    %340 = vector.broadcast %339 : vector<1x128xf32> to vector<64x128xf32>
    %341 = arith.mulf %336, %340 : vector<64x128xf32>
    %342 = arith.addf %316, %341 : vector<64x128xf32>
    %c1_163 = arith.constant 1 : index
    %c15_164 = arith.constant 15 : index
    %c0_165 = arith.constant 0 : index
    %343 = vector.load %arg2[%c1_163, %c15_164, %c0_165] : memref<4x27x128xf32, #tpu.memory_space<vmem>>, vector<1x1x128xf32>
    %344 = vector.shape_cast %343 : vector<1x1x128xf32> to vector<128xf32>
    %345 = vector.shape_cast %344 : vector<128xf32> to vector<1x128xf32>
    %346 = vector.broadcast %345 : vector<1x128xf32> to vector<64x128xf32>
    %347 = arith.mulf %336, %346 : vector<64x128xf32>
    %348 = arith.addf %322, %347 : vector<64x128xf32>
    %c2_166 = arith.constant 2 : index
    %c15_167 = arith.constant 15 : index
    %c0_168 = arith.constant 0 : index
    %349 = vector.load %arg2[%c2_166, %c15_167, %c0_168] : memref<4x27x128xf32, #tpu.memory_space<vmem>>, vector<1x1x128xf32>
    %350 = vector.shape_cast %349 : vector<1x1x128xf32> to vector<128xf32>
    %351 = vector.shape_cast %350 : vector<128xf32> to vector<1x128xf32>
    %352 = vector.broadcast %351 : vector<1x128xf32> to vector<64x128xf32>
    %353 = arith.mulf %336, %352 : vector<64x128xf32>
    %354 = arith.addf %328, %353 : vector<64x128xf32>
    %c3_169 = arith.constant 3 : index
    %c15_170 = arith.constant 15 : index
    %c0_171 = arith.constant 0 : index
    %355 = vector.load %arg2[%c3_169, %c15_170, %c0_171] : memref<4x27x128xf32, #tpu.memory_space<vmem>>, vector<1x1x128xf32>
    %356 = vector.shape_cast %355 : vector<1x1x128xf32> to vector<128xf32>
    %357 = vector.shape_cast %356 : vector<128xf32> to vector<1x128xf32>
    %358 = vector.broadcast %357 : vector<1x128xf32> to vector<64x128xf32>
    %359 = arith.mulf %336, %358 : vector<64x128xf32>
    %360 = arith.addf %334, %359 : vector<64x128xf32>
    %c1_172 = arith.constant 1 : index
    %c0_173 = arith.constant 0 : index
    %c0_174 = arith.constant 0 : index
    %361 = vector.load %arg1[%c1_172, %c0_173, %c0_174] : memref<3x64x128xf32, #tpu.memory_space<vmem>>, vector<1x64x128xf32>
    %362 = vector.shape_cast %361 : vector<1x64x128xf32> to vector<64x128xf32>
    %c1_i32_175 = arith.constant 1 : i32
    %363 = tpu.dynamic_rotate %362 by %c1_i32_175 dim 0 : vector<64x128xf32>, i32 -> vector<64x128xf32>
    %364 = arith.select %23, %363, %26 : vector<64x128xi1>, vector<64x128xf32>
    %c0_176 = arith.constant 0 : index
    %c10 = arith.constant 10 : index
    %c0_177 = arith.constant 0 : index
    %365 = vector.load %arg2[%c0_176, %c10, %c0_177] : memref<4x27x128xf32, #tpu.memory_space<vmem>>, vector<1x1x128xf32>
    %366 = vector.shape_cast %365 : vector<1x1x128xf32> to vector<128xf32>
    %367 = vector.shape_cast %366 : vector<128xf32> to vector<1x128xf32>
    %368 = vector.broadcast %367 : vector<1x128xf32> to vector<64x128xf32>
    %369 = arith.mulf %364, %368 : vector<64x128xf32>
    %370 = arith.addf %342, %369 : vector<64x128xf32>
    %c1_178 = arith.constant 1 : index
    %c10_179 = arith.constant 10 : index
    %c0_180 = arith.constant 0 : index
    %371 = vector.load %arg2[%c1_178, %c10_179, %c0_180] : memref<4x27x128xf32, #tpu.memory_space<vmem>>, vector<1x1x128xf32>
    %372 = vector.shape_cast %371 : vector<1x1x128xf32> to vector<128xf32>
    %373 = vector.shape_cast %372 : vector<128xf32> to vector<1x128xf32>
    %374 = vector.broadcast %373 : vector<1x128xf32> to vector<64x128xf32>
    %375 = arith.mulf %364, %374 : vector<64x128xf32>
    %376 = arith.addf %348, %375 : vector<64x128xf32>
    %c2_181 = arith.constant 2 : index
    %c10_182 = arith.constant 10 : index
    %c0_183 = arith.constant 0 : index
    %377 = vector.load %arg2[%c2_181, %c10_182, %c0_183] : memref<4x27x128xf32, #tpu.memory_space<vmem>>, vector<1x1x128xf32>
    %378 = vector.shape_cast %377 : vector<1x1x128xf32> to vector<128xf32>
    %379 = vector.shape_cast %378 : vector<128xf32> to vector<1x128xf32>
    %380 = vector.broadcast %379 : vector<1x128xf32> to vector<64x128xf32>
    %381 = arith.mulf %364, %380 : vector<64x128xf32>
    %382 = arith.addf %354, %381 : vector<64x128xf32>
    %c3_184 = arith.constant 3 : index
    %c10_185 = arith.constant 10 : index
    %c0_186 = arith.constant 0 : index
    %383 = vector.load %arg2[%c3_184, %c10_185, %c0_186] : memref<4x27x128xf32, #tpu.memory_space<vmem>>, vector<1x1x128xf32>
    %384 = vector.shape_cast %383 : vector<1x1x128xf32> to vector<128xf32>
    %385 = vector.shape_cast %384 : vector<128xf32> to vector<1x128xf32>
    %386 = vector.broadcast %385 : vector<1x128xf32> to vector<64x128xf32>
    %387 = arith.mulf %364, %386 : vector<64x128xf32>
    %388 = arith.addf %360, %387 : vector<64x128xf32>
    %c0_187 = arith.constant 0 : index
    %c13 = arith.constant 13 : index
    %c0_188 = arith.constant 0 : index
    %389 = vector.load %arg2[%c0_187, %c13, %c0_188] : memref<4x27x128xf32, #tpu.memory_space<vmem>>, vector<1x1x128xf32>
    %390 = vector.shape_cast %389 : vector<1x1x128xf32> to vector<128xf32>
    %391 = vector.shape_cast %390 : vector<128xf32> to vector<1x128xf32>
    %392 = vector.broadcast %391 : vector<1x128xf32> to vector<64x128xf32>
    %393 = arith.mulf %362, %392 : vector<64x128xf32>
    %394 = arith.addf %370, %393 : vector<64x128xf32>
    %c1_189 = arith.constant 1 : index
    %c13_190 = arith.constant 13 : index
    %c0_191 = arith.constant 0 : index
    %395 = vector.load %arg2[%c1_189, %c13_190, %c0_191] : memref<4x27x128xf32, #tpu.memory_space<vmem>>, vector<1x1x128xf32>
    %396 = vector.shape_cast %395 : vector<1x1x128xf32> to vector<128xf32>
    %397 = vector.shape_cast %396 : vector<128xf32> to vector<1x128xf32>
    %398 = vector.broadcast %397 : vector<1x128xf32> to vector<64x128xf32>
    %399 = arith.mulf %362, %398 : vector<64x128xf32>
    %400 = arith.addf %376, %399 : vector<64x128xf32>
    %c2_192 = arith.constant 2 : index
    %c13_193 = arith.constant 13 : index
    %c0_194 = arith.constant 0 : index
    %401 = vector.load %arg2[%c2_192, %c13_193, %c0_194] : memref<4x27x128xf32, #tpu.memory_space<vmem>>, vector<1x1x128xf32>
    %402 = vector.shape_cast %401 : vector<1x1x128xf32> to vector<128xf32>
    %403 = vector.shape_cast %402 : vector<128xf32> to vector<1x128xf32>
    %404 = vector.broadcast %403 : vector<1x128xf32> to vector<64x128xf32>
    %405 = arith.mulf %362, %404 : vector<64x128xf32>
    %406 = arith.addf %382, %405 : vector<64x128xf32>
    %c3_195 = arith.constant 3 : index
    %c13_196 = arith.constant 13 : index
    %c0_197 = arith.constant 0 : index
    %407 = vector.load %arg2[%c3_195, %c13_196, %c0_197] : memref<4x27x128xf32, #tpu.memory_space<vmem>>, vector<1x1x128xf32>
    %408 = vector.shape_cast %407 : vector<1x1x128xf32> to vector<128xf32>
    %409 = vector.shape_cast %408 : vector<128xf32> to vector<1x128xf32>
    %410 = vector.broadcast %409 : vector<1x128xf32> to vector<64x128xf32>
    %411 = arith.mulf %362, %410 : vector<64x128xf32>
    %412 = arith.addf %388, %411 : vector<64x128xf32>
    %c63_i32_198 = arith.constant 63 : i32
    %413 = tpu.dynamic_rotate %362 by %c63_i32_198 dim 0 : vector<64x128xf32>, i32 -> vector<64x128xf32>
    %414 = arith.select %25, %413, %26 : vector<64x128xi1>, vector<64x128xf32>
    %c0_199 = arith.constant 0 : index
    %c16 = arith.constant 16 : index
    %c0_200 = arith.constant 0 : index
    %415 = vector.load %arg2[%c0_199, %c16, %c0_200] : memref<4x27x128xf32, #tpu.memory_space<vmem>>, vector<1x1x128xf32>
    %416 = vector.shape_cast %415 : vector<1x1x128xf32> to vector<128xf32>
    %417 = vector.shape_cast %416 : vector<128xf32> to vector<1x128xf32>
    %418 = vector.broadcast %417 : vector<1x128xf32> to vector<64x128xf32>
    %419 = arith.mulf %414, %418 : vector<64x128xf32>
    %420 = arith.addf %394, %419 : vector<64x128xf32>
    %c1_201 = arith.constant 1 : index
    %c16_202 = arith.constant 16 : index
    %c0_203 = arith.constant 0 : index
    %421 = vector.load %arg2[%c1_201, %c16_202, %c0_203] : memref<4x27x128xf32, #tpu.memory_space<vmem>>, vector<1x1x128xf32>
    %422 = vector.shape_cast %421 : vector<1x1x128xf32> to vector<128xf32>
    %423 = vector.shape_cast %422 : vector<128xf32> to vector<1x128xf32>
    %424 = vector.broadcast %423 : vector<1x128xf32> to vector<64x128xf32>
    %425 = arith.mulf %414, %424 : vector<64x128xf32>
    %426 = arith.addf %400, %425 : vector<64x128xf32>
    %c2_204 = arith.constant 2 : index
    %c16_205 = arith.constant 16 : index
    %c0_206 = arith.constant 0 : index
    %427 = vector.load %arg2[%c2_204, %c16_205, %c0_206] : memref<4x27x128xf32, #tpu.memory_space<vmem>>, vector<1x1x128xf32>
    %428 = vector.shape_cast %427 : vector<1x1x128xf32> to vector<128xf32>
    %429 = vector.shape_cast %428 : vector<128xf32> to vector<1x128xf32>
    %430 = vector.broadcast %429 : vector<1x128xf32> to vector<64x128xf32>
    %431 = arith.mulf %414, %430 : vector<64x128xf32>
    %432 = arith.addf %406, %431 : vector<64x128xf32>
    %c3_207 = arith.constant 3 : index
    %c16_208 = arith.constant 16 : index
    %c0_209 = arith.constant 0 : index
    %433 = vector.load %arg2[%c3_207, %c16_208, %c0_209] : memref<4x27x128xf32, #tpu.memory_space<vmem>>, vector<1x1x128xf32>
    %434 = vector.shape_cast %433 : vector<1x1x128xf32> to vector<128xf32>
    %435 = vector.shape_cast %434 : vector<128xf32> to vector<1x128xf32>
    %436 = vector.broadcast %435 : vector<1x128xf32> to vector<64x128xf32>
    %437 = arith.mulf %414, %436 : vector<64x128xf32>
    %438 = arith.addf %412, %437 : vector<64x128xf32>
    %c1_210 = arith.constant 1 : index
    %c0_211 = arith.constant 0 : index
    %c0_212 = arith.constant 0 : index
    %439 = vector.load %arg1[%c1_210, %c0_211, %c0_212] : memref<3x64x128xf32, #tpu.memory_space<vmem>>, vector<1x64x128xf32>
    %440 = vector.shape_cast %439 : vector<1x64x128xf32> to vector<64x128xf32>
    %c127_i32_213 = arith.constant 127 : i32
    %441 = tpu.dynamic_rotate %440 by %c127_i32_213 dim 1 : vector<64x128xf32>, i32 -> vector<64x128xf32>
    %442 = arith.select %21, %441, %26 : vector<64x128xi1>, vector<64x128xf32>
    %c1_i32_214 = arith.constant 1 : i32
    %443 = tpu.dynamic_rotate %442 by %c1_i32_214 dim 0 : vector<64x128xf32>, i32 -> vector<64x128xf32>
    %444 = arith.select %23, %443, %26 : vector<64x128xi1>, vector<64x128xf32>
    %c0_215 = arith.constant 0 : index
    %c11 = arith.constant 11 : index
    %c0_216 = arith.constant 0 : index
    %445 = vector.load %arg2[%c0_215, %c11, %c0_216] : memref<4x27x128xf32, #tpu.memory_space<vmem>>, vector<1x1x128xf32>
    %446 = vector.shape_cast %445 : vector<1x1x128xf32> to vector<128xf32>
    %447 = vector.shape_cast %446 : vector<128xf32> to vector<1x128xf32>
    %448 = vector.broadcast %447 : vector<1x128xf32> to vector<64x128xf32>
    %449 = arith.mulf %444, %448 : vector<64x128xf32>
    %450 = arith.addf %420, %449 : vector<64x128xf32>
    %c1_217 = arith.constant 1 : index
    %c11_218 = arith.constant 11 : index
    %c0_219 = arith.constant 0 : index
    %451 = vector.load %arg2[%c1_217, %c11_218, %c0_219] : memref<4x27x128xf32, #tpu.memory_space<vmem>>, vector<1x1x128xf32>
    %452 = vector.shape_cast %451 : vector<1x1x128xf32> to vector<128xf32>
    %453 = vector.shape_cast %452 : vector<128xf32> to vector<1x128xf32>
    %454 = vector.broadcast %453 : vector<1x128xf32> to vector<64x128xf32>
    %455 = arith.mulf %444, %454 : vector<64x128xf32>
    %456 = arith.addf %426, %455 : vector<64x128xf32>
    %c2_220 = arith.constant 2 : index
    %c11_221 = arith.constant 11 : index
    %c0_222 = arith.constant 0 : index
    %457 = vector.load %arg2[%c2_220, %c11_221, %c0_222] : memref<4x27x128xf32, #tpu.memory_space<vmem>>, vector<1x1x128xf32>
    %458 = vector.shape_cast %457 : vector<1x1x128xf32> to vector<128xf32>
    %459 = vector.shape_cast %458 : vector<128xf32> to vector<1x128xf32>
    %460 = vector.broadcast %459 : vector<1x128xf32> to vector<64x128xf32>
    %461 = arith.mulf %444, %460 : vector<64x128xf32>
    %462 = arith.addf %432, %461 : vector<64x128xf32>
    %c3_223 = arith.constant 3 : index
    %c11_224 = arith.constant 11 : index
    %c0_225 = arith.constant 0 : index
    %463 = vector.load %arg2[%c3_223, %c11_224, %c0_225] : memref<4x27x128xf32, #tpu.memory_space<vmem>>, vector<1x1x128xf32>
    %464 = vector.shape_cast %463 : vector<1x1x128xf32> to vector<128xf32>
    %465 = vector.shape_cast %464 : vector<128xf32> to vector<1x128xf32>
    %466 = vector.broadcast %465 : vector<1x128xf32> to vector<64x128xf32>
    %467 = arith.mulf %444, %466 : vector<64x128xf32>
    %468 = arith.addf %438, %467 : vector<64x128xf32>
    %c0_226 = arith.constant 0 : index
    %c14 = arith.constant 14 : index
    %c0_227 = arith.constant 0 : index
    %469 = vector.load %arg2[%c0_226, %c14, %c0_227] : memref<4x27x128xf32, #tpu.memory_space<vmem>>, vector<1x1x128xf32>
    %470 = vector.shape_cast %469 : vector<1x1x128xf32> to vector<128xf32>
    %471 = vector.shape_cast %470 : vector<128xf32> to vector<1x128xf32>
    %472 = vector.broadcast %471 : vector<1x128xf32> to vector<64x128xf32>
    %473 = arith.mulf %442, %472 : vector<64x128xf32>
    %474 = arith.addf %450, %473 : vector<64x128xf32>
    %c1_228 = arith.constant 1 : index
    %c14_229 = arith.constant 14 : index
    %c0_230 = arith.constant 0 : index
    %475 = vector.load %arg2[%c1_228, %c14_229, %c0_230] : memref<4x27x128xf32, #tpu.memory_space<vmem>>, vector<1x1x128xf32>
    %476 = vector.shape_cast %475 : vector<1x1x128xf32> to vector<128xf32>
    %477 = vector.shape_cast %476 : vector<128xf32> to vector<1x128xf32>
    %478 = vector.broadcast %477 : vector<1x128xf32> to vector<64x128xf32>
    %479 = arith.mulf %442, %478 : vector<64x128xf32>
    %480 = arith.addf %456, %479 : vector<64x128xf32>
    %c2_231 = arith.constant 2 : index
    %c14_232 = arith.constant 14 : index
    %c0_233 = arith.constant 0 : index
    %481 = vector.load %arg2[%c2_231, %c14_232, %c0_233] : memref<4x27x128xf32, #tpu.memory_space<vmem>>, vector<1x1x128xf32>
    %482 = vector.shape_cast %481 : vector<1x1x128xf32> to vector<128xf32>
    %483 = vector.shape_cast %482 : vector<128xf32> to vector<1x128xf32>
    %484 = vector.broadcast %483 : vector<1x128xf32> to vector<64x128xf32>
    %485 = arith.mulf %442, %484 : vector<64x128xf32>
    %486 = arith.addf %462, %485 : vector<64x128xf32>
    %c3_234 = arith.constant 3 : index
    %c14_235 = arith.constant 14 : index
    %c0_236 = arith.constant 0 : index
    %487 = vector.load %arg2[%c3_234, %c14_235, %c0_236] : memref<4x27x128xf32, #tpu.memory_space<vmem>>, vector<1x1x128xf32>
    %488 = vector.shape_cast %487 : vector<1x1x128xf32> to vector<128xf32>
    %489 = vector.shape_cast %488 : vector<128xf32> to vector<1x128xf32>
    %490 = vector.broadcast %489 : vector<1x128xf32> to vector<64x128xf32>
    %491 = arith.mulf %442, %490 : vector<64x128xf32>
    %492 = arith.addf %468, %491 : vector<64x128xf32>
    %c63_i32_237 = arith.constant 63 : i32
    %493 = tpu.dynamic_rotate %442 by %c63_i32_237 dim 0 : vector<64x128xf32>, i32 -> vector<64x128xf32>
    %494 = arith.select %25, %493, %26 : vector<64x128xi1>, vector<64x128xf32>
    %c0_238 = arith.constant 0 : index
    %c17 = arith.constant 17 : index
    %c0_239 = arith.constant 0 : index
    %495 = vector.load %arg2[%c0_238, %c17, %c0_239] : memref<4x27x128xf32, #tpu.memory_space<vmem>>, vector<1x1x128xf32>
    %496 = vector.shape_cast %495 : vector<1x1x128xf32> to vector<128xf32>
    %497 = vector.shape_cast %496 : vector<128xf32> to vector<1x128xf32>
    %498 = vector.broadcast %497 : vector<1x128xf32> to vector<64x128xf32>
    %499 = arith.mulf %494, %498 : vector<64x128xf32>
    %500 = arith.addf %474, %499 : vector<64x128xf32>
    %c1_240 = arith.constant 1 : index
    %c17_241 = arith.constant 17 : index
    %c0_242 = arith.constant 0 : index
    %501 = vector.load %arg2[%c1_240, %c17_241, %c0_242] : memref<4x27x128xf32, #tpu.memory_space<vmem>>, vector<1x1x128xf32>
    %502 = vector.shape_cast %501 : vector<1x1x128xf32> to vector<128xf32>
    %503 = vector.shape_cast %502 : vector<128xf32> to vector<1x128xf32>
    %504 = vector.broadcast %503 : vector<1x128xf32> to vector<64x128xf32>
    %505 = arith.mulf %494, %504 : vector<64x128xf32>
    %506 = arith.addf %480, %505 : vector<64x128xf32>
    %c2_243 = arith.constant 2 : index
    %c17_244 = arith.constant 17 : index
    %c0_245 = arith.constant 0 : index
    %507 = vector.load %arg2[%c2_243, %c17_244, %c0_245] : memref<4x27x128xf32, #tpu.memory_space<vmem>>, vector<1x1x128xf32>
    %508 = vector.shape_cast %507 : vector<1x1x128xf32> to vector<128xf32>
    %509 = vector.shape_cast %508 : vector<128xf32> to vector<1x128xf32>
    %510 = vector.broadcast %509 : vector<1x128xf32> to vector<64x128xf32>
    %511 = arith.mulf %494, %510 : vector<64x128xf32>
    %512 = arith.addf %486, %511 : vector<64x128xf32>
    %c3_246 = arith.constant 3 : index
    %c17_247 = arith.constant 17 : index
    %c0_248 = arith.constant 0 : index
    %513 = vector.load %arg2[%c3_246, %c17_247, %c0_248] : memref<4x27x128xf32, #tpu.memory_space<vmem>>, vector<1x1x128xf32>
    %514 = vector.shape_cast %513 : vector<1x1x128xf32> to vector<128xf32>
    %515 = vector.shape_cast %514 : vector<128xf32> to vector<1x128xf32>
    %516 = vector.broadcast %515 : vector<1x128xf32> to vector<64x128xf32>
    %517 = arith.mulf %494, %516 : vector<64x128xf32>
    %518 = arith.addf %492, %517 : vector<64x128xf32>
    %c2_249 = arith.constant 2 : index
    %c0_250 = arith.constant 0 : index
    %c0_251 = arith.constant 0 : index
    %519 = vector.load %arg1[%c2_249, %c0_250, %c0_251] : memref<3x64x128xf32, #tpu.memory_space<vmem>>, vector<1x64x128xf32>
    %520 = vector.shape_cast %519 : vector<1x64x128xf32> to vector<64x128xf32>
    %c1_i32_252 = arith.constant 1 : i32
    %521 = tpu.dynamic_rotate %520 by %c1_i32_252 dim 1 : vector<64x128xf32>, i32 -> vector<64x128xf32>
    %522 = arith.select %19, %521, %26 : vector<64x128xi1>, vector<64x128xf32>
    %c1_i32_253 = arith.constant 1 : i32
    %523 = tpu.dynamic_rotate %522 by %c1_i32_253 dim 0 : vector<64x128xf32>, i32 -> vector<64x128xf32>
    %524 = arith.select %23, %523, %26 : vector<64x128xi1>, vector<64x128xf32>
    %c0_254 = arith.constant 0 : index
    %c18 = arith.constant 18 : index
    %c0_255 = arith.constant 0 : index
    %525 = vector.load %arg2[%c0_254, %c18, %c0_255] : memref<4x27x128xf32, #tpu.memory_space<vmem>>, vector<1x1x128xf32>
    %526 = vector.shape_cast %525 : vector<1x1x128xf32> to vector<128xf32>
    %527 = vector.shape_cast %526 : vector<128xf32> to vector<1x128xf32>
    %528 = vector.broadcast %527 : vector<1x128xf32> to vector<64x128xf32>
    %529 = arith.mulf %524, %528 : vector<64x128xf32>
    %530 = arith.addf %500, %529 : vector<64x128xf32>
    %c1_256 = arith.constant 1 : index
    %c18_257 = arith.constant 18 : index
    %c0_258 = arith.constant 0 : index
    %531 = vector.load %arg2[%c1_256, %c18_257, %c0_258] : memref<4x27x128xf32, #tpu.memory_space<vmem>>, vector<1x1x128xf32>
    %532 = vector.shape_cast %531 : vector<1x1x128xf32> to vector<128xf32>
    %533 = vector.shape_cast %532 : vector<128xf32> to vector<1x128xf32>
    %534 = vector.broadcast %533 : vector<1x128xf32> to vector<64x128xf32>
    %535 = arith.mulf %524, %534 : vector<64x128xf32>
    %536 = arith.addf %506, %535 : vector<64x128xf32>
    %c2_259 = arith.constant 2 : index
    %c18_260 = arith.constant 18 : index
    %c0_261 = arith.constant 0 : index
    %537 = vector.load %arg2[%c2_259, %c18_260, %c0_261] : memref<4x27x128xf32, #tpu.memory_space<vmem>>, vector<1x1x128xf32>
    %538 = vector.shape_cast %537 : vector<1x1x128xf32> to vector<128xf32>
    %539 = vector.shape_cast %538 : vector<128xf32> to vector<1x128xf32>
    %540 = vector.broadcast %539 : vector<1x128xf32> to vector<64x128xf32>
    %541 = arith.mulf %524, %540 : vector<64x128xf32>
    %542 = arith.addf %512, %541 : vector<64x128xf32>
    %c3_262 = arith.constant 3 : index
    %c18_263 = arith.constant 18 : index
    %c0_264 = arith.constant 0 : index
    %543 = vector.load %arg2[%c3_262, %c18_263, %c0_264] : memref<4x27x128xf32, #tpu.memory_space<vmem>>, vector<1x1x128xf32>
    %544 = vector.shape_cast %543 : vector<1x1x128xf32> to vector<128xf32>
    %545 = vector.shape_cast %544 : vector<128xf32> to vector<1x128xf32>
    %546 = vector.broadcast %545 : vector<1x128xf32> to vector<64x128xf32>
    %547 = arith.mulf %524, %546 : vector<64x128xf32>
    %548 = arith.addf %518, %547 : vector<64x128xf32>
    %c0_265 = arith.constant 0 : index
    %c21 = arith.constant 21 : index
    %c0_266 = arith.constant 0 : index
    %549 = vector.load %arg2[%c0_265, %c21, %c0_266] : memref<4x27x128xf32, #tpu.memory_space<vmem>>, vector<1x1x128xf32>
    %550 = vector.shape_cast %549 : vector<1x1x128xf32> to vector<128xf32>
    %551 = vector.shape_cast %550 : vector<128xf32> to vector<1x128xf32>
    %552 = vector.broadcast %551 : vector<1x128xf32> to vector<64x128xf32>
    %553 = arith.mulf %522, %552 : vector<64x128xf32>
    %554 = arith.addf %530, %553 : vector<64x128xf32>
    %c1_267 = arith.constant 1 : index
    %c21_268 = arith.constant 21 : index
    %c0_269 = arith.constant 0 : index
    %555 = vector.load %arg2[%c1_267, %c21_268, %c0_269] : memref<4x27x128xf32, #tpu.memory_space<vmem>>, vector<1x1x128xf32>
    %556 = vector.shape_cast %555 : vector<1x1x128xf32> to vector<128xf32>
    %557 = vector.shape_cast %556 : vector<128xf32> to vector<1x128xf32>
    %558 = vector.broadcast %557 : vector<1x128xf32> to vector<64x128xf32>
    %559 = arith.mulf %522, %558 : vector<64x128xf32>
    %560 = arith.addf %536, %559 : vector<64x128xf32>
    %c2_270 = arith.constant 2 : index
    %c21_271 = arith.constant 21 : index
    %c0_272 = arith.constant 0 : index
    %561 = vector.load %arg2[%c2_270, %c21_271, %c0_272] : memref<4x27x128xf32, #tpu.memory_space<vmem>>, vector<1x1x128xf32>
    %562 = vector.shape_cast %561 : vector<1x1x128xf32> to vector<128xf32>
    %563 = vector.shape_cast %562 : vector<128xf32> to vector<1x128xf32>
    %564 = vector.broadcast %563 : vector<1x128xf32> to vector<64x128xf32>
    %565 = arith.mulf %522, %564 : vector<64x128xf32>
    %566 = arith.addf %542, %565 : vector<64x128xf32>
    %c3_273 = arith.constant 3 : index
    %c21_274 = arith.constant 21 : index
    %c0_275 = arith.constant 0 : index
    %567 = vector.load %arg2[%c3_273, %c21_274, %c0_275] : memref<4x27x128xf32, #tpu.memory_space<vmem>>, vector<1x1x128xf32>
    %568 = vector.shape_cast %567 : vector<1x1x128xf32> to vector<128xf32>
    %569 = vector.shape_cast %568 : vector<128xf32> to vector<1x128xf32>
    %570 = vector.broadcast %569 : vector<1x128xf32> to vector<64x128xf32>
    %571 = arith.mulf %522, %570 : vector<64x128xf32>
    %572 = arith.addf %548, %571 : vector<64x128xf32>
    %c63_i32_276 = arith.constant 63 : i32
    %573 = tpu.dynamic_rotate %522 by %c63_i32_276 dim 0 : vector<64x128xf32>, i32 -> vector<64x128xf32>
    %574 = arith.select %25, %573, %26 : vector<64x128xi1>, vector<64x128xf32>
    %c0_277 = arith.constant 0 : index
    %c24 = arith.constant 24 : index
    %c0_278 = arith.constant 0 : index
    %575 = vector.load %arg2[%c0_277, %c24, %c0_278] : memref<4x27x128xf32, #tpu.memory_space<vmem>>, vector<1x1x128xf32>
    %576 = vector.shape_cast %575 : vector<1x1x128xf32> to vector<128xf32>
    %577 = vector.shape_cast %576 : vector<128xf32> to vector<1x128xf32>
    %578 = vector.broadcast %577 : vector<1x128xf32> to vector<64x128xf32>
    %579 = arith.mulf %574, %578 : vector<64x128xf32>
    %580 = arith.addf %554, %579 : vector<64x128xf32>
    %c1_279 = arith.constant 1 : index
    %c24_280 = arith.constant 24 : index
    %c0_281 = arith.constant 0 : index
    %581 = vector.load %arg2[%c1_279, %c24_280, %c0_281] : memref<4x27x128xf32, #tpu.memory_space<vmem>>, vector<1x1x128xf32>
    %582 = vector.shape_cast %581 : vector<1x1x128xf32> to vector<128xf32>
    %583 = vector.shape_cast %582 : vector<128xf32> to vector<1x128xf32>
    %584 = vector.broadcast %583 : vector<1x128xf32> to vector<64x128xf32>
    %585 = arith.mulf %574, %584 : vector<64x128xf32>
    %586 = arith.addf %560, %585 : vector<64x128xf32>
    %c2_282 = arith.constant 2 : index
    %c24_283 = arith.constant 24 : index
    %c0_284 = arith.constant 0 : index
    %587 = vector.load %arg2[%c2_282, %c24_283, %c0_284] : memref<4x27x128xf32, #tpu.memory_space<vmem>>, vector<1x1x128xf32>
    %588 = vector.shape_cast %587 : vector<1x1x128xf32> to vector<128xf32>
    %589 = vector.shape_cast %588 : vector<128xf32> to vector<1x128xf32>
    %590 = vector.broadcast %589 : vector<1x128xf32> to vector<64x128xf32>
    %591 = arith.mulf %574, %590 : vector<64x128xf32>
    %592 = arith.addf %566, %591 : vector<64x128xf32>
    %c3_285 = arith.constant 3 : index
    %c24_286 = arith.constant 24 : index
    %c0_287 = arith.constant 0 : index
    %593 = vector.load %arg2[%c3_285, %c24_286, %c0_287] : memref<4x27x128xf32, #tpu.memory_space<vmem>>, vector<1x1x128xf32>
    %594 = vector.shape_cast %593 : vector<1x1x128xf32> to vector<128xf32>
    %595 = vector.shape_cast %594 : vector<128xf32> to vector<1x128xf32>
    %596 = vector.broadcast %595 : vector<1x128xf32> to vector<64x128xf32>
    %597 = arith.mulf %574, %596 : vector<64x128xf32>
    %598 = arith.addf %572, %597 : vector<64x128xf32>
    %c2_288 = arith.constant 2 : index
    %c0_289 = arith.constant 0 : index
    %c0_290 = arith.constant 0 : index
    %599 = vector.load %arg1[%c2_288, %c0_289, %c0_290] : memref<3x64x128xf32, #tpu.memory_space<vmem>>, vector<1x64x128xf32>
    %600 = vector.shape_cast %599 : vector<1x64x128xf32> to vector<64x128xf32>
    %c1_i32_291 = arith.constant 1 : i32
    %601 = tpu.dynamic_rotate %600 by %c1_i32_291 dim 0 : vector<64x128xf32>, i32 -> vector<64x128xf32>
    %602 = arith.select %23, %601, %26 : vector<64x128xi1>, vector<64x128xf32>
    %c0_292 = arith.constant 0 : index
    %c19 = arith.constant 19 : index
    %c0_293 = arith.constant 0 : index
    %603 = vector.load %arg2[%c0_292, %c19, %c0_293] : memref<4x27x128xf32, #tpu.memory_space<vmem>>, vector<1x1x128xf32>
    %604 = vector.shape_cast %603 : vector<1x1x128xf32> to vector<128xf32>
    %605 = vector.shape_cast %604 : vector<128xf32> to vector<1x128xf32>
    %606 = vector.broadcast %605 : vector<1x128xf32> to vector<64x128xf32>
    %607 = arith.mulf %602, %606 : vector<64x128xf32>
    %608 = arith.addf %580, %607 : vector<64x128xf32>
    %c1_294 = arith.constant 1 : index
    %c19_295 = arith.constant 19 : index
    %c0_296 = arith.constant 0 : index
    %609 = vector.load %arg2[%c1_294, %c19_295, %c0_296] : memref<4x27x128xf32, #tpu.memory_space<vmem>>, vector<1x1x128xf32>
    %610 = vector.shape_cast %609 : vector<1x1x128xf32> to vector<128xf32>
    %611 = vector.shape_cast %610 : vector<128xf32> to vector<1x128xf32>
    %612 = vector.broadcast %611 : vector<1x128xf32> to vector<64x128xf32>
    %613 = arith.mulf %602, %612 : vector<64x128xf32>
    %614 = arith.addf %586, %613 : vector<64x128xf32>
    %c2_297 = arith.constant 2 : index
    %c19_298 = arith.constant 19 : index
    %c0_299 = arith.constant 0 : index
    %615 = vector.load %arg2[%c2_297, %c19_298, %c0_299] : memref<4x27x128xf32, #tpu.memory_space<vmem>>, vector<1x1x128xf32>
    %616 = vector.shape_cast %615 : vector<1x1x128xf32> to vector<128xf32>
    %617 = vector.shape_cast %616 : vector<128xf32> to vector<1x128xf32>
    %618 = vector.broadcast %617 : vector<1x128xf32> to vector<64x128xf32>
    %619 = arith.mulf %602, %618 : vector<64x128xf32>
    %620 = arith.addf %592, %619 : vector<64x128xf32>
    %c3_300 = arith.constant 3 : index
    %c19_301 = arith.constant 19 : index
    %c0_302 = arith.constant 0 : index
    %621 = vector.load %arg2[%c3_300, %c19_301, %c0_302] : memref<4x27x128xf32, #tpu.memory_space<vmem>>, vector<1x1x128xf32>
    %622 = vector.shape_cast %621 : vector<1x1x128xf32> to vector<128xf32>
    %623 = vector.shape_cast %622 : vector<128xf32> to vector<1x128xf32>
    %624 = vector.broadcast %623 : vector<1x128xf32> to vector<64x128xf32>
    %625 = arith.mulf %602, %624 : vector<64x128xf32>
    %626 = arith.addf %598, %625 : vector<64x128xf32>
    %c0_303 = arith.constant 0 : index
    %c22 = arith.constant 22 : index
    %c0_304 = arith.constant 0 : index
    %627 = vector.load %arg2[%c0_303, %c22, %c0_304] : memref<4x27x128xf32, #tpu.memory_space<vmem>>, vector<1x1x128xf32>
    %628 = vector.shape_cast %627 : vector<1x1x128xf32> to vector<128xf32>
    %629 = vector.shape_cast %628 : vector<128xf32> to vector<1x128xf32>
    %630 = vector.broadcast %629 : vector<1x128xf32> to vector<64x128xf32>
    %631 = arith.mulf %600, %630 : vector<64x128xf32>
    %632 = arith.addf %608, %631 : vector<64x128xf32>
    %c1_305 = arith.constant 1 : index
    %c22_306 = arith.constant 22 : index
    %c0_307 = arith.constant 0 : index
    %633 = vector.load %arg2[%c1_305, %c22_306, %c0_307] : memref<4x27x128xf32, #tpu.memory_space<vmem>>, vector<1x1x128xf32>
    %634 = vector.shape_cast %633 : vector<1x1x128xf32> to vector<128xf32>
    %635 = vector.shape_cast %634 : vector<128xf32> to vector<1x128xf32>
    %636 = vector.broadcast %635 : vector<1x128xf32> to vector<64x128xf32>
    %637 = arith.mulf %600, %636 : vector<64x128xf32>
    %638 = arith.addf %614, %637 : vector<64x128xf32>
    %c2_308 = arith.constant 2 : index
    %c22_309 = arith.constant 22 : index
    %c0_310 = arith.constant 0 : index
    %639 = vector.load %arg2[%c2_308, %c22_309, %c0_310] : memref<4x27x128xf32, #tpu.memory_space<vmem>>, vector<1x1x128xf32>
    %640 = vector.shape_cast %639 : vector<1x1x128xf32> to vector<128xf32>
    %641 = vector.shape_cast %640 : vector<128xf32> to vector<1x128xf32>
    %642 = vector.broadcast %641 : vector<1x128xf32> to vector<64x128xf32>
    %643 = arith.mulf %600, %642 : vector<64x128xf32>
    %644 = arith.addf %620, %643 : vector<64x128xf32>
    %c3_311 = arith.constant 3 : index
    %c22_312 = arith.constant 22 : index
    %c0_313 = arith.constant 0 : index
    %645 = vector.load %arg2[%c3_311, %c22_312, %c0_313] : memref<4x27x128xf32, #tpu.memory_space<vmem>>, vector<1x1x128xf32>
    %646 = vector.shape_cast %645 : vector<1x1x128xf32> to vector<128xf32>
    %647 = vector.shape_cast %646 : vector<128xf32> to vector<1x128xf32>
    %648 = vector.broadcast %647 : vector<1x128xf32> to vector<64x128xf32>
    %649 = arith.mulf %600, %648 : vector<64x128xf32>
    %650 = arith.addf %626, %649 : vector<64x128xf32>
    %c63_i32_314 = arith.constant 63 : i32
    %651 = tpu.dynamic_rotate %600 by %c63_i32_314 dim 0 : vector<64x128xf32>, i32 -> vector<64x128xf32>
    %652 = arith.select %25, %651, %26 : vector<64x128xi1>, vector<64x128xf32>
    %c0_315 = arith.constant 0 : index
    %c25 = arith.constant 25 : index
    %c0_316 = arith.constant 0 : index
    %653 = vector.load %arg2[%c0_315, %c25, %c0_316] : memref<4x27x128xf32, #tpu.memory_space<vmem>>, vector<1x1x128xf32>
    %654 = vector.shape_cast %653 : vector<1x1x128xf32> to vector<128xf32>
    %655 = vector.shape_cast %654 : vector<128xf32> to vector<1x128xf32>
    %656 = vector.broadcast %655 : vector<1x128xf32> to vector<64x128xf32>
    %657 = arith.mulf %652, %656 : vector<64x128xf32>
    %658 = arith.addf %632, %657 : vector<64x128xf32>
    %c1_317 = arith.constant 1 : index
    %c25_318 = arith.constant 25 : index
    %c0_319 = arith.constant 0 : index
    %659 = vector.load %arg2[%c1_317, %c25_318, %c0_319] : memref<4x27x128xf32, #tpu.memory_space<vmem>>, vector<1x1x128xf32>
    %660 = vector.shape_cast %659 : vector<1x1x128xf32> to vector<128xf32>
    %661 = vector.shape_cast %660 : vector<128xf32> to vector<1x128xf32>
    %662 = vector.broadcast %661 : vector<1x128xf32> to vector<64x128xf32>
    %663 = arith.mulf %652, %662 : vector<64x128xf32>
    %664 = arith.addf %638, %663 : vector<64x128xf32>
    %c2_320 = arith.constant 2 : index
    %c25_321 = arith.constant 25 : index
    %c0_322 = arith.constant 0 : index
    %665 = vector.load %arg2[%c2_320, %c25_321, %c0_322] : memref<4x27x128xf32, #tpu.memory_space<vmem>>, vector<1x1x128xf32>
    %666 = vector.shape_cast %665 : vector<1x1x128xf32> to vector<128xf32>
    %667 = vector.shape_cast %666 : vector<128xf32> to vector<1x128xf32>
    %668 = vector.broadcast %667 : vector<1x128xf32> to vector<64x128xf32>
    %669 = arith.mulf %652, %668 : vector<64x128xf32>
    %670 = arith.addf %644, %669 : vector<64x128xf32>
    %c3_323 = arith.constant 3 : index
    %c25_324 = arith.constant 25 : index
    %c0_325 = arith.constant 0 : index
    %671 = vector.load %arg2[%c3_323, %c25_324, %c0_325] : memref<4x27x128xf32, #tpu.memory_space<vmem>>, vector<1x1x128xf32>
    %672 = vector.shape_cast %671 : vector<1x1x128xf32> to vector<128xf32>
    %673 = vector.shape_cast %672 : vector<128xf32> to vector<1x128xf32>
    %674 = vector.broadcast %673 : vector<1x128xf32> to vector<64x128xf32>
    %675 = arith.mulf %652, %674 : vector<64x128xf32>
    %676 = arith.addf %650, %675 : vector<64x128xf32>
    %c2_326 = arith.constant 2 : index
    %c0_327 = arith.constant 0 : index
    %c0_328 = arith.constant 0 : index
    %677 = vector.load %arg1[%c2_326, %c0_327, %c0_328] : memref<3x64x128xf32, #tpu.memory_space<vmem>>, vector<1x64x128xf32>
    %678 = vector.shape_cast %677 : vector<1x64x128xf32> to vector<64x128xf32>
    %c127_i32_329 = arith.constant 127 : i32
    %679 = tpu.dynamic_rotate %678 by %c127_i32_329 dim 1 : vector<64x128xf32>, i32 -> vector<64x128xf32>
    %680 = arith.select %21, %679, %26 : vector<64x128xi1>, vector<64x128xf32>
    %c1_i32_330 = arith.constant 1 : i32
    %681 = tpu.dynamic_rotate %680 by %c1_i32_330 dim 0 : vector<64x128xf32>, i32 -> vector<64x128xf32>
    %682 = arith.select %23, %681, %26 : vector<64x128xi1>, vector<64x128xf32>
    %c0_331 = arith.constant 0 : index
    %c20 = arith.constant 20 : index
    %c0_332 = arith.constant 0 : index
    %683 = vector.load %arg2[%c0_331, %c20, %c0_332] : memref<4x27x128xf32, #tpu.memory_space<vmem>>, vector<1x1x128xf32>
    %684 = vector.shape_cast %683 : vector<1x1x128xf32> to vector<128xf32>
    %685 = vector.shape_cast %684 : vector<128xf32> to vector<1x128xf32>
    %686 = vector.broadcast %685 : vector<1x128xf32> to vector<64x128xf32>
    %687 = arith.mulf %682, %686 : vector<64x128xf32>
    %688 = arith.addf %658, %687 : vector<64x128xf32>
    %c1_333 = arith.constant 1 : index
    %c20_334 = arith.constant 20 : index
    %c0_335 = arith.constant 0 : index
    %689 = vector.load %arg2[%c1_333, %c20_334, %c0_335] : memref<4x27x128xf32, #tpu.memory_space<vmem>>, vector<1x1x128xf32>
    %690 = vector.shape_cast %689 : vector<1x1x128xf32> to vector<128xf32>
    %691 = vector.shape_cast %690 : vector<128xf32> to vector<1x128xf32>
    %692 = vector.broadcast %691 : vector<1x128xf32> to vector<64x128xf32>
    %693 = arith.mulf %682, %692 : vector<64x128xf32>
    %694 = arith.addf %664, %693 : vector<64x128xf32>
    %c2_336 = arith.constant 2 : index
    %c20_337 = arith.constant 20 : index
    %c0_338 = arith.constant 0 : index
    %695 = vector.load %arg2[%c2_336, %c20_337, %c0_338] : memref<4x27x128xf32, #tpu.memory_space<vmem>>, vector<1x1x128xf32>
    %696 = vector.shape_cast %695 : vector<1x1x128xf32> to vector<128xf32>
    %697 = vector.shape_cast %696 : vector<128xf32> to vector<1x128xf32>
    %698 = vector.broadcast %697 : vector<1x128xf32> to vector<64x128xf32>
    %699 = arith.mulf %682, %698 : vector<64x128xf32>
    %700 = arith.addf %670, %699 : vector<64x128xf32>
    %c3_339 = arith.constant 3 : index
    %c20_340 = arith.constant 20 : index
    %c0_341 = arith.constant 0 : index
    %701 = vector.load %arg2[%c3_339, %c20_340, %c0_341] : memref<4x27x128xf32, #tpu.memory_space<vmem>>, vector<1x1x128xf32>
    %702 = vector.shape_cast %701 : vector<1x1x128xf32> to vector<128xf32>
    %703 = vector.shape_cast %702 : vector<128xf32> to vector<1x128xf32>
    %704 = vector.broadcast %703 : vector<1x128xf32> to vector<64x128xf32>
    %705 = arith.mulf %682, %704 : vector<64x128xf32>
    %706 = arith.addf %676, %705 : vector<64x128xf32>
    %c0_342 = arith.constant 0 : index
    %c23 = arith.constant 23 : index
    %c0_343 = arith.constant 0 : index
    %707 = vector.load %arg2[%c0_342, %c23, %c0_343] : memref<4x27x128xf32, #tpu.memory_space<vmem>>, vector<1x1x128xf32>
    %708 = vector.shape_cast %707 : vector<1x1x128xf32> to vector<128xf32>
    %709 = vector.shape_cast %708 : vector<128xf32> to vector<1x128xf32>
    %710 = vector.broadcast %709 : vector<1x128xf32> to vector<64x128xf32>
    %711 = arith.mulf %680, %710 : vector<64x128xf32>
    %712 = arith.addf %688, %711 : vector<64x128xf32>
    %c1_344 = arith.constant 1 : index
    %c23_345 = arith.constant 23 : index
    %c0_346 = arith.constant 0 : index
    %713 = vector.load %arg2[%c1_344, %c23_345, %c0_346] : memref<4x27x128xf32, #tpu.memory_space<vmem>>, vector<1x1x128xf32>
    %714 = vector.shape_cast %713 : vector<1x1x128xf32> to vector<128xf32>
    %715 = vector.shape_cast %714 : vector<128xf32> to vector<1x128xf32>
    %716 = vector.broadcast %715 : vector<1x128xf32> to vector<64x128xf32>
    %717 = arith.mulf %680, %716 : vector<64x128xf32>
    %718 = arith.addf %694, %717 : vector<64x128xf32>
    %c2_347 = arith.constant 2 : index
    %c23_348 = arith.constant 23 : index
    %c0_349 = arith.constant 0 : index
    %719 = vector.load %arg2[%c2_347, %c23_348, %c0_349] : memref<4x27x128xf32, #tpu.memory_space<vmem>>, vector<1x1x128xf32>
    %720 = vector.shape_cast %719 : vector<1x1x128xf32> to vector<128xf32>
    %721 = vector.shape_cast %720 : vector<128xf32> to vector<1x128xf32>
    %722 = vector.broadcast %721 : vector<1x128xf32> to vector<64x128xf32>
    %723 = arith.mulf %680, %722 : vector<64x128xf32>
    %724 = arith.addf %700, %723 : vector<64x128xf32>
    %c3_350 = arith.constant 3 : index
    %c23_351 = arith.constant 23 : index
    %c0_352 = arith.constant 0 : index
    %725 = vector.load %arg2[%c3_350, %c23_351, %c0_352] : memref<4x27x128xf32, #tpu.memory_space<vmem>>, vector<1x1x128xf32>
    %726 = vector.shape_cast %725 : vector<1x1x128xf32> to vector<128xf32>
    %727 = vector.shape_cast %726 : vector<128xf32> to vector<1x128xf32>
    %728 = vector.broadcast %727 : vector<1x128xf32> to vector<64x128xf32>
    %729 = arith.mulf %680, %728 : vector<64x128xf32>
    %730 = arith.addf %706, %729 : vector<64x128xf32>
    %c63_i32_353 = arith.constant 63 : i32
    %731 = tpu.dynamic_rotate %680 by %c63_i32_353 dim 0 : vector<64x128xf32>, i32 -> vector<64x128xf32>
    %732 = arith.select %25, %731, %26 : vector<64x128xi1>, vector<64x128xf32>
    %c0_354 = arith.constant 0 : index
    %c26 = arith.constant 26 : index
    %c0_355 = arith.constant 0 : index
    %733 = vector.load %arg2[%c0_354, %c26, %c0_355] : memref<4x27x128xf32, #tpu.memory_space<vmem>>, vector<1x1x128xf32>
    %734 = vector.shape_cast %733 : vector<1x1x128xf32> to vector<128xf32>
    %735 = vector.shape_cast %734 : vector<128xf32> to vector<1x128xf32>
    %736 = vector.broadcast %735 : vector<1x128xf32> to vector<64x128xf32>
    %737 = arith.mulf %732, %736 : vector<64x128xf32>
    %738 = arith.addf %712, %737 : vector<64x128xf32>
    %c1_356 = arith.constant 1 : index
    %c26_357 = arith.constant 26 : index
    %c0_358 = arith.constant 0 : index
    %739 = vector.load %arg2[%c1_356, %c26_357, %c0_358] : memref<4x27x128xf32, #tpu.memory_space<vmem>>, vector<1x1x128xf32>
    %740 = vector.shape_cast %739 : vector<1x1x128xf32> to vector<128xf32>
    %741 = vector.shape_cast %740 : vector<128xf32> to vector<1x128xf32>
    %742 = vector.broadcast %741 : vector<1x128xf32> to vector<64x128xf32>
    %743 = arith.mulf %732, %742 : vector<64x128xf32>
    %744 = arith.addf %718, %743 : vector<64x128xf32>
    %c2_359 = arith.constant 2 : index
    %c26_360 = arith.constant 26 : index
    %c0_361 = arith.constant 0 : index
    %745 = vector.load %arg2[%c2_359, %c26_360, %c0_361] : memref<4x27x128xf32, #tpu.memory_space<vmem>>, vector<1x1x128xf32>
    %746 = vector.shape_cast %745 : vector<1x1x128xf32> to vector<128xf32>
    %747 = vector.shape_cast %746 : vector<128xf32> to vector<1x128xf32>
    %748 = vector.broadcast %747 : vector<1x128xf32> to vector<64x128xf32>
    %749 = arith.mulf %732, %748 : vector<64x128xf32>
    %750 = arith.addf %724, %749 : vector<64x128xf32>
    %c3_362 = arith.constant 3 : index
    %c26_363 = arith.constant 26 : index
    %c0_364 = arith.constant 0 : index
    %751 = vector.load %arg2[%c3_362, %c26_363, %c0_364] : memref<4x27x128xf32, #tpu.memory_space<vmem>>, vector<1x1x128xf32>
    %752 = vector.shape_cast %751 : vector<1x1x128xf32> to vector<128xf32>
    %753 = vector.shape_cast %752 : vector<128xf32> to vector<1x128xf32>
    %754 = vector.broadcast %753 : vector<1x128xf32> to vector<64x128xf32>
    %755 = arith.mulf %732, %754 : vector<64x128xf32>
    %756 = arith.addf %730, %755 : vector<64x128xf32>
    %c64_i32_365 = arith.constant 64 : i32
    %757 = tpu.dynamic_rotate %738 by %c64_i32_365 dim 1 : vector<64x128xf32>, i32 -> vector<64x128xf32>
    %758 = vector.extract_strided_slice %738 {offsets = [0, 0], sizes = [64, 64], strides = [1, 1]} : vector<64x128xf32> to vector<64x64xf32>
    %c0_366 = arith.constant 0 : index
    %c0_367 = arith.constant 0 : index
    %c0_368 = arith.constant 0 : index
    %759 = vector.load %arg4[%c0_366, %c0_367, %c0_368] : memref<8x64x64xf32, #tpu.memory_space<vmem>>, vector<1x64x64xf32>
    %760 = vector.shape_cast %759 : vector<1x64x64xf32> to vector<64x64xf32>
    %761 = vector.shape_cast %758 : vector<64x64xf32> to vector<1x64x64xf32>
    tpu.vector_store %arg4[%c0_366, %c0_367, %c0_368], %761 {strides = array<i32>} : memref<8x64x64xf32, #tpu.memory_space<vmem>>, vector<1x64x64xf32>,
    %762 = vector.extract_strided_slice %757 {offsets = [0, 0], sizes = [64, 64], strides = [1, 1]} : vector<64x128xf32> to vector<64x64xf32>
    %c1_369 = arith.constant 1 : index
    %c0_370 = arith.constant 0 : index
    %c0_371 = arith.constant 0 : index
    %763 = vector.load %arg4[%c1_369, %c0_370, %c0_371] : memref<8x64x64xf32, #tpu.memory_space<vmem>>, vector<1x64x64xf32>
    %764 = vector.shape_cast %763 : vector<1x64x64xf32> to vector<64x64xf32>
    %765 = vector.shape_cast %762 : vector<64x64xf32> to vector<1x64x64xf32>
    tpu.vector_store %arg4[%c1_369, %c0_370, %c0_371], %765 {strides = array<i32>} : memref<8x64x64xf32, #tpu.memory_space<vmem>>, vector<1x64x64xf32>,
    %c64_i32_372 = arith.constant 64 : i32
    %766 = tpu.dynamic_rotate %744 by %c64_i32_372 dim 1 : vector<64x128xf32>, i32 -> vector<64x128xf32>
    %767 = vector.extract_strided_slice %744 {offsets = [0, 0], sizes = [64, 64], strides = [1, 1]} : vector<64x128xf32> to vector<64x64xf32>
    %c2_373 = arith.constant 2 : index
    %c0_374 = arith.constant 0 : index
    %c0_375 = arith.constant 0 : index
    %768 = vector.load %arg4[%c2_373, %c0_374, %c0_375] : memref<8x64x64xf32, #tpu.memory_space<vmem>>, vector<1x64x64xf32>
    %769 = vector.shape_cast %768 : vector<1x64x64xf32> to vector<64x64xf32>
    %770 = vector.shape_cast %767 : vector<64x64xf32> to vector<1x64x64xf32>
    tpu.vector_store %arg4[%c2_373, %c0_374, %c0_375], %770 {strides = array<i32>} : memref<8x64x64xf32, #tpu.memory_space<vmem>>, vector<1x64x64xf32>,
    %771 = vector.extract_strided_slice %766 {offsets = [0, 0], sizes = [64, 64], strides = [1, 1]} : vector<64x128xf32> to vector<64x64xf32>
    %c3_376 = arith.constant 3 : index
    %c0_377 = arith.constant 0 : index
    %c0_378 = arith.constant 0 : index
    %772 = vector.load %arg4[%c3_376, %c0_377, %c0_378] : memref<8x64x64xf32, #tpu.memory_space<vmem>>, vector<1x64x64xf32>
    %773 = vector.shape_cast %772 : vector<1x64x64xf32> to vector<64x64xf32>
    %774 = vector.shape_cast %771 : vector<64x64xf32> to vector<1x64x64xf32>
    tpu.vector_store %arg4[%c3_376, %c0_377, %c0_378], %774 {strides = array<i32>} : memref<8x64x64xf32, #tpu.memory_space<vmem>>, vector<1x64x64xf32>,
    %c64_i32_379 = arith.constant 64 : i32
    %775 = tpu.dynamic_rotate %750 by %c64_i32_379 dim 1 : vector<64x128xf32>, i32 -> vector<64x128xf32>
    %776 = vector.extract_strided_slice %750 {offsets = [0, 0], sizes = [64, 64], strides = [1, 1]} : vector<64x128xf32> to vector<64x64xf32>
    %c4_380 = arith.constant 4 : index
    %c0_381 = arith.constant 0 : index
    %c0_382 = arith.constant 0 : index
    %777 = vector.load %arg4[%c4_380, %c0_381, %c0_382] : memref<8x64x64xf32, #tpu.memory_space<vmem>>, vector<1x64x64xf32>
    %778 = vector.shape_cast %777 : vector<1x64x64xf32> to vector<64x64xf32>
    %779 = vector.shape_cast %776 : vector<64x64xf32> to vector<1x64x64xf32>
    tpu.vector_store %arg4[%c4_380, %c0_381, %c0_382], %779 {strides = array<i32>} : memref<8x64x64xf32, #tpu.memory_space<vmem>>, vector<1x64x64xf32>,
    %780 = vector.extract_strided_slice %775 {offsets = [0, 0], sizes = [64, 64], strides = [1, 1]} : vector<64x128xf32> to vector<64x64xf32>
    %c5_383 = arith.constant 5 : index
    %c0_384 = arith.constant 0 : index
    %c0_385 = arith.constant 0 : index
    %781 = vector.load %arg4[%c5_383, %c0_384, %c0_385] : memref<8x64x64xf32, #tpu.memory_space<vmem>>, vector<1x64x64xf32>
    %782 = vector.shape_cast %781 : vector<1x64x64xf32> to vector<64x64xf32>
    %783 = vector.shape_cast %780 : vector<64x64xf32> to vector<1x64x64xf32>
    tpu.vector_store %arg4[%c5_383, %c0_384, %c0_385], %783 {strides = array<i32>} : memref<8x64x64xf32, #tpu.memory_space<vmem>>, vector<1x64x64xf32>,
    %c64_i32_386 = arith.constant 64 : i32
    %784 = tpu.dynamic_rotate %756 by %c64_i32_386 dim 1 : vector<64x128xf32>, i32 -> vector<64x128xf32>
    %785 = vector.extract_strided_slice %756 {offsets = [0, 0], sizes = [64, 64], strides = [1, 1]} : vector<64x128xf32> to vector<64x64xf32>
    %c6_387 = arith.constant 6 : index
    %c0_388 = arith.constant 0 : index
    %c0_389 = arith.constant 0 : index
    %786 = vector.load %arg4[%c6_387, %c0_388, %c0_389] : memref<8x64x64xf32, #tpu.memory_space<vmem>>, vector<1x64x64xf32>
    %787 = vector.shape_cast %786 : vector<1x64x64xf32> to vector<64x64xf32>
    %788 = vector.shape_cast %785 : vector<64x64xf32> to vector<1x64x64xf32>
    tpu.vector_store %arg4[%c6_387, %c0_388, %c0_389], %788 {strides = array<i32>} : memref<8x64x64xf32, #tpu.memory_space<vmem>>, vector<1x64x64xf32>,
    %789 = vector.extract_strided_slice %784 {offsets = [0, 0], sizes = [64, 64], strides = [1, 1]} : vector<64x128xf32> to vector<64x64xf32>
    %c7_390 = arith.constant 7 : index
    %c0_391 = arith.constant 0 : index
    %c0_392 = arith.constant 0 : index
    %790 = vector.load %arg4[%c7_390, %c0_391, %c0_392] : memref<8x64x64xf32, #tpu.memory_space<vmem>>, vector<1x64x64xf32>
    %791 = vector.shape_cast %790 : vector<1x64x64xf32> to vector<64x64xf32>
    %792 = vector.shape_cast %789 : vector<64x64xf32> to vector<1x64x64xf32>
    tpu.vector_store %arg4[%c7_390, %c0_391, %c0_392], %792 {strides = array<i32>} : memref<8x64x64xf32, #tpu.memory_space<vmem>>, vector<1x64x64xf32>,
    return
  }
  func.func @transform_0(%arg0: i32) -> (i32, i32, i32) {
    %c0_i32 = arith.constant 0 : i32
    %c0_i32_0 = arith.constant 0 : i32
    %c0_i32_1 = arith.constant 0 : i32
    %c0_i32_2 = arith.constant 0 : i32
    return %c0_i32, %c0_i32_0, %c0_i32_1 : i32, i32, i32
  }
  func.func @transform_1(%arg0: i32) -> (i32, i32, i32) {
    %c0_i32 = arith.constant 0 : i32
    %c0_i32_0 = arith.constant 0 : i32
    %c0_i32_1 = arith.constant 0 : i32
    return %arg0, %c0_i32, %c0_i32_0 : i32, i32, i32
  }
  func.func @transform_2(%arg0: i32) -> (i32, i32, i32) {
    %c0_i32 = arith.constant 0 : i32
    %c0_i32_0 = arith.constant 0 : i32
    %c0_i32_1 = arith.constant 0 : i32
    return %arg0, %c0_i32, %c0_i32_0 : i32, i32, i32
  }
  func.func @transform_3(%arg0: i32) -> (i32, i32, i32) {
    %c0_i32 = arith.constant 0 : i32
    %c0_i32_0 = arith.constant 0 : i32
    %c0_i32_1 = arith.constant 0 : i32
    return %arg0, %c0_i32, %c0_i32_0 : i32, i32, i32
  }
}

</mosaic_0001>

<llo_original>
// kernel: _conv2d_forward.1
$region0: #{_conv2d_forward.1}
  #allocation0 [shape = 'u32[]', space=smem, size = 0x4, offset = 0x4, fixed_abs, tag = 'smem constant byte address 0x4 - core index']
  #allocation1 [shape = 'u32[144,128]{1,0:T(1,128)}', space=vmem, size = 0x12000, scoped, tag = 'internal scratch']
  %s0 = inlined_call_operand.vmem [shape: f32[3,64,128], index: 0, kind: input, shape index: {}]
  %s1 = inlined_call_operand.vmem [shape: f32[4,27,128], index: 1, kind: input, shape index: {}]
  %s2 = inlined_call_operand.vmem [shape: f32[4,1,128], index: 2, kind: input, shape index: {}]
  %s3 = inlined_call_operand.hbm [shape: f32[8,64,64], index: 3, kind: output, shape index: {}]
  %s4 = sld [smem:[#allocation0]]
  $region22: #{_conv2d_forward.1} parent=0
    _
  %s6 = ssub.s32 1, %s4
  %s7 = scalar_select 0, %s6, %s4
  $region1: #{_conv2d_forward.1} parent=0
    #allocation2 [shape = 'u8[262144]{0}', space=vmem, size = 0x40000, scoped, tag = 'output window, operand 0, single buffered']
    #allocation3 [shape = 's32[1]{0}', space=sflag, size = 0x4, scoped, tag = 'scoped memory for _conv2d_forward.1']
    %8 = vsyncpa [#allocation3], 0
    // Predicated region
    $region2: #{_conv2d_forward.1} parent=1 // pred_check
      _
    $region3: #{_conv2d_forward.1} parent=1 // pred_check_branch
      %10 = sbr.rel (0) target = $region5
    $region4: #{_conv2d_forward.1} parent=1 // pred_region
      _
    $region5: #{_conv2d_forward.1} parent=1 // pred_fallthru
      _
    // Predicated region
    $region6: #{_conv2d_forward.1} parent=1 // pred_check
      _
    $region7: #{_conv2d_forward.1} parent=1 // pred_check_branch
      %12 = sbr.rel (0) target = $region9
    $region8: #{_conv2d_forward.1} parent=1 // pred_region
      _
    $region9: #{_conv2d_forward.1} parent=1 // pred_fallthru
      _
    // Predicated region
    $region10: #{_conv2d_forward.1} parent=1 // pred_check
      _
    $region11: #{_conv2d_forward.1} parent=1 // pred_check_branch
      %14 = sbr.rel (0) target = $region13
    $region12: #{_conv2d_forward.1} parent=1 // pred_region
      _
    $region13: #{_conv2d_forward.1} parent=1 // pred_fallthru
      _
    %v15 = vlaneseq
    %v16 = vand.u32 %v15, 127
    %vm17 = vcmp.lt.s32.totalorder %v16, 0
    %v18 = vsub.s32 0, %v16
    %v19 = vsel %vm17, %v18, %v16
    %v20 = vshrl.u32 %v19, 6
    %v21 = vand.u32 %v19, 63
    %v22 = vsub.s32 0, %v21
    %v23 = vsel %vm17, %v22, %v21
    %vm24 = vcmp.ne.s32.totalorder %v23, 0
    %vm25 = vcmp.lt.s32.totalorder %v23, 0
    %vm26 = vmand %vm25, %vm24
    %v27 = vadd.s32 %v23, 64
    %v28 = vsel %vm26, %v27, %v23
    %v29 = vlaneseq
    %v30 = vshrl.u32 %v29, 7
    %v31 = vadd.s32 %v30, 8
    %v32 = vadd.s32 %v30, 16
    %v33 = vadd.s32 %v30, 24
    %v34 = vadd.s32 %v30, 32
    %v35 = vadd.s32 %v30, 40
    %v36 = vadd.s32 %v30, 48
    %v37 = vadd.s32 %v30, 56
    %vm38 = vcmp.ne.s32.totalorder %v28, 0
    %vm39 = vcmp.ne.s32.totalorder %v28, 63
    %vm40 = vcmp.ne.s32.totalorder %v30, 0
    %vm41 = vcmp.ne.s32.totalorder %v31, 0
    %vm42 = vcmp.ne.s32.totalorder %v32, 0
    %vm43 = vcmp.ne.s32.totalorder %v33, 0
    %vm44 = vcmp.ne.s32.totalorder %v34, 0
    %vm45 = vcmp.ne.s32.totalorder %v35, 0
    %vm46 = vcmp.ne.s32.totalorder %v36, 0
    %vm47 = vcmp.ne.s32.totalorder %v37, 0
    %vm48 = vcmp.ne.s32.totalorder %v30, 63
    %vm49 = vcmp.ne.s32.totalorder %v31, 63
    %vm50 = vcmp.ne.s32.totalorder %v32, 63
    %vm51 = vcmp.ne.s32.totalorder %v33, 63
    %vm52 = vcmp.ne.s32.totalorder %v34, 63
    %vm53 = vcmp.ne.s32.totalorder %v35, 63
    %vm54 = vcmp.ne.s32.totalorder %v36, 63
    %vm55 = vcmp.ne.s32.totalorder %v37, 63
    %v56 = vld [vmem:[%s2] sm:$0x1]
    %v58 = vlaneseq
    %v59 = vshrl.u32 %v58, 7
    %v60 = vsub.s32 0, %v59
    %v61 = vrot.slane %v56, %v60
    %s63 = scalar_lea.vmem %s2, 1
    %v64 = vld [vmem:[%s63] sm:$0x1]
    %v66 = vlaneseq
    %v67 = vshrl.u32 %v66, 7
    %v68 = vsub.s32 0, %v67
    %v69 = vrot.slane %v64, %v68
    %s71 = scalar_lea.vmem %s2, 2
    %v72 = vld [vmem:[%s71] sm:$0x1]
    %v74 = vlaneseq
    %v75 = vshrl.u32 %v74, 7
    %v76 = vsub.s32 0, %v75
    %v77 = vrot.slane %v72, %v76
    %s79 = scalar_lea.vmem %s2, 3
    %v80 = vld [vmem:[%s79] sm:$0x1]
    %v82 = vlaneseq
    %v83 = vshrl.u32 %v82, 7
    %v84 = vsub.s32 0, %v83
    %v85 = vrot.slane %v80, %v84
    %v87 = vld [vmem:[%s0] sm:$0xff]
    %v88 = vld [vmem:[%s0 + $0x8] sm:$0xff]
    %v89 = vld [vmem:[%s0 + $0x10] sm:$0xff]
    %v90 = vld [vmem:[%s0 + $0x18] sm:$0xff]
    %v91 = vld [vmem:[%s0 + $0x20] sm:$0xff]
    %v92 = vld [vmem:[%s0 + $0x28] sm:$0xff]
    %v93 = vld [vmem:[%s0 + $0x30] sm:$0xff]
    %v94 = vld [vmem:[%s0 + $0x38] sm:$0xff]
    %95 = vrot.lane.b32.xlu0 %v87, 1
    %v96 = vpop.permute.xlu0 %95
    %97 = vrot.lane.b32.xlu0 %v88, 1
    %v98 = vpop.permute.xlu0 %97
    %99 = vrot.lane.b32.xlu0 %v89, 1
    %v100 = vpop.permute.xlu0 %99
    %101 = vrot.lane.b32.xlu0 %v90, 1
    %v102 = vpop.permute.xlu0 %101
    %103 = vrot.lane.b32.xlu0 %v91, 1
    %v104 = vpop.permute.xlu0 %103
    %105 = vrot.lane.b32.xlu0 %v92, 1
    %v106 = vpop.permute.xlu0 %105
    %107 = vrot.lane.b32.xlu0 %v93, 1
    %v108 = vpop.permute.xlu0 %107
    %109 = vrot.lane.b32.xlu0 %v94, 1
    %v110 = vpop.permute.xlu0 %109
    %v111 = vsel %vm38, %v96, 0.0
    %v112 = vsel %vm38, %v98, 0.0
    %v113 = vsel %vm38, %v100, 0.0
    %v114 = vsel %vm38, %v102, 0.0
    %v115 = vsel %vm38, %v104, 0.0
    %v116 = vsel %vm38, %v106, 0.0
    %v117 = vsel %vm38, %v108, 0.0
    %v118 = vsel %vm38, %v110, 0.0
    %v119 = vrot.slane %v111, 7
    %v120 = vrot.slane %v112, 7
    %v121 = vrot.slane %v113, 7
    %v122 = vrot.slane %v114, 7
    %v123 = vrot.slane %v115, 7
    %v124 = vrot.slane %v116, 7
    %v125 = vrot.slane %v117, 7
    %v126 = vrot.slane %v118, 7
    %vm127 = vcmp.lt.s32.totalorder %v30, 1
    %v128 = vsel %vm127, %v125, %v126
    %v129 = vsel %vm127, %v124, %v125
    %v130 = vsel %vm127, %v123, %v124
    %v131 = vsel %vm127, %v122, %v123
    %v132 = vsel %vm127, %v121, %v122
    %v133 = vsel %vm127, %v120, %v121
    %v134 = vsel %vm127, %v119, %v120
    %v135 = vsel %vm127, %v126, %v119
    %v136 = vsel %vm40, %v135, 0.0
    %v137 = vsel %vm41, %v134, 0.0
    %v138 = vsel %vm42, %v133, 0.0
    %v139 = vsel %vm43, %v132, 0.0
    %v140 = vsel %vm44, %v131, 0.0
    %v141 = vsel %vm45, %v130, 0.0
    %v142 = vsel %vm46, %v129, 0.0
    %v143 = vsel %vm47, %v128, 0.0
    %v144 = vld [vmem:[%s1] sm:$0x1]
    %v145 = vlaneseq
    %v146 = vshrl.u32 %v145, 7
    %v147 = vsub.s32 0, %v146
    %v148 = vrot.slane %v144, %v147
    %v149 = vmul.f32 %v136, %v148
    %v150 = vmul.f32 %v137, %v148
    %v151 = vmul.f32 %v138, %v148
    %v152 = vmul.f32 %v139, %v148
    %v153 = vmul.f32 %v140, %v148
    %v154 = vmul.f32 %v141, %v148
    %v155 = vmul.f32 %v142, %v148
    %v156 = vmul.f32 %v143, %v148
    %v157 = vadd.f32 %v61, %v149
    %v158 = vadd.f32 %v61, %v150
    %v159 = vadd.f32 %v61, %v151
    %v160 = vadd.f32 %v61, %v152
    %v161 = vadd.f32 %v61, %v153
    %v162 = vadd.f32 %v61, %v154
    %v163 = vadd.f32 %v61, %v155
    %v164 = vadd.f32 %v61, %v156
    %s165 = scalar_lea.vmem %s1, 32
    %v166 = vld [vmem:[%s165] sm:$0x1]
    %v167 = vlaneseq
    %v168 = vshrl.u32 %v167, 7
    %v169 = vsub.s32 0, %v168
    %v170 = vrot.slane %v166, %v169
    %v171 = vmul.f32 %v136, %v170
    %v172 = vmul.f32 %v137, %v170
    %v173 = vmul.f32 %v138, %v170
    %v174 = vmul.f32 %v139, %v170
    %v175 = vmul.f32 %v140, %v170
    %v176 = vmul.f32 %v141, %v170
    %v177 = vmul.f32 %v142, %v170
    %v178 = vmul.f32 %v143, %v170
    %v179 = vadd.f32 %v69, %v171
    %v180 = vadd.f32 %v69, %v172
    %v181 = vadd.f32 %v69, %v173
    %v182 = vadd.f32 %v69, %v174
    %v183 = vadd.f32 %v69, %v175
    %v184 = vadd.f32 %v69, %v176
    %v185 = vadd.f32 %v69, %v177
    %v186 = vadd.f32 %v69, %v178
    %s187 = scalar_lea.vmem %s1, 64
    %v188 = vld [vmem:[%s187] sm:$0x1]
    %v189 = vlaneseq
    %v190 = vshrl.u32 %v189, 7
    %v191 = vsub.s32 0, %v190
    %v192 = vrot.slane %v188, %v191
    %v193 = vmul.f32 %v136, %v192
    %v194 = vmul.f32 %v137, %v192
    %v195 = vmul.f32 %v138, %v192
    %v196 = vmul.f32 %v139, %v192
    %v197 = vmul.f32 %v140, %v192
    %v198 = vmul.f32 %v141, %v192
    %v199 = vmul.f32 %v142, %v192
    %v200 = vmul.f32 %v143, %v192
    %v201 = vadd.f32 %v77, %v193
    %v202 = vadd.f32 %v77, %v194
    %v203 = vadd.f32 %v77, %v195
    %v204 = vadd.f32 %v77, %v196
    %v205 = vadd.f32 %v77, %v197
    %v206 = vadd.f32 %v77, %v198
    %v207 = vadd.f32 %v77, %v199
    %v208 = vadd.f32 %v77, %v200
    %s209 = scalar_lea.vmem %s1, 96
    %v210 = vld [vmem:[%s209] sm:$0x1]
    %v211 = vlaneseq
    %v212 = vshrl.u32 %v211, 7
    %v213 = vsub.s32 0, %v212
    %v214 = vrot.slane %v210, %v213
    %v215 = vmul.f32 %v136, %v214
    %v216 = vmul.f32 %v137, %v214
    %v217 = vmul.f32 %v138, %v214
    %v218 = vmul.f32 %v139, %v214
    %v219 = vmul.f32 %v140, %v214
    %v220 = vmul.f32 %v141, %v214
    %v221 = vmul.f32 %v142, %v214
    %v222 = vmul.f32 %v143, %v214
    %v223 = vadd.f32 %v85, %v215
    %v224 = vadd.f32 %v85, %v216
    %v225 = vadd.f32 %v85, %v217
    %v226 = vadd.f32 %v85, %v218
    %v227 = vadd.f32 %v85, %v219
    %v228 = vadd.f32 %v85, %v220
    %v229 = vadd.f32 %v85, %v221
    %v230 = vadd.f32 %v85, %v222
    %v231 = vld [vmem:[%s1 + $0x3] sm:$0x1]
    %v232 = vlaneseq
    %v233 = vshrl.u32 %v232, 7
    %v234 = vsub.s32 0, %v233
    %v235 = vrot.slane %v231, %v234
    %v236 = vmul.f32 %v111, %v235
    %v237 = vmul.f32 %v112, %v235
    %v238 = vmul.f32 %v113, %v235
    %v239 = vmul.f32 %v114, %v235
    %v240 = vmul.f32 %v115, %v235
    %v241 = vmul.f32 %v116, %v235
    %v242 = vmul.f32 %v117, %v235
    %v243 = vmul.f32 %v118, %v235
    %v244 = vadd.f32 %v157, %v236
    %v245 = vadd.f32 %v158, %v237
    %v246 = vadd.f32 %v159, %v238
    %v247 = vadd.f32 %v160, %v239
    %v248 = vadd.f32 %v161, %v240
    %v249 = vadd.f32 %v162, %v241
    %v250 = vadd.f32 %v163, %v242
    %v251 = vadd.f32 %v164, %v243
    %v252 = vld [vmem:[%s165 + $0x3] sm:$0x1]
    %v253 = vlaneseq
    %v254 = vshrl.u32 %v253, 7
    %v255 = vsub.s32 0, %v254
    %v256 = vrot.slane %v252, %v255
    %v257 = vmul.f32 %v111, %v256
    %v258 = vmul.f32 %v112, %v256
    %v259 = vmul.f32 %v113, %v256
    %v260 = vmul.f32 %v114, %v256
    %v261 = vmul.f32 %v115, %v256
    %v262 = vmul.f32 %v116, %v256
    %v263 = vmul.f32 %v117, %v256
    %v264 = vmul.f32 %v118, %v256
    %v265 = vadd.f32 %v179, %v257
    %v266 = vadd.f32 %v180, %v258
    %v267 = vadd.f32 %v181, %v259
    %v268 = vadd.f32 %v182, %v260
    %v269 = vadd.f32 %v183, %v261
    %v270 = vadd.f32 %v184, %v262
    %v271 = vadd.f32 %v185, %v263
    %v272 = vadd.f32 %v186, %v264
    %v273 = vld [vmem:[%s187 + $0x3] sm:$0x1]
    %v274 = vlaneseq
    %v275 = vshrl.u32 %v274, 7
    %v276 = vsub.s32 0, %v275
    %v277 = vrot.slane %v273, %v276
    %v278 = vmul.f32 %v111, %v277
    %v279 = vmul.f32 %v112, %v277
    %v280 = vmul.f32 %v113, %v277
    %v281 = vmul.f32 %v114, %v277
    %v282 = vmul.f32 %v115, %v277
    %v283 = vmul.f32 %v116, %v277
    %v284 = vmul.f32 %v117, %v277
    %v285 = vmul.f32 %v118, %v277
    %v286 = vadd.f32 %v201, %v278
    %v287 = vadd.f32 %v202, %v279
    %v288 = vadd.f32 %v203, %v280
    %v289 = vadd.f32 %v204, %v281
    %v290 = vadd.f32 %v205, %v282
    %v291 = vadd.f32 %v206, %v283
    %v292 = vadd.f32 %v207, %v284
    %v293 = vadd.f32 %v208, %v285
    %v294 = vld [vmem:[%s209 + $0x3] sm:$0x1]
    %v295 = vlaneseq
    %v296 = vshrl.u32 %v295, 7
    %v297 = vsub.s32 0, %v296
    %v298 = vrot.slane %v294, %v297
    %v299 = vmul.f32 %v111, %v298
    %v300 = vmul.f32 %v112, %v298
    %v301 = vmul.f32 %v113, %v298
    %v302 = vmul.f32 %v114, %v298
    %v303 = vmul.f32 %v115, %v298
    %v304 = vmul.f32 %v116, %v298
    %v305 = vmul.f32 %v117, %v298
    %v306 = vmul.f32 %v118, %v298
    %v307 = vadd.f32 %v223, %v299
    %v308 = vadd.f32 %v224, %v300
    %v309 = vadd.f32 %v225, %v301
    %v310 = vadd.f32 %v226, %v302
    %v311 = vadd.f32 %v227, %v303
    %v312 = vadd.f32 %v228, %v304
    %v313 = vadd.f32 %v229, %v305
    %v314 = vadd.f32 %v230, %v306
    %v315 = vrot.slane %v111, 1
    %v316 = vrot.slane %v112, 1
    %v317 = vrot.slane %v113, 1
    %v318 = vrot.slane %v114, 1
    %v319 = vrot.slane %v115, 1
    %v320 = vrot.slane %v116, 1
    %v321 = vrot.slane %v117, 1
    %v322 = vrot.slane %v118, 1
    %vm323 = vcmp.lt.s32.totalorder %v30, 7
    %v324 = vsel %vm323, %v321, %v322
    %v325 = vsel %vm323, %v320, %v321
    %v326 = vsel %vm323, %v319, %v320
    %v327 = vsel %vm323, %v318, %v319
    %v328 = vsel %vm323, %v317, %v318
    %v329 = vsel %vm323, %v316, %v317
    %v330 = vsel %vm323, %v315, %v316
    %v331 = vsel %vm323, %v322, %v315
    %v332 = vsel %vm48, %v330, 0.0
    %v333 = vsel %vm49, %v329, 0.0
    %v334 = vsel %vm50, %v328, 0.0
    %v335 = vsel %vm51, %v327, 0.0
    %v336 = vsel %vm52, %v326, 0.0
    %v337 = vsel %vm53, %v325, 0.0
    %v338 = vsel %vm54, %v324, 0.0
    %v339 = vsel %vm55, %v331, 0.0
    %v340 = vld [vmem:[%s1 + $0x6] sm:$0x1]
    %v341 = vlaneseq
    %v342 = vshrl.u32 %v341, 7
    %v343 = vsub.s32 0, %v342
    %v344 = vrot.slane %v340, %v343
    %v345 = vmul.f32 %v332, %v344
    %v346 = vmul.f32 %v333, %v344
    %v347 = vmul.f32 %v334, %v344
    %v348 = vmul.f32 %v335, %v344
    %v349 = vmul.f32 %v336, %v344
    %v350 = vmul.f32 %v337, %v344
    %v351 = vmul.f32 %v338, %v344
    %v352 = vmul.f32 %v339, %v344
    %v353 = vadd.f32 %v244, %v345
    %v354 = vadd.f32 %v245, %v346
    %v355 = vadd.f32 %v246, %v347
    %v356 = vadd.f32 %v247, %v348
    %v357 = vadd.f32 %v248, %v349
    %v358 = vadd.f32 %v249, %v350
    %v359 = vadd.f32 %v250, %v351
    %v360 = vadd.f32 %v251, %v352
    %v361 = vld [vmem:[%s165 + $0x6] sm:$0x1]
    %v362 = vlaneseq
    %v363 = vshrl.u32 %v362, 7
    %v364 = vsub.s32 0, %v363
    %v365 = vrot.slane %v361, %v364
    %v366 = vmul.f32 %v332, %v365
    %v367 = vmul.f32 %v333, %v365
    %v368 = vmul.f32 %v334, %v365
    %v369 = vmul.f32 %v335, %v365
    %v370 = vmul.f32 %v336, %v365
    %v371 = vmul.f32 %v337, %v365
    %v372 = vmul.f32 %v338, %v365
    %v373 = vmul.f32 %v339, %v365
    %v374 = vadd.f32 %v265, %v366
    %v375 = vadd.f32 %v266, %v367
    %v376 = vadd.f32 %v267, %v368
    %v377 = vadd.f32 %v268, %v369
    %v378 = vadd.f32 %v269, %v370
    %v379 = vadd.f32 %v270, %v371
    %v380 = vadd.f32 %v271, %v372
    %v381 = vadd.f32 %v272, %v373
    %v382 = vld [vmem:[%s187 + $0x6] sm:$0x1]
    %v383 = vlaneseq
    %v384 = vshrl.u32 %v383, 7
    %v385 = vsub.s32 0, %v384
    %v386 = vrot.slane %v382, %v385
    %v387 = vmul.f32 %v332, %v386
    %v388 = vmul.f32 %v333, %v386
    %v389 = vmul.f32 %v334, %v386
    %v390 = vmul.f32 %v335, %v386
    %v391 = vmul.f32 %v336, %v386
    %v392 = vmul.f32 %v337, %v386
    %v393 = vmul.f32 %v338, %v386
    %v394 = vmul.f32 %v339, %v386
    %v395 = vadd.f32 %v286, %v387
    %v396 = vadd.f32 %v287, %v388
    %v397 = vadd.f32 %v288, %v389
    %v398 = vadd.f32 %v289, %v390
    %v399 = vadd.f32 %v290, %v391
    %v400 = vadd.f32 %v291, %v392
    %v401 = vadd.f32 %v292, %v393
    %v402 = vadd.f32 %v293, %v394
    %v403 = vld [vmem:[%s209 + $0x6] sm:$0x1]
    %v404 = vlaneseq
    %v405 = vshrl.u32 %v404, 7
    %v406 = vsub.s32 0, %v405
    %v407 = vrot.slane %v403, %v406
    %v408 = vmul.f32 %v332, %v407
    %v409 = vmul.f32 %v333, %v407
    %v410 = vmul.f32 %v334, %v407
    %v411 = vmul.f32 %v335, %v407
    %v412 = vmul.f32 %v336, %v407
    %v413 = vmul.f32 %v337, %v407
    %v414 = vmul.f32 %v338, %v407
    %v415 = vmul.f32 %v339, %v407
    %v416 = vadd.f32 %v307, %v408
    %v417 = vadd.f32 %v308, %v409
    %v418 = vadd.f32 %v309, %v410
    %v419 = vadd.f32 %v310, %v411
    %v420 = vadd.f32 %v311, %v412
    %v421 = vadd.f32 %v312, %v413
    %v422 = vadd.f32 %v313, %v414
    %v423 = vadd.f32 %v314, %v415
    %v424 = vrot.slane %v87, 7
    %v425 = vrot.slane %v88, 7
    %v426 = vrot.slane %v89, 7
    %v427 = vrot.slane %v90, 7
    %v428 = vrot.slane %v91, 7
    %v429 = vrot.slane %v92, 7
    %v430 = vrot.slane %v93, 7
    %v431 = vrot.slane %v94, 7
    %v432 = vsel %vm127, %v430, %v431
    %v433 = vsel %vm127, %v429, %v430
    %v434 = vsel %vm127, %v428, %v429
    %v435 = vsel %vm127, %v427, %v428
    %v436 = vsel %vm127, %v426, %v427
    %v437 = vsel %vm127, %v425, %v426
    %v438 = vsel %vm127, %v424, %v425
    %v439 = vsel %vm127, %v431, %v424
    %v440 = vsel %vm40, %v439, 0.0
    %v441 = vsel %vm41, %v438, 0.0
    %v442 = vsel %vm42, %v437, 0.0
    %v443 = vsel %vm43, %v436, 0.0
    %v444 = vsel %vm44, %v435, 0.0
    %v445 = vsel %vm45, %v434, 0.0
    %v446 = vsel %vm46, %v433, 0.0
    %v447 = vsel %vm47, %v432, 0.0
    %v448 = vld [vmem:[%s1 + $0x1] sm:$0x1]
    %v449 = vlaneseq
    %v450 = vshrl.u32 %v449, 7
    %v451 = vsub.s32 0, %v450
    %v452 = vrot.slane %v448, %v451
    %v453 = vmul.f32 %v440, %v452
    %v454 = vmul.f32 %v441, %v452
    %v455 = vmul.f32 %v442, %v452
    %v456 = vmul.f32 %v443, %v452
    %v457 = vmul.f32 %v444, %v452
    %v458 = vmul.f32 %v445, %v452
    %v459 = vmul.f32 %v446, %v452
    %v460 = vmul.f32 %v447, %v452
    %v461 = vadd.f32 %v353, %v453
    %v462 = vadd.f32 %v354, %v454
    %v463 = vadd.f32 %v355, %v455
    %v464 = vadd.f32 %v356, %v456
    %v465 = vadd.f32 %v357, %v457
    %v466 = vadd.f32 %v358, %v458
    %v467 = vadd.f32 %v359, %v459
    %v468 = vadd.f32 %v360, %v460
    %v469 = vld [vmem:[%s165 + $0x1] sm:$0x1]
    %v470 = vlaneseq
    %v471 = vshrl.u32 %v470, 7
    %v472 = vsub.s32 0, %v471
    %v473 = vrot.slane %v469, %v472
    %v474 = vmul.f32 %v440, %v473
    %v475 = vmul.f32 %v441, %v473
    %v476 = vmul.f32 %v442, %v473
    %v477 = vmul.f32 %v443, %v473
    %v478 = vmul.f32 %v444, %v473
    %v479 = vmul.f32 %v445, %v473
    %v480 = vmul.f32 %v446, %v473
    %v481 = vmul.f32 %v447, %v473
    %v482 = vadd.f32 %v374, %v474
    %v483 = vadd.f32 %v375, %v475
    %v484 = vadd.f32 %v376, %v476
    %v485 = vadd.f32 %v377, %v477
    %v486 = vadd.f32 %v378, %v478
    %v487 = vadd.f32 %v379, %v479
    %v488 = vadd.f32 %v380, %v480
    %v489 = vadd.f32 %v381, %v481
    %v490 = vld [vmem:[%s187 + $0x1] sm:$0x1]
    %v491 = vlaneseq
    %v492 = vshrl.u32 %v491, 7
    %v493 = vsub.s32 0, %v492
    %v494 = vrot.slane %v490, %v493
    %v495 = vmul.f32 %v440, %v494
    %v496 = vmul.f32 %v441, %v494
    %v497 = vmul.f32 %v442, %v494
    %v498 = vmul.f32 %v443, %v494
    %v499 = vmul.f32 %v444, %v494
    %v500 = vmul.f32 %v445, %v494
    %v501 = vmul.f32 %v446, %v494
    %v502 = vmul.f32 %v447, %v494
    %v503 = vadd.f32 %v395, %v495
    %v504 = vadd.f32 %v396, %v496
    %v505 = vadd.f32 %v397, %v497
    %v506 = vadd.f32 %v398, %v498
    %v507 = vadd.f32 %v399, %v499
    %v508 = vadd.f32 %v400, %v500
    %v509 = vadd.f32 %v401, %v501
    %v510 = vadd.f32 %v402, %v502
    %v511 = vld [vmem:[%s209 + $0x1] sm:$0x1]
    %v512 = vlaneseq
    %v513 = vshrl.u32 %v512, 7
    %v514 = vsub.s32 0, %v513
    %v515 = vrot.slane %v511, %v514
    %v516 = vmul.f32 %v440, %v515
    %v517 = vmul.f32 %v441, %v515
    %v518 = vmul.f32 %v442, %v515
    %v519 = vmul.f32 %v443, %v515
    %v520 = vmul.f32 %v444, %v515
    %v521 = vmul.f32 %v445, %v515
    %v522 = vmul.f32 %v446, %v515
    %v523 = vmul.f32 %v447, %v515
    %v524 = vadd.f32 %v416, %v516
    %v525 = vadd.f32 %v417, %v517
    %v526 = vadd.f32 %v418, %v518
    %v527 = vadd.f32 %v419, %v519
    %v528 = vadd.f32 %v420, %v520
    %v529 = vadd.f32 %v421, %v521
    %v530 = vadd.f32 %v422, %v522
    %v531 = vadd.f32 %v423, %v523
    %v532 = vld [vmem:[%s1 + $0x4] sm:$0x1]
    %v533 = vlaneseq
    %v534 = vshrl.u32 %v533, 7
    %v535 = vsub.s32 0, %v534
    %v536 = vrot.slane %v532, %v535
    %v537 = vmul.f32 %v87, %v536
    %v538 = vmul.f32 %v88, %v536
    %v539 = vmul.f32 %v89, %v536
    %v540 = vmul.f32 %v90, %v536
    %v541 = vmul.f32 %v91, %v536
    %v542 = vmul.f32 %v92, %v536
    %v543 = vmul.f32 %v93, %v536
    %v544 = vmul.f32 %v94, %v536
    %v545 = vadd.f32 %v461, %v537
    %v546 = vadd.f32 %v462, %v538
    %v547 = vadd.f32 %v463, %v539
    %v548 = vadd.f32 %v464, %v540
    %v549 = vadd.f32 %v465, %v541
    %v550 = vadd.f32 %v466, %v542
    %v551 = vadd.f32 %v467, %v543
    %v552 = vadd.f32 %v468, %v544
    %v553 = vld [vmem:[%s165 + $0x4] sm:$0x1]
    %v554 = vlaneseq
    %v555 = vshrl.u32 %v554, 7
    %v556 = vsub.s32 0, %v555
    %v557 = vrot.slane %v553, %v556
    %v558 = vmul.f32 %v87, %v557
    %v559 = vmul.f32 %v88, %v557
    %v560 = vmul.f32 %v89, %v557
    %v561 = vmul.f32 %v90, %v557
    %v562 = vmul.f32 %v91, %v557
    %v563 = vmul.f32 %v92, %v557
    %v564 = vmul.f32 %v93, %v557
    %v565 = vmul.f32 %v94, %v557
    %v566 = vadd.f32 %v482, %v558
    %v567 = vadd.f32 %v483, %v559
    %v568 = vadd.f32 %v484, %v560
    %v569 = vadd.f32 %v485, %v561
    %v570 = vadd.f32 %v486, %v562
    %v571 = vadd.f32 %v487, %v563
    %v572 = vadd.f32 %v488, %v564
    %v573 = vadd.f32 %v489, %v565
    %v574 = vld [vmem:[%s187 + $0x4] sm:$0x1]
    %v575 = vlaneseq
    %v576 = vshrl.u32 %v575, 7
    %v577 = vsub.s32 0, %v576
    %v578 = vrot.slane %v574, %v577
    %v579 = vmul.f32 %v87, %v578
    %v580 = vmul.f32 %v88, %v578
    %v581 = vmul.f32 %v89, %v578
    %v582 = vmul.f32 %v90, %v578
    %v583 = vmul.f32 %v91, %v578
    %v584 = vmul.f32 %v92, %v578
    %v585 = vmul.f32 %v93, %v578
    %v586 = vmul.f32 %v94, %v578
    %v587 = vadd.f32 %v503, %v579
    %v588 = vadd.f32 %v504, %v580
    %v589 = vadd.f32 %v505, %v581
    %v590 = vadd.f32 %v506, %v582
    %v591 = vadd.f32 %v507, %v583
    %v592 = vadd.f32 %v508, %v584
    %v593 = vadd.f32 %v509, %v585
    %v594 = vadd.f32 %v510, %v586
    %v595 = vld [vmem:[%s209 + $0x4] sm:$0x1]
    %v596 = vlaneseq
    %v597 = vshrl.u32 %v596, 7
    %v598 = vsub.s32 0, %v597
    %v599 = vrot.slane %v595, %v598
    %v600 = vmul.f32 %v87, %v599
    %v601 = vmul.f32 %v88, %v599
    %v602 = vmul.f32 %v89, %v599
    %v603 = vmul.f32 %v90, %v599
    %v604 = vmul.f32 %v91, %v599
    %v605 = vmul.f32 %v92, %v599
    %v606 = vmul.f32 %v93, %v599
    %v607 = vmul.f32 %v94, %v599
    %v608 = vadd.f32 %v524, %v600
    %v609 = vadd.f32 %v525, %v601
    %v610 = vadd.f32 %v526, %v602
    %v611 = vadd.f32 %v527, %v603
    %v612 = vadd.f32 %v528, %v604
    %v613 = vadd.f32 %v529, %v605
    %v614 = vadd.f32 %v530, %v606
    %v615 = vadd.f32 %v531, %v607
    %v616 = vrot.slane %v87, 1
    %v617 = vrot.slane %v88, 1
    %v618 = vrot.slane %v89, 1
    %v619 = vrot.slane %v90, 1
    %v620 = vrot.slane %v91, 1
    %v621 = vrot.slane %v92, 1
    %v622 = vrot.slane %v93, 1
    %v623 = vrot.slane %v94, 1
    %v624 = vsel %vm323, %v622, %v623
    %v625 = vsel %vm323, %v621, %v622
    %v626 = vsel %vm323, %v620, %v621
    %v627 = vsel %vm323, %v619, %v620
    %v628 = vsel %vm323, %v618, %v619
    %v629 = vsel %vm323, %v617, %v618
    %v630 = vsel %vm323, %v616, %v617
    %v631 = vsel %vm323, %v623, %v616
    %v632 = vsel %vm48, %v630, 0.0
    %v633 = vsel %vm49, %v629, 0.0
    %v634 = vsel %vm50, %v628, 0.0
    %v635 = vsel %vm51, %v627, 0.0
    %v636 = vsel %vm52, %v626, 0.0
    %v637 = vsel %vm53, %v625, 0.0
    %v638 = vsel %vm54, %v624, 0.0
    %v639 = vsel %vm55, %v631, 0.0
    %v640 = vld [vmem:[%s1 + $0x7] sm:$0x1]
    %v641 = vlaneseq
    %v642 = vshrl.u32 %v641, 7
    %v643 = vsub.s32 0, %v642
    %v644 = vrot.slane %v640, %v643
    %v645 = vmul.f32 %v632, %v644
    %v646 = vmul.f32 %v633, %v644
    %v647 = vmul.f32 %v634, %v644
    %v648 = vmul.f32 %v635, %v644
    %v649 = vmul.f32 %v636, %v644
    %v650 = vmul.f32 %v637, %v644
    %v651 = vmul.f32 %v638, %v644
    %v652 = vmul.f32 %v639, %v644
    %v653 = vadd.f32 %v545, %v645
    %v654 = vadd.f32 %v546, %v646
    %v655 = vadd.f32 %v547, %v647
    %v656 = vadd.f32 %v548, %v648
    %v657 = vadd.f32 %v549, %v649
    %v658 = vadd.f32 %v550, %v650
    %v659 = vadd.f32 %v551, %v651
    %v660 = vadd.f32 %v552, %v652
    %v661 = vld [vmem:[%s165 + $0x7] sm:$0x1]
    %v662 = vlaneseq
    %v663 = vshrl.u32 %v662, 7
    %v664 = vsub.s32 0, %v663
    %v665 = vrot.slane %v661, %v664
    %v666 = vmul.f32 %v632, %v665
    %v667 = vmul.f32 %v633, %v665
    %v668 = vmul.f32 %v634, %v665
    %v669 = vmul.f32 %v635, %v665
    %v670 = vmul.f32 %v636, %v665
    %v671 = vmul.f32 %v637, %v665
    %v672 = vmul.f32 %v638, %v665
    %v673 = vmul.f32 %v639, %v665
    %v674 = vadd.f32 %v566, %v666
    %v675 = vadd.f32 %v567, %v667
    %v676 = vadd.f32 %v568, %v668
    %v677 = vadd.f32 %v569, %v669
    %v678 = vadd.f32 %v570, %v670
    %v679 = vadd.f32 %v571, %v671
    %v680 = vadd.f32 %v572, %v672
    %v681 = vadd.f32 %v573, %v673
    %v682 = vld [vmem:[%s187 + $0x7] sm:$0x1]
    %v683 = vlaneseq
    %v684 = vshrl.u32 %v683, 7
    %v685 = vsub.s32 0, %v684
    %v686 = vrot.slane %v682, %v685
    %v687 = vmul.f32 %v632, %v686
    %v688 = vmul.f32 %v633, %v686
    %v689 = vmul.f32 %v634, %v686
    %v690 = vmul.f32 %v635, %v686
    %v691 = vmul.f32 %v636, %v686
    %v692 = vmul.f32 %v637, %v686
    %v693 = vmul.f32 %v638, %v686
    %v694 = vmul.f32 %v639, %v686
    %v695 = vadd.f32 %v587, %v687
    %v696 = vadd.f32 %v588, %v688
    %v697 = vadd.f32 %v589, %v689
    %v698 = vadd.f32 %v590, %v690
    %v699 = vadd.f32 %v591, %v691
    %v700 = vadd.f32 %v592, %v692
    %v701 = vadd.f32 %v593, %v693
    %v702 = vadd.f32 %v594, %v694
    %v703 = vld [vmem:[%s209 + $0x7] sm:$0x1]
    %v704 = vlaneseq
    %v705 = vshrl.u32 %v704, 7
    %v706 = vsub.s32 0, %v705
    %v707 = vrot.slane %v703, %v706
    %v708 = vmul.f32 %v632, %v707
    %v709 = vmul.f32 %v633, %v707
    %v710 = vmul.f32 %v634, %v707
    %v711 = vmul.f32 %v635, %v707
    %v712 = vmul.f32 %v636, %v707
    %v713 = vmul.f32 %v637, %v707
    %v714 = vmul.f32 %v638, %v707
    %v715 = vmul.f32 %v639, %v707
    %v716 = vadd.f32 %v608, %v708
    %v717 = vadd.f32 %v609, %v709
    %v718 = vadd.f32 %v610, %v710
    %v719 = vadd.f32 %v611, %v711
    %v720 = vadd.f32 %v612, %v712
    %v721 = vadd.f32 %v613, %v713
    %v722 = vadd.f32 %v614, %v714
    %v723 = vadd.f32 %v615, %v715
    %724 = vrot.lane.b32.xlu0 %v87, 127
    %v725 = vpop.permute.xlu0 %724
    %726 = vrot.lane.b32.xlu0 %v88, 127
    %v727 = vpop.permute.xlu0 %726
    %728 = vrot.lane.b32.xlu0 %v89, 127
    %v729 = vpop.permute.xlu0 %728
    %730 = vrot.lane.b32.xlu0 %v90, 127
    %v731 = vpop.permute.xlu0 %730
    %732 = vrot.lane.b32.xlu0 %v91, 127
    %v733 = vpop.permute.xlu0 %732
    %734 = vrot.lane.b32.xlu0 %v92, 127
    %v735 = vpop.permute.xlu0 %734
    %736 = vrot.lane.b32.xlu0 %v93, 127
    %v737 = vpop.permute.xlu0 %736
    %738 = vrot.lane.b32.xlu0 %v94, 127
    %v739 = vpop.permute.xlu0 %738
    %v740 = vsel %vm39, %v725, 0.0
    %v741 = vsel %vm39, %v727, 0.0
    %v742 = vsel %vm39, %v729, 0.0
    %v743 = vsel %vm39, %v731, 0.0
    %v744 = vsel %vm39, %v733, 0.0
    %v745 = vsel %vm39, %v735, 0.0
    %v746 = vsel %vm39, %v737, 0.0
    %v747 = vsel %vm39, %v739, 0.0
    %v748 = vrot.slane %v740, 7
    %v749 = vrot.slane %v741, 7
    %v750 = vrot.slane %v742, 7
    %v751 = vrot.slane %v743, 7
    %v752 = vrot.slane %v744, 7
    %v753 = vrot.slane %v745, 7
    %v754 = vrot.slane %v746, 7
    %v755 = vrot.slane %v747, 7
    %v756 = vsel %vm127, %v754, %v755
    %v757 = vsel %vm127, %v753, %v754
    %v758 = vsel %vm127, %v752, %v753
    %v759 = vsel %vm127, %v751, %v752
    %v760 = vsel %vm127, %v750, %v751
    %v761 = vsel %vm127, %v749, %v750
    %v762 = vsel %vm127, %v748, %v749
    %v763 = vsel %vm127, %v755, %v748
    %v764 = vsel %vm40, %v763, 0.0
    %v765 = vsel %vm41, %v762, 0.0
    %v766 = vsel %vm42, %v761, 0.0
    %v767 = vsel %vm43, %v760, 0.0
    %v768 = vsel %vm44, %v759, 0.0
    %v769 = vsel %vm45, %v758, 0.0
    %v770 = vsel %vm46, %v757, 0.0
    %v771 = vsel %vm47, %v756, 0.0
    %v772 = vld [vmem:[%s1 + $0x2] sm:$0x1]
    %v773 = vlaneseq
    %v774 = vshrl.u32 %v773, 7
    %v775 = vsub.s32 0, %v774
    %v776 = vrot.slane %v772, %v775
    %v777 = vmul.f32 %v764, %v776
    %v778 = vmul.f32 %v765, %v776
    %v779 = vmul.f32 %v766, %v776
    %v780 = vmul.f32 %v767, %v776
    %v781 = vmul.f32 %v768, %v776
    %v782 = vmul.f32 %v769, %v776
    %v783 = vmul.f32 %v770, %v776
    %v784 = vmul.f32 %v771, %v776
    %v785 = vadd.f32 %v653, %v777
    %v786 = vadd.f32 %v654, %v778
    %v787 = vadd.f32 %v655, %v779
    %v788 = vadd.f32 %v656, %v780
    %v789 = vadd.f32 %v657, %v781
    %v790 = vadd.f32 %v658, %v782
    %v791 = vadd.f32 %v659, %v783
    %v792 = vadd.f32 %v660, %v784
    %v793 = vld [vmem:[%s165 + $0x2] sm:$0x1]
    %v794 = vlaneseq
    %v795 = vshrl.u32 %v794, 7
    %v796 = vsub.s32 0, %v795
    %v797 = vrot.slane %v793, %v796
    %v798 = vmul.f32 %v764, %v797
    %v799 = vmul.f32 %v765, %v797
    %v800 = vmul.f32 %v766, %v797
    %v801 = vmul.f32 %v767, %v797
    %v802 = vmul.f32 %v768, %v797
    %v803 = vmul.f32 %v769, %v797
    %v804 = vmul.f32 %v770, %v797
    %v805 = vmul.f32 %v771, %v797
    %v806 = vadd.f32 %v674, %v798
    %v807 = vadd.f32 %v675, %v799
    %v808 = vadd.f32 %v676, %v800
    %v809 = vadd.f32 %v677, %v801
    %v810 = vadd.f32 %v678, %v802
    %v811 = vadd.f32 %v679, %v803
    %v812 = vadd.f32 %v680, %v804
    %v813 = vadd.f32 %v681, %v805
    %v814 = vld [vmem:[%s187 + $0x2] sm:$0x1]
    %v815 = vlaneseq
    %v816 = vshrl.u32 %v815, 7
    %v817 = vsub.s32 0, %v816
    %v818 = vrot.slane %v814, %v817
    %v819 = vmul.f32 %v764, %v818
    %v820 = vmul.f32 %v765, %v818
    %v821 = vmul.f32 %v766, %v818
    %v822 = vmul.f32 %v767, %v818
    %v823 = vmul.f32 %v768, %v818
    %v824 = vmul.f32 %v769, %v818
    %v825 = vmul.f32 %v770, %v818
    %v826 = vmul.f32 %v771, %v818
    %v827 = vadd.f32 %v695, %v819
    %v828 = vadd.f32 %v696, %v820
    %v829 = vadd.f32 %v697, %v821
    %v830 = vadd.f32 %v698, %v822
    %v831 = vadd.f32 %v699, %v823
    %v832 = vadd.f32 %v700, %v824
    %v833 = vadd.f32 %v701, %v825
    %v834 = vadd.f32 %v702, %v826
    %v835 = vld [vmem:[%s209 + $0x2] sm:$0x1]
    %v836 = vlaneseq
    %v837 = vshrl.u32 %v836, 7
    %v838 = vsub.s32 0, %v837
    %v839 = vrot.slane %v835, %v838
    %v840 = vmul.f32 %v764, %v839
    %v841 = vmul.f32 %v765, %v839
    %v842 = vmul.f32 %v766, %v839
    %v843 = vmul.f32 %v767, %v839
    %v844 = vmul.f32 %v768, %v839
    %v845 = vmul.f32 %v769, %v839
    %v846 = vmul.f32 %v770, %v839
    %v847 = vmul.f32 %v771, %v839
    %v848 = vadd.f32 %v716, %v840
    %v849 = vadd.f32 %v717, %v841
    %v850 = vadd.f32 %v718, %v842
    %v851 = vadd.f32 %v719, %v843
    %v852 = vadd.f32 %v720, %v844
    %v853 = vadd.f32 %v721, %v845
    %v854 = vadd.f32 %v722, %v846
    %v855 = vadd.f32 %v723, %v847
    %v856 = vld [vmem:[%s1 + $0x5] sm:$0x1]
    %v857 = vlaneseq
    %v858 = vshrl.u32 %v857, 7
    %v859 = vsub.s32 0, %v858
    %v860 = vrot.slane %v856, %v859
    %v861 = vmul.f32 %v740, %v860
    %v862 = vmul.f32 %v741, %v860
    %v863 = vmul.f32 %v742, %v860
    %v864 = vmul.f32 %v743, %v860
    %v865 = vmul.f32 %v744, %v860
    %v866 = vmul.f32 %v745, %v860
    %v867 = vmul.f32 %v746, %v860
    %v868 = vmul.f32 %v747, %v860
    %v869 = vadd.f32 %v785, %v861
    %v870 = vadd.f32 %v786, %v862
    %v871 = vadd.f32 %v787, %v863
    %v872 = vadd.f32 %v788, %v864
    %v873 = vadd.f32 %v789, %v865
    %v874 = vadd.f32 %v790, %v866
    %v875 = vadd.f32 %v791, %v867
    %v876 = vadd.f32 %v792, %v868
    %v877 = vld [vmem:[%s165 + $0x5] sm:$0x1]
    %v878 = vlaneseq
    %v879 = vshrl.u32 %v878, 7
    %v880 = vsub.s32 0, %v879
    %v881 = vrot.slane %v877, %v880
    %v882 = vmul.f32 %v740, %v881
    %v883 = vmul.f32 %v741, %v881
    %v884 = vmul.f32 %v742, %v881
    %v885 = vmul.f32 %v743, %v881
    %v886 = vmul.f32 %v744, %v881
    %v887 = vmul.f32 %v745, %v881
    %v888 = vmul.f32 %v746, %v881
    %v889 = vmul.f32 %v747, %v881
    %v890 = vadd.f32 %v806, %v882
    %v891 = vadd.f32 %v807, %v883
    %v892 = vadd.f32 %v808, %v884
    %v893 = vadd.f32 %v809, %v885
    %v894 = vadd.f32 %v810, %v886
    %v895 = vadd.f32 %v811, %v887
    %v896 = vadd.f32 %v812, %v888
    %v897 = vadd.f32 %v813, %v889
    %v898 = vld [vmem:[%s187 + $0x5] sm:$0x1]
    %v899 = vlaneseq
    %v900 = vshrl.u32 %v899, 7
    %v901 = vsub.s32 0, %v900
    %v902 = vrot.slane %v898, %v901
    %v903 = vmul.f32 %v740, %v902
    %v904 = vmul.f32 %v741, %v902
    %v905 = vmul.f32 %v742, %v902
    %v906 = vmul.f32 %v743, %v902
    %v907 = vmul.f32 %v744, %v902
    %v908 = vmul.f32 %v745, %v902
    %v909 = vmul.f32 %v746, %v902
    %v910 = vmul.f32 %v747, %v902
    %v911 = vadd.f32 %v827, %v903
    %v912 = vadd.f32 %v828, %v904
    %v913 = vadd.f32 %v829, %v905
    %v914 = vadd.f32 %v830, %v906
    %v915 = vadd.f32 %v831, %v907
    %v916 = vadd.f32 %v832, %v908
    %v917 = vadd.f32 %v833, %v909
    %v918 = vadd.f32 %v834, %v910
    %v919 = vld [vmem:[%s209 + $0x5] sm:$0x1]
    %v920 = vlaneseq
    %v921 = vshrl.u32 %v920, 7
    %v922 = vsub.s32 0, %v921
    %v923 = vrot.slane %v919, %v922
    %v924 = vmul.f32 %v740, %v923
    %v925 = vmul.f32 %v741, %v923
    %v926 = vmul.f32 %v742, %v923
    %v927 = vmul.f32 %v743, %v923
    %v928 = vmul.f32 %v744, %v923
    %v929 = vmul.f32 %v745, %v923
    %v930 = vmul.f32 %v746, %v923
    %v931 = vmul.f32 %v747, %v923
    %v932 = vadd.f32 %v848, %v924
    %v933 = vadd.f32 %v849, %v925
    %v934 = vadd.f32 %v850, %v926
    %v935 = vadd.f32 %v851, %v927
    %v936 = vadd.f32 %v852, %v928
    %v937 = vadd.f32 %v853, %v929
    %v938 = vadd.f32 %v854, %v930
    %v939 = vadd.f32 %v855, %v931
    %v940 = vrot.slane %v740, 1
    %v941 = vrot.slane %v741, 1
    %v942 = vrot.slane %v742, 1
    %v943 = vrot.slane %v743, 1
    %v944 = vrot.slane %v744, 1
    %v945 = vrot.slane %v745, 1
    %v946 = vrot.slane %v746, 1
    %v947 = vrot.slane %v747, 1
    %v948 = vsel %vm323, %v946, %v947
    %v949 = vsel %vm323, %v945, %v946
    %v950 = vsel %vm323, %v944, %v945
    %v951 = vsel %vm323, %v943, %v944
    %v952 = vsel %vm323, %v942, %v943
    %v953 = vsel %vm323, %v941, %v942
    %v954 = vsel %vm323, %v940, %v941
    %v955 = vsel %vm323, %v947, %v940
    %v956 = vsel %vm48, %v954, 0.0
    %v957 = vsel %vm49, %v953, 0.0
    %v958 = vsel %vm50, %v952, 0.0
    %v959 = vsel %vm51, %v951, 0.0
    %v960 = vsel %vm52, %v950, 0.0
    %v961 = vsel %vm53, %v949, 0.0
    %v962 = vsel %vm54, %v948, 0.0
    %v963 = vsel %vm55, %v955, 0.0
    %v964 = vld [vmem:[%s1 + $0x8] sm:$0x1]
    %v965 = vlaneseq
    %v966 = vshrl.u32 %v965, 7
    %v967 = vsub.s32 0, %v966
    %v968 = vrot.slane %v964, %v967
    %v969 = vmul.f32 %v956, %v968
    %v970 = vmul.f32 %v957, %v968
    %v971 = vmul.f32 %v958, %v968
    %v972 = vmul.f32 %v959, %v968
    %v973 = vmul.f32 %v960, %v968
    %v974 = vmul.f32 %v961, %v968
    %v975 = vmul.f32 %v962, %v968
    %v976 = vmul.f32 %v963, %v968
    %v977 = vadd.f32 %v869, %v969
    %v978 = vadd.f32 %v870, %v970
    %v979 = vadd.f32 %v871, %v971
    %v980 = vadd.f32 %v872, %v972
    %v981 = vadd.f32 %v873, %v973
    %v982 = vadd.f32 %v874, %v974
    %v983 = vadd.f32 %v875, %v975
    %v984 = vadd.f32 %v876, %v976
    %v985 = vld [vmem:[%s165 + $0x8] sm:$0x1]
    %v986 = vlaneseq
    %v987 = vshrl.u32 %v986, 7
    %v988 = vsub.s32 0, %v987
    %v989 = vrot.slane %v985, %v988
    %v990 = vmul.f32 %v956, %v989
    %v991 = vmul.f32 %v957, %v989
    %v992 = vmul.f32 %v958, %v989
    %v993 = vmul.f32 %v959, %v989
    %v994 = vmul.f32 %v960, %v989
    %v995 = vmul.f32 %v961, %v989
    %v996 = vmul.f32 %v962, %v989
    %v997 = vmul.f32 %v963, %v989
    %v998 = vadd.f32 %v890, %v990
    %v999 = vadd.f32 %v891, %v991
    %v1000 = vadd.f32 %v892, %v992
    %v1001 = vadd.f32 %v893, %v993
    %v1002 = vadd.f32 %v894, %v994
    %v1003 = vadd.f32 %v895, %v995
    %v1004 = vadd.f32 %v896, %v996
    %v1005 = vadd.f32 %v897, %v997
    %v1006 = vld [vmem:[%s187 + $0x8] sm:$0x1]
    %v1007 = vlaneseq
    %v1008 = vshrl.u32 %v1007, 7
    %v1009 = vsub.s32 0, %v1008
    %v1010 = vrot.slane %v1006, %v1009
    %v1011 = vmul.f32 %v956, %v1010
    %v1012 = vmul.f32 %v957, %v1010
    %v1013 = vmul.f32 %v958, %v1010
    %v1014 = vmul.f32 %v959, %v1010
    %v1015 = vmul.f32 %v960, %v1010
    %v1016 = vmul.f32 %v961, %v1010
    %v1017 = vmul.f32 %v962, %v1010
    %v1018 = vmul.f32 %v963, %v1010
    %v1019 = vadd.f32 %v911, %v1011
    %v1020 = vadd.f32 %v912, %v1012
    %v1021 = vadd.f32 %v913, %v1013
    %v1022 = vadd.f32 %v914, %v1014
    %v1023 = vadd.f32 %v915, %v1015
    %v1024 = vadd.f32 %v916, %v1016
    %v1025 = vadd.f32 %v917, %v1017
    %v1026 = vadd.f32 %v918, %v1018
    %v1027 = vld [vmem:[%s209 + $0x8] sm:$0x1]
    %v1028 = vlaneseq
    %v1029 = vshrl.u32 %v1028, 7
    %v1030 = vsub.s32 0, %v1029
    %v1031 = vrot.slane %v1027, %v1030
    %v1032 = vmul.f32 %v956, %v1031
    %v1033 = vmul.f32 %v957, %v1031
    %v1034 = vmul.f32 %v958, %v1031
    %v1035 = vmul.f32 %v959, %v1031
    %v1036 = vmul.f32 %v960, %v1031
    %v1037 = vmul.f32 %v961, %v1031
    %v1038 = vmul.f32 %v962, %v1031
    %v1039 = vmul.f32 %v963, %v1031
    %v1040 = vadd.f32 %v932, %v1032
    %v1041 = vadd.f32 %v933, %v1033
    %v1042 = vadd.f32 %v934, %v1034
    %v1043 = vadd.f32 %v935, %v1035
    %v1044 = vadd.f32 %v936, %v1036
    %v1045 = vadd.f32 %v937, %v1037
    %v1046 = vadd.f32 %v938, %v1038
    %v1047 = vadd.f32 %v939, %v1039
    %s1048 = scalar_lea.vmem %s0, 64
    %v1049 = vld [vmem:[%s1048] sm:$0xff]
    %v1050 = vld [vmem:[%s1048 + $0x8] sm:$0xff]
    %v1051 = vld [vmem:[%s1048 + $0x10] sm:$0xff]
    %v1052 = vld [vmem:[%s1048 + $0x18] sm:$0xff]
    %v1053 = vld [vmem:[%s1048 + $0x20] sm:$0xff]
    %v1054 = vld [vmem:[%s1048 + $0x28] sm:$0xff]
    %v1055 = vld [vmem:[%s1048 + $0x30] sm:$0xff]
    %v1056 = vld [vmem:[%s1048 + $0x38] sm:$0xff]
    %1057 = vrot.lane.b32.xlu0 %v1049, 1
    %v1058 = vpop.permute.xlu0 %1057
    %1059 = vrot.lane.b32.xlu0 %v1050, 1
    %v1060 = vpop.permute.xlu0 %1059
    %1061 = vrot.lane.b32.xlu0 %v1051, 1
    %v1062 = vpop.permute.xlu0 %1061
    %1063 = vrot.lane.b32.xlu0 %v1052, 1
    %v1064 = vpop.permute.xlu0 %1063
    %1065 = vrot.lane.b32.xlu0 %v1053, 1
    %v1066 = vpop.permute.xlu0 %1065
    %1067 = vrot.lane.b32.xlu0 %v1054, 1
    %v1068 = vpop.permute.xlu0 %1067
    %1069 = vrot.lane.b32.xlu0 %v1055, 1
    %v1070 = vpop.permute.xlu0 %1069
    %1071 = vrot.lane.b32.xlu0 %v1056, 1
    %v1072 = vpop.permute.xlu0 %1071
    %v1073 = vsel %vm38, %v1058, 0.0
    %v1074 = vsel %vm38, %v1060, 0.0
    %v1075 = vsel %vm38, %v1062, 0.0
    %v1076 = vsel %vm38, %v1064, 0.0
    %v1077 = vsel %vm38, %v1066, 0.0
    %v1078 = vsel %vm38, %v1068, 0.0
    %v1079 = vsel %vm38, %v1070, 0.0
    %v1080 = vsel %vm38, %v1072, 0.0
    %v1081 = vrot.slane %v1073, 7
    %v1082 = vrot.slane %v1074, 7
    %v1083 = vrot.slane %v1075, 7
    %v1084 = vrot.slane %v1076, 7
    %v1085 = vrot.slane %v1077, 7
    %v1086 = vrot.slane %v1078, 7
    %v1087 = vrot.slane %v1079, 7
    %v1088 = vrot.slane %v1080, 7
    %v1089 = vsel %vm127, %v1087, %v1088
    %v1090 = vsel %vm127, %v1086, %v1087
    %v1091 = vsel %vm127, %v1085, %v1086
    %v1092 = vsel %vm127, %v1084, %v1085
    %v1093 = vsel %vm127, %v1083, %v1084
    %v1094 = vsel %vm127, %v1082, %v1083
    %v1095 = vsel %vm127, %v1081, %v1082
    %v1096 = vsel %vm127, %v1088, %v1081
    %v1097 = vsel %vm40, %v1096, 0.0
    %v1098 = vsel %vm41, %v1095, 0.0
    %v1099 = vsel %vm42, %v1094, 0.0
    %v1100 = vsel %vm43, %v1093, 0.0
    %v1101 = vsel %vm44, %v1092, 0.0
    %v1102 = vsel %vm45, %v1091, 0.0
    %v1103 = vsel %vm46, %v1090, 0.0
    %v1104 = vsel %vm47, %v1089, 0.0
    %v1105 = vld [vmem:[%s1 + $0x9] sm:$0x1]
    %v1106 = vlaneseq
    %v1107 = vshrl.u32 %v1106, 7
    %v1108 = vsub.s32 0, %v1107
    %v1109 = vrot.slane %v1105, %v1108
    %v1110 = vmul.f32 %v1097, %v1109
    %v1111 = vmul.f32 %v1098, %v1109
    %v1112 = vmul.f32 %v1099, %v1109
    %v1113 = vmul.f32 %v1100, %v1109
    %v1114 = vmul.f32 %v1101, %v1109
    %v1115 = vmul.f32 %v1102, %v1109
    %v1116 = vmul.f32 %v1103, %v1109
    %v1117 = vmul.f32 %v1104, %v1109
    %v1118 = vadd.f32 %v977, %v1110
    %v1119 = vadd.f32 %v978, %v1111
    %v1120 = vadd.f32 %v979, %v1112
    %v1121 = vadd.f32 %v980, %v1113
    %v1122 = vadd.f32 %v981, %v1114
    %v1123 = vadd.f32 %v982, %v1115
    %v1124 = vadd.f32 %v983, %v1116
    %v1125 = vadd.f32 %v984, %v1117
    %v1126 = vld [vmem:[%s165 + $0x9] sm:$0x1]
    %v1127 = vlaneseq
    %v1128 = vshrl.u32 %v1127, 7
    %v1129 = vsub.s32 0, %v1128
    %v1130 = vrot.slane %v1126, %v1129
    %v1131 = vmul.f32 %v1097, %v1130
    %v1132 = vmul.f32 %v1098, %v1130
    %v1133 = vmul.f32 %v1099, %v1130
    %v1134 = vmul.f32 %v1100, %v1130
    %v1135 = vmul.f32 %v1101, %v1130
    %v1136 = vmul.f32 %v1102, %v1130
    %v1137 = vmul.f32 %v1103, %v1130
    %v1138 = vmul.f32 %v1104, %v1130
    %v1139 = vadd.f32 %v998, %v1131
    %v1140 = vadd.f32 %v999, %v1132
    %v1141 = vadd.f32 %v1000, %v1133
    %v1142 = vadd.f32 %v1001, %v1134
    %v1143 = vadd.f32 %v1002, %v1135
    %v1144 = vadd.f32 %v1003, %v1136
    %v1145 = vadd.f32 %v1004, %v1137
    %v1146 = vadd.f32 %v1005, %v1138
    %v1147 = vld [vmem:[%s187 + $0x9] sm:$0x1]
    %v1148 = vlaneseq
    %v1149 = vshrl.u32 %v1148, 7
    %v1150 = vsub.s32 0, %v1149
    %v1151 = vrot.slane %v1147, %v1150
    %v1152 = vmul.f32 %v1097, %v1151
    %v1153 = vmul.f32 %v1098, %v1151
    %v1154 = vmul.f32 %v1099, %v1151
    %v1155 = vmul.f32 %v1100, %v1151
    %v1156 = vmul.f32 %v1101, %v1151
    %v1157 = vmul.f32 %v1102, %v1151
    %v1158 = vmul.f32 %v1103, %v1151
    %v1159 = vmul.f32 %v1104, %v1151
    %v1160 = vadd.f32 %v1019, %v1152
    %v1161 = vadd.f32 %v1020, %v1153
    %v1162 = vadd.f32 %v1021, %v1154
    %v1163 = vadd.f32 %v1022, %v1155
    %v1164 = vadd.f32 %v1023, %v1156
    %v1165 = vadd.f32 %v1024, %v1157
    %v1166 = vadd.f32 %v1025, %v1158
    %v1167 = vadd.f32 %v1026, %v1159
    %v1168 = vld [vmem:[%s209 + $0x9] sm:$0x1]
    %v1169 = vlaneseq
    %v1170 = vshrl.u32 %v1169, 7
    %v1171 = vsub.s32 0, %v1170
    %v1172 = vrot.slane %v1168, %v1171
    %v1173 = vmul.f32 %v1097, %v1172
    %v1174 = vmul.f32 %v1098, %v1172
    %v1175 = vmul.f32 %v1099, %v1172
    %v1176 = vmul.f32 %v1100, %v1172
    %v1177 = vmul.f32 %v1101, %v1172
    %v1178 = vmul.f32 %v1102, %v1172
    %v1179 = vmul.f32 %v1103, %v1172
    %v1180 = vmul.f32 %v1104, %v1172
    %v1181 = vadd.f32 %v1040, %v1173
    %v1182 = vadd.f32 %v1041, %v1174
    %v1183 = vadd.f32 %v1042, %v1175
    %v1184 = vadd.f32 %v1043, %v1176
    %v1185 = vadd.f32 %v1044, %v1177
    %v1186 = vadd.f32 %v1045, %v1178
    %v1187 = vadd.f32 %v1046, %v1179
    %v1188 = vadd.f32 %v1047, %v1180
    %v1189 = vld [vmem:[%s1 + $0xc] sm:$0x1]
    %v1190 = vlaneseq
    %v1191 = vshrl.u32 %v1190, 7
    %v1192 = vsub.s32 0, %v1191
    %v1193 = vrot.slane %v1189, %v1192
    %v1194 = vmul.f32 %v1073, %v1193
    %v1195 = vmul.f32 %v1074, %v1193
    %v1196 = vmul.f32 %v1075, %v1193
    %v1197 = vmul.f32 %v1076, %v1193
    %v1198 = vmul.f32 %v1077, %v1193
    %v1199 = vmul.f32 %v1078, %v1193
    %v1200 = vmul.f32 %v1079, %v1193
    %v1201 = vmul.f32 %v1080, %v1193
    %v1202 = vadd.f32 %v1118, %v1194
    %v1203 = vadd.f32 %v1119, %v1195
    %v1204 = vadd.f32 %v1120, %v1196
    %v1205 = vadd.f32 %v1121, %v1197
    %v1206 = vadd.f32 %v1122, %v1198
    %v1207 = vadd.f32 %v1123, %v1199
    %v1208 = vadd.f32 %v1124, %v1200
    %v1209 = vadd.f32 %v1125, %v1201
    %v1210 = vld [vmem:[%s165 + $0xc] sm:$0x1]
    %v1211 = vlaneseq
    %v1212 = vshrl.u32 %v1211, 7
    %v1213 = vsub.s32 0, %v1212
    %v1214 = vrot.slane %v1210, %v1213
    %v1215 = vmul.f32 %v1073, %v1214
    %v1216 = vmul.f32 %v1074, %v1214
    %v1217 = vmul.f32 %v1075, %v1214
    %v1218 = vmul.f32 %v1076, %v1214
    %v1219 = vmul.f32 %v1077, %v1214
    %v1220 = vmul.f32 %v1078, %v1214
    %v1221 = vmul.f32 %v1079, %v1214
    %v1222 = vmul.f32 %v1080, %v1214
    %v1223 = vadd.f32 %v1139, %v1215
    %v1224 = vadd.f32 %v1140, %v1216
    %v1225 = vadd.f32 %v1141, %v1217
    %v1226 = vadd.f32 %v1142, %v1218
    %v1227 = vadd.f32 %v1143, %v1219
    %v1228 = vadd.f32 %v1144, %v1220
    %v1229 = vadd.f32 %v1145, %v1221
    %v1230 = vadd.f32 %v1146, %v1222
    %v1231 = vld [vmem:[%s187 + $0xc] sm:$0x1]
    %v1232 = vlaneseq
    %v1233 = vshrl.u32 %v1232, 7
    %v1234 = vsub.s32 0, %v1233
    %v1235 = vrot.slane %v1231, %v1234
    %v1236 = vmul.f32 %v1073, %v1235
    %v1237 = vmul.f32 %v1074, %v1235
    %v1238 = vmul.f32 %v1075, %v1235
    %v1239 = vmul.f32 %v1076, %v1235
    %v1240 = vmul.f32 %v1077, %v1235
    %v1241 = vmul.f32 %v1078, %v1235
    %v1242 = vmul.f32 %v1079, %v1235
    %v1243 = vmul.f32 %v1080, %v1235
    %v1244 = vadd.f32 %v1160, %v1236
    %v1245 = vadd.f32 %v1161, %v1237
    %v1246 = vadd.f32 %v1162, %v1238
    %v1247 = vadd.f32 %v1163, %v1239
    %v1248 = vadd.f32 %v1164, %v1240
    %v1249 = vadd.f32 %v1165, %v1241
    %v1250 = vadd.f32 %v1166, %v1242
    %v1251 = vadd.f32 %v1167, %v1243
    %v1252 = vld [vmem:[%s209 + $0xc] sm:$0x1]
    %v1253 = vlaneseq
    %v1254 = vshrl.u32 %v1253, 7
    %v1255 = vsub.s32 0, %v1254
    %v1256 = vrot.slane %v1252, %v1255
    %v1257 = vmul.f32 %v1073, %v1256
    %v1258 = vmul.f32 %v1074, %v1256
    %v1259 = vmul.f32 %v1075, %v1256
    %v1260 = vmul.f32 %v1076, %v1256
    %v1261 = vmul.f32 %v1077, %v1256
    %v1262 = vmul.f32 %v1078, %v1256
    %v1263 = vmul.f32 %v1079, %v1256
    %v1264 = vmul.f32 %v1080, %v1256
    %v1265 = vadd.f32 %v1181, %v1257
    %v1266 = vadd.f32 %v1182, %v1258
    %v1267 = vadd.f32 %v1183, %v1259
    %v1268 = vadd.f32 %v1184, %v1260
    %v1269 = vadd.f32 %v1185, %v1261
    %v1270 = vadd.f32 %v1186, %v1262
    %v1271 = vadd.f32 %v1187, %v1263
    %v1272 = vadd.f32 %v1188, %v1264
    %v1273 = vrot.slane %v1073, 1
    %v1274 = vrot.slane %v1074, 1
    %v1275 = vrot.slane %v1075, 1
    %v1276 = vrot.slane %v1076, 1
    %v1277 = vrot.slane %v1077, 1
    %v1278 = vrot.slane %v1078, 1
    %v1279 = vrot.slane %v1079, 1
    %v1280 = vrot.slane %v1080, 1
    %v1281 = vsel %vm323, %v1279, %v1280
    %v1282 = vsel %vm323, %v1278, %v1279
    %v1283 = vsel %vm323, %v1277, %v1278
    %v1284 = vsel %vm323, %v1276, %v1277
    %v1285 = vsel %vm323, %v1275, %v1276
    %v1286 = vsel %vm323, %v1274, %v1275
    %v1287 = vsel %vm323, %v1273, %v1274
    %v1288 = vsel %vm323, %v1280, %v1273
    %v1289 = vsel %vm48, %v1287, 0.0
    %v1290 = vsel %vm49, %v1286, 0.0
    %v1291 = vsel %vm50, %v1285, 0.0
    %v1292 = vsel %vm51, %v1284, 0.0
    %v1293 = vsel %vm52, %v1283, 0.0
    %v1294 = vsel %vm53, %v1282, 0.0
    %v1295 = vsel %vm54, %v1281, 0.0
    %v1296 = vsel %vm55, %v1288, 0.0
    %v1297 = vld [vmem:[%s1 + $0xf] sm:$0x1]
    %v1298 = vlaneseq
    %v1299 = vshrl.u32 %v1298, 7
    %v1300 = vsub.s32 0, %v1299
    %v1301 = vrot.slane %v1297, %v1300
    %v1302 = vmul.f32 %v1289, %v1301
    %v1303 = vmul.f32 %v1290, %v1301
    %v1304 = vmul.f32 %v1291, %v1301
    %v1305 = vmul.f32 %v1292, %v1301
    %v1306 = vmul.f32 %v1293, %v1301
    %v1307 = vmul.f32 %v1294, %v1301
    %v1308 = vmul.f32 %v1295, %v1301
    %v1309 = vmul.f32 %v1296, %v1301
    %v1310 = vadd.f32 %v1202, %v1302
    %v1311 = vadd.f32 %v1203, %v1303
    %v1312 = vadd.f32 %v1204, %v1304
    %v1313 = vadd.f32 %v1205, %v1305
    %v1314 = vadd.f32 %v1206, %v1306
    %v1315 = vadd.f32 %v1207, %v1307
    %v1316 = vadd.f32 %v1208, %v1308
    %v1317 = vadd.f32 %v1209, %v1309
    %v1318 = vld [vmem:[%s165 + $0xf] sm:$0x1]
    %v1319 = vlaneseq
    %v1320 = vshrl.u32 %v1319, 7
    %v1321 = vsub.s32 0, %v1320
    %v1322 = vrot.slane %v1318, %v1321
    %v1323 = vmul.f32 %v1289, %v1322
    %v1324 = vmul.f32 %v1290, %v1322
    %v1325 = vmul.f32 %v1291, %v1322
    %v1326 = vmul.f32 %v1292, %v1322
    %v1327 = vmul.f32 %v1293, %v1322
    %v1328 = vmul.f32 %v1294, %v1322
    %v1329 = vmul.f32 %v1295, %v1322
    %v1330 = vmul.f32 %v1296, %v1322
    %v1331 = vadd.f32 %v1223, %v1323
    %v1332 = vadd.f32 %v1224, %v1324
    %v1333 = vadd.f32 %v1225, %v1325
    %v1334 = vadd.f32 %v1226, %v1326
    %v1335 = vadd.f32 %v1227, %v1327
    %v1336 = vadd.f32 %v1228, %v1328
    %v1337 = vadd.f32 %v1229, %v1329
    %v1338 = vadd.f32 %v1230, %v1330
    %v1339 = vld [vmem:[%s187 + $0xf] sm:$0x1]
    %v1340 = vlaneseq
    %v1341 = vshrl.u32 %v1340, 7
    %v1342 = vsub.s32 0, %v1341
    %v1343 = vrot.slane %v1339, %v1342
    %v1344 = vmul.f32 %v1289, %v1343
    %v1345 = vmul.f32 %v1290, %v1343
    %v1346 = vmul.f32 %v1291, %v1343
    %v1347 = vmul.f32 %v1292, %v1343
    %v1348 = vmul.f32 %v1293, %v1343
    %v1349 = vmul.f32 %v1294, %v1343
    %v1350 = vmul.f32 %v1295, %v1343
    %v1351 = vmul.f32 %v1296, %v1343
    %v1352 = vadd.f32 %v1244, %v1344
    %v1353 = vadd.f32 %v1245, %v1345
    %v1354 = vadd.f32 %v1246, %v1346
    %v1355 = vadd.f32 %v1247, %v1347
    %v1356 = vadd.f32 %v1248, %v1348
    %v1357 = vadd.f32 %v1249, %v1349
    %v1358 = vadd.f32 %v1250, %v1350
    %v1359 = vadd.f32 %v1251, %v1351
    %v1360 = vld [vmem:[%s209 + $0xf] sm:$0x1]
    %v1361 = vlaneseq
    %v1362 = vshrl.u32 %v1361, 7
    %v1363 = vsub.s32 0, %v1362
    %v1364 = vrot.slane %v1360, %v1363
    %v1365 = vmul.f32 %v1289, %v1364
    %v1366 = vmul.f32 %v1290, %v1364
    %v1367 = vmul.f32 %v1291, %v1364
    %v1368 = vmul.f32 %v1292, %v1364
    %v1369 = vmul.f32 %v1293, %v1364
    %v1370 = vmul.f32 %v1294, %v1364
    %v1371 = vmul.f32 %v1295, %v1364
    %v1372 = vmul.f32 %v1296, %v1364
    %v1373 = vadd.f32 %v1265, %v1365
    %v1374 = vadd.f32 %v1266, %v1366
    %v1375 = vadd.f32 %v1267, %v1367
    %v1376 = vadd.f32 %v1268, %v1368
    %v1377 = vadd.f32 %v1269, %v1369
    %v1378 = vadd.f32 %v1270, %v1370
    %v1379 = vadd.f32 %v1271, %v1371
    %v1380 = vadd.f32 %v1272, %v1372
    %v1381 = vrot.slane %v1049, 7
    %v1382 = vrot.slane %v1050, 7
    %v1383 = vrot.slane %v1051, 7
    %v1384 = vrot.slane %v1052, 7
    %v1385 = vrot.slane %v1053, 7
    %v1386 = vrot.slane %v1054, 7
    %v1387 = vrot.slane %v1055, 7
    %v1388 = vrot.slane %v1056, 7
    %v1389 = vsel %vm127, %v1387, %v1388
    %v1390 = vsel %vm127, %v1386, %v1387
    %v1391 = vsel %vm127, %v1385, %v1386
    %v1392 = vsel %vm127, %v1384, %v1385
    %v1393 = vsel %vm127, %v1383, %v1384
    %v1394 = vsel %vm127, %v1382, %v1383
    %v1395 = vsel %vm127, %v1381, %v1382
    %v1396 = vsel %vm127, %v1388, %v1381
    %v1397 = vsel %vm40, %v1396, 0.0
    %v1398 = vsel %vm41, %v1395, 0.0
    %v1399 = vsel %vm42, %v1394, 0.0
    %v1400 = vsel %vm43, %v1393, 0.0
    %v1401 = vsel %vm44, %v1392, 0.0
    %v1402 = vsel %vm45, %v1391, 0.0
    %v1403 = vsel %vm46, %v1390, 0.0
    %v1404 = vsel %vm47, %v1389, 0.0
    %v1405 = vld [vmem:[%s1 + $0xa] sm:$0x1]
    %v1406 = vlaneseq
    %v1407 = vshrl.u32 %v1406, 7
    %v1408 = vsub.s32 0, %v1407
    %v1409 = vrot.slane %v1405, %v1408
    %v1410 = vmul.f32 %v1397, %v1409
    %v1411 = vmul.f32 %v1398, %v1409
    %v1412 = vmul.f32 %v1399, %v1409
    %v1413 = vmul.f32 %v1400, %v1409
    %v1414 = vmul.f32 %v1401, %v1409
    %v1415 = vmul.f32 %v1402, %v1409
    %v1416 = vmul.f32 %v1403, %v1409
    %v1417 = vmul.f32 %v1404, %v1409
    %v1418 = vadd.f32 %v1310, %v1410
    %v1419 = vadd.f32 %v1311, %v1411
    %v1420 = vadd.f32 %v1312, %v1412
    %v1421 = vadd.f32 %v1313, %v1413
    %v1422 = vadd.f32 %v1314, %v1414
    %v1423 = vadd.f32 %v1315, %v1415
    %v1424 = vadd.f32 %v1316, %v1416
    %v1425 = vadd.f32 %v1317, %v1417
    %v1426 = vld [vmem:[%s165 + $0xa] sm:$0x1]
    %v1427 = vlaneseq
    %v1428 = vshrl.u32 %v1427, 7
    %v1429 = vsub.s32 0, %v1428
    %v1430 = vrot.slane %v1426, %v1429
    %v1431 = vmul.f32 %v1397, %v1430
    %v1432 = vmul.f32 %v1398, %v1430
    %v1433 = vmul.f32 %v1399, %v1430
    %v1434 = vmul.f32 %v1400, %v1430
    %v1435 = vmul.f32 %v1401, %v1430
    %v1436 = vmul.f32 %v1402, %v1430
    %v1437 = vmul.f32 %v1403, %v1430
    %v1438 = vmul.f32 %v1404, %v1430
    %v1439 = vadd.f32 %v1331, %v1431
    %v1440 = vadd.f32 %v1332, %v1432
    %v1441 = vadd.f32 %v1333, %v1433
    %v1442 = vadd.f32 %v1334, %v1434
    %v1443 = vadd.f32 %v1335, %v1435
    %v1444 = vadd.f32 %v1336, %v1436
    %v1445 = vadd.f32 %v1337, %v1437
    %v1446 = vadd.f32 %v1338, %v1438
    %v1447 = vld [vmem:[%s187 + $0xa] sm:$0x1]
    %v1448 = vlaneseq
    %v1449 = vshrl.u32 %v1448, 7
    %v1450 = vsub.s32 0, %v1449
    %v1451 = vrot.slane %v1447, %v1450
    %v1452 = vmul.f32 %v1397, %v1451
    %v1453 = vmul.f32 %v1398, %v1451
    %v1454 = vmul.f32 %v1399, %v1451
    %v1455 = vmul.f32 %v1400, %v1451
    %v1456 = vmul.f32 %v1401, %v1451
    %v1457 = vmul.f32 %v1402, %v1451
    %v1458 = vmul.f32 %v1403, %v1451
    %v1459 = vmul.f32 %v1404, %v1451
    %v1460 = vadd.f32 %v1352, %v1452
    %v1461 = vadd.f32 %v1353, %v1453
    %v1462 = vadd.f32 %v1354, %v1454
    %v1463 = vadd.f32 %v1355, %v1455
    %v1464 = vadd.f32 %v1356, %v1456
    %v1465 = vadd.f32 %v1357, %v1457
    %v1466 = vadd.f32 %v1358, %v1458
    %v1467 = vadd.f32 %v1359, %v1459
    %v1468 = vld [vmem:[%s209 + $0xa] sm:$0x1]
    %v1469 = vlaneseq
    %v1470 = vshrl.u32 %v1469, 7
    %v1471 = vsub.s32 0, %v1470
    %v1472 = vrot.slane %v1468, %v1471
    %v1473 = vmul.f32 %v1397, %v1472
    %v1474 = vmul.f32 %v1398, %v1472
    %v1475 = vmul.f32 %v1399, %v1472
    %v1476 = vmul.f32 %v1400, %v1472
    %v1477 = vmul.f32 %v1401, %v1472
    %v1478 = vmul.f32 %v1402, %v1472
    %v1479 = vmul.f32 %v1403, %v1472
    %v1480 = vmul.f32 %v1404, %v1472
    %v1481 = vadd.f32 %v1373, %v1473
    %v1482 = vadd.f32 %v1374, %v1474
    %v1483 = vadd.f32 %v1375, %v1475
    %v1484 = vadd.f32 %v1376, %v1476
    %v1485 = vadd.f32 %v1377, %v1477
    %v1486 = vadd.f32 %v1378, %v1478
    %v1487 = vadd.f32 %v1379, %v1479
    %v1488 = vadd.f32 %v1380, %v1480
    %v1489 = vld [vmem:[%s1 + $0xd] sm:$0x1]
    %v1490 = vlaneseq
    %v1491 = vshrl.u32 %v1490, 7
    %v1492 = vsub.s32 0, %v1491
    %v1493 = vrot.slane %v1489, %v1492
    %v1494 = vmul.f32 %v1049, %v1493
    %v1495 = vmul.f32 %v1050, %v1493
    %v1496 = vmul.f32 %v1051, %v1493
    %v1497 = vmul.f32 %v1052, %v1493
    %v1498 = vmul.f32 %v1053, %v1493
    %v1499 = vmul.f32 %v1054, %v1493
    %v1500 = vmul.f32 %v1055, %v1493
    %v1501 = vmul.f32 %v1056, %v1493
    %v1502 = vadd.f32 %v1418, %v1494
    %v1503 = vadd.f32 %v1419, %v1495
    %v1504 = vadd.f32 %v1420, %v1496
    %v1505 = vadd.f32 %v1421, %v1497
    %v1506 = vadd.f32 %v1422, %v1498
    %v1507 = vadd.f32 %v1423, %v1499
    %v1508 = vadd.f32 %v1424, %v1500
    %v1509 = vadd.f32 %v1425, %v1501
    %v1510 = vld [vmem:[%s165 + $0xd] sm:$0x1]
    %v1511 = vlaneseq
    %v1512 = vshrl.u32 %v1511, 7
    %v1513 = vsub.s32 0, %v1512
    %v1514 = vrot.slane %v1510, %v1513
    %v1515 = vmul.f32 %v1049, %v1514
    %v1516 = vmul.f32 %v1050, %v1514
    %v1517 = vmul.f32 %v1051, %v1514
    %v1518 = vmul.f32 %v1052, %v1514
    %v1519 = vmul.f32 %v1053, %v1514
    %v1520 = vmul.f32 %v1054, %v1514
    %v1521 = vmul.f32 %v1055, %v1514
    %v1522 = vmul.f32 %v1056, %v1514
    %v1523 = vadd.f32 %v1439, %v1515
    %v1524 = vadd.f32 %v1440, %v1516
    %v1525 = vadd.f32 %v1441, %v1517
    %v1526 = vadd.f32 %v1442, %v1518
    %v1527 = vadd.f32 %v1443, %v1519
    %v1528 = vadd.f32 %v1444, %v1520
    %v1529 = vadd.f32 %v1445, %v1521
    %v1530 = vadd.f32 %v1446, %v1522
    %v1531 = vld [vmem:[%s187 + $0xd] sm:$0x1]
    %v1532 = vlaneseq
    %v1533 = vshrl.u32 %v1532, 7
    %v1534 = vsub.s32 0, %v1533
    %v1535 = vrot.slane %v1531, %v1534
    %v1536 = vmul.f32 %v1049, %v1535
    %v1537 = vmul.f32 %v1050, %v1535
    %v1538 = vmul.f32 %v1051, %v1535
    %v1539 = vmul.f32 %v1052, %v1535
    %v1540 = vmul.f32 %v1053, %v1535
    %v1541 = vmul.f32 %v1054, %v1535
    %v1542 = vmul.f32 %v1055, %v1535
    %v1543 = vmul.f32 %v1056, %v1535
    %v1544 = vadd.f32 %v1460, %v1536
    %v1545 = vadd.f32 %v1461, %v1537
    %v1546 = vadd.f32 %v1462, %v1538
    %v1547 = vadd.f32 %v1463, %v1539
    %v1548 = vadd.f32 %v1464, %v1540
    %v1549 = vadd.f32 %v1465, %v1541
    %v1550 = vadd.f32 %v1466, %v1542
    %v1551 = vadd.f32 %v1467, %v1543
    %v1552 = vld [vmem:[%s209 + $0xd] sm:$0x1]
    %v1553 = vlaneseq
    %v1554 = vshrl.u32 %v1553, 7
    %v1555 = vsub.s32 0, %v1554
    %v1556 = vrot.slane %v1552, %v1555
    %v1557 = vmul.f32 %v1049, %v1556
    %v1558 = vmul.f32 %v1050, %v1556
    %v1559 = vmul.f32 %v1051, %v1556
    %v1560 = vmul.f32 %v1052, %v1556
    %v1561 = vmul.f32 %v1053, %v1556
    %v1562 = vmul.f32 %v1054, %v1556
    %v1563 = vmul.f32 %v1055, %v1556
    %v1564 = vmul.f32 %v1056, %v1556
    %v1565 = vadd.f32 %v1481, %v1557
    %v1566 = vadd.f32 %v1482, %v1558
    %v1567 = vadd.f32 %v1483, %v1559
    %v1568 = vadd.f32 %v1484, %v1560
    %v1569 = vadd.f32 %v1485, %v1561
    %v1570 = vadd.f32 %v1486, %v1562
    %v1571 = vadd.f32 %v1487, %v1563
    %v1572 = vadd.f32 %v1488, %v1564
    %v1573 = vrot.slane %v1049, 1
    %v1574 = vrot.slane %v1050, 1
    %v1575 = vrot.slane %v1051, 1
    %v1576 = vrot.slane %v1052, 1
    %v1577 = vrot.slane %v1053, 1
    %v1578 = vrot.slane %v1054, 1
    %v1579 = vrot.slane %v1055, 1
    %v1580 = vrot.slane %v1056, 1
    %v1581 = vsel %vm323, %v1579, %v1580
    %v1582 = vsel %vm323, %v1578, %v1579
    %v1583 = vsel %vm323, %v1577, %v1578
    %v1584 = vsel %vm323, %v1576, %v1577
    %v1585 = vsel %vm323, %v1575, %v1576
    %v1586 = vsel %vm323, %v1574, %v1575
    %v1587 = vsel %vm323, %v1573, %v1574
    %v1588 = vsel %vm323, %v1580, %v1573
    %v1589 = vsel %vm48, %v1587, 0.0
    %v1590 = vsel %vm49, %v1586, 0.0
    %v1591 = vsel %vm50, %v1585, 0.0
    %v1592 = vsel %vm51, %v1584, 0.0
    %v1593 = vsel %vm52, %v1583, 0.0
    %v1594 = vsel %vm53, %v1582, 0.0
    %v1595 = vsel %vm54, %v1581, 0.0
    %v1596 = vsel %vm55, %v1588, 0.0
    %v1597 = vld [vmem:[%s1 + $0x10] sm:$0x1]
    %v1598 = vlaneseq
    %v1599 = vshrl.u32 %v1598, 7
    %v1600 = vsub.s32 0, %v1599
    %v1601 = vrot.slane %v1597, %v1600
    %v1602 = vmul.f32 %v1589, %v1601
    %v1603 = vmul.f32 %v1590, %v1601
    %v1604 = vmul.f32 %v1591, %v1601
    %v1605 = vmul.f32 %v1592, %v1601
    %v1606 = vmul.f32 %v1593, %v1601
    %v1607 = vmul.f32 %v1594, %v1601
    %v1608 = vmul.f32 %v1595, %v1601
    %v1609 = vmul.f32 %v1596, %v1601
    %v1610 = vadd.f32 %v1502, %v1602
    %v1611 = vadd.f32 %v1503, %v1603
    %v1612 = vadd.f32 %v1504, %v1604
    %v1613 = vadd.f32 %v1505, %v1605
    %v1614 = vadd.f32 %v1506, %v1606
    %v1615 = vadd.f32 %v1507, %v1607
    %v1616 = vadd.f32 %v1508, %v1608
    %v1617 = vadd.f32 %v1509, %v1609
    %v1618 = vld [vmem:[%s165 + $0x10] sm:$0x1]
    %v1619 = vlaneseq
    %v1620 = vshrl.u32 %v1619, 7
    %v1621 = vsub.s32 0, %v1620
    %v1622 = vrot.slane %v1618, %v1621
    %v1623 = vmul.f32 %v1589, %v1622
    %v1624 = vmul.f32 %v1590, %v1622
    %v1625 = vmul.f32 %v1591, %v1622
    %v1626 = vmul.f32 %v1592, %v1622
    %v1627 = vmul.f32 %v1593, %v1622
    %v1628 = vmul.f32 %v1594, %v1622
    %v1629 = vmul.f32 %v1595, %v1622
    %v1630 = vmul.f32 %v1596, %v1622
    %v1631 = vadd.f32 %v1523, %v1623
    %v1632 = vadd.f32 %v1524, %v1624
    %v1633 = vadd.f32 %v1525, %v1625
    %v1634 = vadd.f32 %v1526, %v1626
    %v1635 = vadd.f32 %v1527, %v1627
    %v1636 = vadd.f32 %v1528, %v1628
    %v1637 = vadd.f32 %v1529, %v1629
    %v1638 = vadd.f32 %v1530, %v1630
    %v1639 = vld [vmem:[%s187 + $0x10] sm:$0x1]
    %v1640 = vlaneseq
    %v1641 = vshrl.u32 %v1640, 7
    %v1642 = vsub.s32 0, %v1641
    %v1643 = vrot.slane %v1639, %v1642
    %v1644 = vmul.f32 %v1589, %v1643
    %v1645 = vmul.f32 %v1590, %v1643
    %v1646 = vmul.f32 %v1591, %v1643
    %v1647 = vmul.f32 %v1592, %v1643
    %v1648 = vmul.f32 %v1593, %v1643
    %v1649 = vmul.f32 %v1594, %v1643
    %v1650 = vmul.f32 %v1595, %v1643
    %v1651 = vmul.f32 %v1596, %v1643
    %v1652 = vadd.f32 %v1544, %v1644
    %v1653 = vadd.f32 %v1545, %v1645
    %v1654 = vadd.f32 %v1546, %v1646
    %v1655 = vadd.f32 %v1547, %v1647
    %v1656 = vadd.f32 %v1548, %v1648
    %v1657 = vadd.f32 %v1549, %v1649
    %v1658 = vadd.f32 %v1550, %v1650
    %v1659 = vadd.f32 %v1551, %v1651
    %v1660 = vld [vmem:[%s209 + $0x10] sm:$0x1]
    %v1661 = vlaneseq
    %v1662 = vshrl.u32 %v1661, 7
    %v1663 = vsub.s32 0, %v1662
    %v1664 = vrot.slane %v1660, %v1663
    %v1665 = vmul.f32 %v1589, %v1664
    %v1666 = vmul.f32 %v1590, %v1664
    %v1667 = vmul.f32 %v1591, %v1664
    %v1668 = vmul.f32 %v1592, %v1664
    %v1669 = vmul.f32 %v1593, %v1664
    %v1670 = vmul.f32 %v1594, %v1664
    %v1671 = vmul.f32 %v1595, %v1664
    %v1672 = vmul.f32 %v1596, %v1664
    %v1673 = vadd.f32 %v1565, %v1665
    %v1674 = vadd.f32 %v1566, %v1666
    %v1675 = vadd.f32 %v1567, %v1667
    %v1676 = vadd.f32 %v1568, %v1668
    %v1677 = vadd.f32 %v1569, %v1669
    %v1678 = vadd.f32 %v1570, %v1670
    %v1679 = vadd.f32 %v1571, %v1671
    %v1680 = vadd.f32 %v1572, %v1672
    %1681 = vrot.lane.b32.xlu0 %v1049, 127
    %v1682 = vpop.permute.xlu0 %1681
    %1683 = vrot.lane.b32.xlu0 %v1050, 127
    %v1684 = vpop.permute.xlu0 %1683
    %1685 = vrot.lane.b32.xlu0 %v1051, 127
    %v1686 = vpop.permute.xlu0 %1685
    %1687 = vrot.lane.b32.xlu0 %v1052, 127
    %v1688 = vpop.permute.xlu0 %1687
    %1689 = vrot.lane.b32.xlu0 %v1053, 127
    %v1690 = vpop.permute.xlu0 %1689
    %1691 = vrot.lane.b32.xlu0 %v1054, 127
    %v1692 = vpop.permute.xlu0 %1691
    %1693 = vrot.lane.b32.xlu0 %v1055, 127
    %v1694 = vpop.permute.xlu0 %1693
    %1695 = vrot.lane.b32.xlu0 %v1056, 127
    %v1696 = vpop.permute.xlu0 %1695
    %v1697 = vsel %vm39, %v1682, 0.0
    %v1698 = vsel %vm39, %v1684, 0.0
    %v1699 = vsel %vm39, %v1686, 0.0
    %v1700 = vsel %vm39, %v1688, 0.0
    %v1701 = vsel %vm39, %v1690, 0.0
    %v1702 = vsel %vm39, %v1692, 0.0
    %v1703 = vsel %vm39, %v1694, 0.0
    %v1704 = vsel %vm39, %v1696, 0.0
    %v1705 = vrot.slane %v1697, 7
    %v1706 = vrot.slane %v1698, 7
    %v1707 = vrot.slane %v1699, 7
    %v1708 = vrot.slane %v1700, 7
    %v1709 = vrot.slane %v1701, 7
    %v1710 = vrot.slane %v1702, 7
    %v1711 = vrot.slane %v1703, 7
    %v1712 = vrot.slane %v1704, 7
    %v1713 = vsel %vm127, %v1711, %v1712
    %v1714 = vsel %vm127, %v1710, %v1711
    %v1715 = vsel %vm127, %v1709, %v1710
    %v1716 = vsel %vm127, %v1708, %v1709
    %v1717 = vsel %vm127, %v1707, %v1708
    %v1718 = vsel %vm127, %v1706, %v1707
    %v1719 = vsel %vm127, %v1705, %v1706
    %v1720 = vsel %vm127, %v1712, %v1705
    %v1721 = vsel %vm40, %v1720, 0.0
    %v1722 = vsel %vm41, %v1719, 0.0
    %v1723 = vsel %vm42, %v1718, 0.0
    %v1724 = vsel %vm43, %v1717, 0.0
    %v1725 = vsel %vm44, %v1716, 0.0
    %v1726 = vsel %vm45, %v1715, 0.0
    %v1727 = vsel %vm46, %v1714, 0.0
    %v1728 = vsel %vm47, %v1713, 0.0
    %v1729 = vld [vmem:[%s1 + $0xb] sm:$0x1]
    %v1730 = vlaneseq
    %v1731 = vshrl.u32 %v1730, 7
    %v1732 = vsub.s32 0, %v1731
    %v1733 = vrot.slane %v1729, %v1732
    %v1734 = vmul.f32 %v1721, %v1733
    %v1735 = vmul.f32 %v1722, %v1733
    %v1736 = vmul.f32 %v1723, %v1733
    %v1737 = vmul.f32 %v1724, %v1733
    %v1738 = vmul.f32 %v1725, %v1733
    %v1739 = vmul.f32 %v1726, %v1733
    %v1740 = vmul.f32 %v1727, %v1733
    %v1741 = vmul.f32 %v1728, %v1733
    %v1742 = vadd.f32 %v1610, %v1734
    %v1743 = vadd.f32 %v1611, %v1735
    %v1744 = vadd.f32 %v1612, %v1736
    %v1745 = vadd.f32 %v1613, %v1737
    %v1746 = vadd.f32 %v1614, %v1738
    %v1747 = vadd.f32 %v1615, %v1739
    %v1748 = vadd.f32 %v1616, %v1740
    %v1749 = vadd.f32 %v1617, %v1741
    %v1750 = vld [vmem:[%s165 + $0xb] sm:$0x1]
    %v1751 = vlaneseq
    %v1752 = vshrl.u32 %v1751, 7
    %v1753 = vsub.s32 0, %v1752
    %v1754 = vrot.slane %v1750, %v1753
    %v1755 = vmul.f32 %v1721, %v1754
    %v1756 = vmul.f32 %v1722, %v1754
    %v1757 = vmul.f32 %v1723, %v1754
    %v1758 = vmul.f32 %v1724, %v1754
    %v1759 = vmul.f32 %v1725, %v1754
    %v1760 = vmul.f32 %v1726, %v1754
    %v1761 = vmul.f32 %v1727, %v1754
    %v1762 = vmul.f32 %v1728, %v1754
    %v1763 = vadd.f32 %v1631, %v1755
    %v1764 = vadd.f32 %v1632, %v1756
    %v1765 = vadd.f32 %v1633, %v1757
    %v1766 = vadd.f32 %v1634, %v1758
    %v1767 = vadd.f32 %v1635, %v1759
    %v1768 = vadd.f32 %v1636, %v1760
    %v1769 = vadd.f32 %v1637, %v1761
    %v1770 = vadd.f32 %v1638, %v1762
    %v1771 = vld [vmem:[%s187 + $0xb] sm:$0x1]
    %v1772 = vlaneseq
    %v1773 = vshrl.u32 %v1772, 7
    %v1774 = vsub.s32 0, %v1773
    %v1775 = vrot.slane %v1771, %v1774
    %v1776 = vmul.f32 %v1721, %v1775
    %v1777 = vmul.f32 %v1722, %v1775
    %v1778 = vmul.f32 %v1723, %v1775
    %v1779 = vmul.f32 %v1724, %v1775
    %v1780 = vmul.f32 %v1725, %v1775
    %v1781 = vmul.f32 %v1726, %v1775
    %v1782 = vmul.f32 %v1727, %v1775
    %v1783 = vmul.f32 %v1728, %v1775
    %v1784 = vadd.f32 %v1652, %v1776
    %v1785 = vadd.f32 %v1653, %v1777
    %v1786 = vadd.f32 %v1654, %v1778
    %v1787 = vadd.f32 %v1655, %v1779
    %v1788 = vadd.f32 %v1656, %v1780
    %v1789 = vadd.f32 %v1657, %v1781
    %v1790 = vadd.f32 %v1658, %v1782
    %v1791 = vadd.f32 %v1659, %v1783
    %v1792 = vld [vmem:[%s209 + $0xb] sm:$0x1]
    %v1793 = vlaneseq
    %v1794 = vshrl.u32 %v1793, 7
    %v1795 = vsub.s32 0, %v1794
    %v1796 = vrot.slane %v1792, %v1795
    %v1797 = vmul.f32 %v1721, %v1796
    %v1798 = vmul.f32 %v1722, %v1796
    %v1799 = vmul.f32 %v1723, %v1796
    %v1800 = vmul.f32 %v1724, %v1796
    %v1801 = vmul.f32 %v1725, %v1796
    %v1802 = vmul.f32 %v1726, %v1796
    %v1803 = vmul.f32 %v1727, %v1796
    %v1804 = vmul.f32 %v1728, %v1796
    %v1805 = vadd.f32 %v1673, %v1797
    %v1806 = vadd.f32 %v1674, %v1798
    %v1807 = vadd.f32 %v1675, %v1799
    %v1808 = vadd.f32 %v1676, %v1800
    %v1809 = vadd.f32 %v1677, %v1801
    %v1810 = vadd.f32 %v1678, %v1802
    %v1811 = vadd.f32 %v1679, %v1803
    %v1812 = vadd.f32 %v1680, %v1804
    %v1813 = vld [vmem:[%s1 + $0xe] sm:$0x1]
    %v1814 = vlaneseq
    %v1815 = vshrl.u32 %v1814, 7
    %v1816 = vsub.s32 0, %v1815
    %v1817 = vrot.slane %v1813, %v1816
    %v1818 = vmul.f32 %v1697, %v1817
    %v1819 = vmul.f32 %v1698, %v1817
    %v1820 = vmul.f32 %v1699, %v1817
    %v1821 = vmul.f32 %v1700, %v1817
    %v1822 = vmul.f32 %v1701, %v1817
    %v1823 = vmul.f32 %v1702, %v1817
    %v1824 = vmul.f32 %v1703, %v1817
    %v1825 = vmul.f32 %v1704, %v1817
    %v1826 = vadd.f32 %v1742, %v1818
    %v1827 = vadd.f32 %v1743, %v1819
    %v1828 = vadd.f32 %v1744, %v1820
    %v1829 = vadd.f32 %v1745, %v1821
    %v1830 = vadd.f32 %v1746, %v1822
    %v1831 = vadd.f32 %v1747, %v1823
    %v1832 = vadd.f32 %v1748, %v1824
    %v1833 = vadd.f32 %v1749, %v1825
    %v1834 = vld [vmem:[%s165 + $0xe] sm:$0x1]
    %v1835 = vlaneseq
    %v1836 = vshrl.u32 %v1835, 7
    %v1837 = vsub.s32 0, %v1836
    %v1838 = vrot.slane %v1834, %v1837
    %v1839 = vmul.f32 %v1697, %v1838
    %v1840 = vmul.f32 %v1698, %v1838
    %v1841 = vmul.f32 %v1699, %v1838
    %v1842 = vmul.f32 %v1700, %v1838
    %v1843 = vmul.f32 %v1701, %v1838
    %v1844 = vmul.f32 %v1702, %v1838
    %v1845 = vmul.f32 %v1703, %v1838
    %v1846 = vmul.f32 %v1704, %v1838
    %v1847 = vadd.f32 %v1763, %v1839
    %v1848 = vadd.f32 %v1764, %v1840
    %v1849 = vadd.f32 %v1765, %v1841
    %v1850 = vadd.f32 %v1766, %v1842
    %v1851 = vadd.f32 %v1767, %v1843
    %v1852 = vadd.f32 %v1768, %v1844
    %v1853 = vadd.f32 %v1769, %v1845
    %v1854 = vadd.f32 %v1770, %v1846
    %v1855 = vld [vmem:[%s187 + $0xe] sm:$0x1]
    %v1856 = vlaneseq
    %v1857 = vshrl.u32 %v1856, 7
    %v1858 = vsub.s32 0, %v1857
    %v1859 = vrot.slane %v1855, %v1858
    %v1860 = vmul.f32 %v1697, %v1859
    %v1861 = vmul.f32 %v1698, %v1859
    %v1862 = vmul.f32 %v1699, %v1859
    %v1863 = vmul.f32 %v1700, %v1859
    %v1864 = vmul.f32 %v1701, %v1859
    %v1865 = vmul.f32 %v1702, %v1859
    %v1866 = vmul.f32 %v1703, %v1859
    %v1867 = vmul.f32 %v1704, %v1859
    %v1868 = vadd.f32 %v1784, %v1860
    %v1869 = vadd.f32 %v1785, %v1861
    %v1870 = vadd.f32 %v1786, %v1862
    %v1871 = vadd.f32 %v1787, %v1863
    %v1872 = vadd.f32 %v1788, %v1864
    %v1873 = vadd.f32 %v1789, %v1865
    %v1874 = vadd.f32 %v1790, %v1866
    %v1875 = vadd.f32 %v1791, %v1867
    %v1876 = vld [vmem:[%s209 + $0xe] sm:$0x1]
    %v1877 = vlaneseq
    %v1878 = vshrl.u32 %v1877, 7
    %v1879 = vsub.s32 0, %v1878
    %v1880 = vrot.slane %v1876, %v1879
    %v1881 = vmul.f32 %v1697, %v1880
    %v1882 = vmul.f32 %v1698, %v1880
    %v1883 = vmul.f32 %v1699, %v1880
    %v1884 = vmul.f32 %v1700, %v1880
    %v1885 = vmul.f32 %v1701, %v1880
    %v1886 = vmul.f32 %v1702, %v1880
    %v1887 = vmul.f32 %v1703, %v1880
    %v1888 = vmul.f32 %v1704, %v1880
    %v1889 = vadd.f32 %v1805, %v1881
    %v1890 = vadd.f32 %v1806, %v1882
    %v1891 = vadd.f32 %v1807, %v1883
    %v1892 = vadd.f32 %v1808, %v1884
    %v1893 = vadd.f32 %v1809, %v1885
    %v1894 = vadd.f32 %v1810, %v1886
    %v1895 = vadd.f32 %v1811, %v1887
    %v1896 = vadd.f32 %v1812, %v1888
    %v1897 = vrot.slane %v1697, 1
    %v1898 = vrot.slane %v1698, 1
    %v1899 = vrot.slane %v1699, 1
    %v1900 = vrot.slane %v1700, 1
    %v1901 = vrot.slane %v1701, 1
    %v1902 = vrot.slane %v1702, 1
    %v1903 = vrot.slane %v1703, 1
    %v1904 = vrot.slane %v1704, 1
    %v1905 = vsel %vm323, %v1903, %v1904
    %v1906 = vsel %vm323, %v1902, %v1903
    %v1907 = vsel %vm323, %v1901, %v1902
    %v1908 = vsel %vm323, %v1900, %v1901
    %v1909 = vsel %vm323, %v1899, %v1900
    %v1910 = vsel %vm323, %v1898, %v1899
    %v1911 = vsel %vm323, %v1897, %v1898
    %v1912 = vsel %vm323, %v1904, %v1897
    %v1913 = vsel %vm48, %v1911, 0.0
    %v1914 = vsel %vm49, %v1910, 0.0
    %v1915 = vsel %vm50, %v1909, 0.0
    %v1916 = vsel %vm51, %v1908, 0.0
    %v1917 = vsel %vm52, %v1907, 0.0
    %v1918 = vsel %vm53, %v1906, 0.0
    %v1919 = vsel %vm54, %v1905, 0.0
    %v1920 = vsel %vm55, %v1912, 0.0
    %v1921 = vld [vmem:[%s1 + $0x11] sm:$0x1]
    %v1922 = vlaneseq
    %v1923 = vshrl.u32 %v1922, 7
    %v1924 = vsub.s32 0, %v1923
    %v1925 = vrot.slane %v1921, %v1924
    %v1926 = vmul.f32 %v1913, %v1925
    %v1927 = vmul.f32 %v1914, %v1925
    %v1928 = vmul.f32 %v1915, %v1925
    %v1929 = vmul.f32 %v1916, %v1925
    %v1930 = vmul.f32 %v1917, %v1925
    %v1931 = vmul.f32 %v1918, %v1925
    %v1932 = vmul.f32 %v1919, %v1925
    %v1933 = vmul.f32 %v1920, %v1925
    %v1934 = vadd.f32 %v1826, %v1926
    %v1935 = vadd.f32 %v1827, %v1927
    %v1936 = vadd.f32 %v1828, %v1928
    %v1937 = vadd.f32 %v1829, %v1929
    %v1938 = vadd.f32 %v1830, %v1930
    %v1939 = vadd.f32 %v1831, %v1931
    %v1940 = vadd.f32 %v1832, %v1932
    %v1941 = vadd.f32 %v1833, %v1933
    %v1942 = vld [vmem:[%s165 + $0x11] sm:$0x1]
    %v1943 = vlaneseq
    %v1944 = vshrl.u32 %v1943, 7
    %v1945 = vsub.s32 0, %v1944
    %v1946 = vrot.slane %v1942, %v1945
    %v1947 = vmul.f32 %v1913, %v1946
    %v1948 = vmul.f32 %v1914, %v1946
    %v1949 = vmul.f32 %v1915, %v1946
    %v1950 = vmul.f32 %v1916, %v1946
    %v1951 = vmul.f32 %v1917, %v1946
    %v1952 = vmul.f32 %v1918, %v1946
    %v1953 = vmul.f32 %v1919, %v1946
    %v1954 = vmul.f32 %v1920, %v1946
    %v1955 = vadd.f32 %v1847, %v1947
    %v1956 = vadd.f32 %v1848, %v1948
    %v1957 = vadd.f32 %v1849, %v1949
    %v1958 = vadd.f32 %v1850, %v1950
    %v1959 = vadd.f32 %v1851, %v1951
    %v1960 = vadd.f32 %v1852, %v1952
    %v1961 = vadd.f32 %v1853, %v1953
    %v1962 = vadd.f32 %v1854, %v1954
    %v1963 = vld [vmem:[%s187 + $0x11] sm:$0x1]
    %v1964 = vlaneseq
    %v1965 = vshrl.u32 %v1964, 7
    %v1966 = vsub.s32 0, %v1965
    %v1967 = vrot.slane %v1963, %v1966
    %v1968 = vmul.f32 %v1913, %v1967
    %v1969 = vmul.f32 %v1914, %v1967
    %v1970 = vmul.f32 %v1915, %v1967
    %v1971 = vmul.f32 %v1916, %v1967
    %v1972 = vmul.f32 %v1917, %v1967
    %v1973 = vmul.f32 %v1918, %v1967
    %v1974 = vmul.f32 %v1919, %v1967
    %v1975 = vmul.f32 %v1920, %v1967
    %v1976 = vadd.f32 %v1868, %v1968
    %v1977 = vadd.f32 %v1869, %v1969
    %v1978 = vadd.f32 %v1870, %v1970
    %v1979 = vadd.f32 %v1871, %v1971
    %v1980 = vadd.f32 %v1872, %v1972
    %v1981 = vadd.f32 %v1873, %v1973
    %v1982 = vadd.f32 %v1874, %v1974
    %v1983 = vadd.f32 %v1875, %v1975
    %v1984 = vld [vmem:[%s209 + $0x11] sm:$0x1]
    %v1985 = vlaneseq
    %v1986 = vshrl.u32 %v1985, 7
    %v1987 = vsub.s32 0, %v1986
    %v1988 = vrot.slane %v1984, %v1987
    %v1989 = vmul.f32 %v1913, %v1988
    %v1990 = vmul.f32 %v1914, %v1988
    %v1991 = vmul.f32 %v1915, %v1988
    %v1992 = vmul.f32 %v1916, %v1988
    %v1993 = vmul.f32 %v1917, %v1988
    %v1994 = vmul.f32 %v1918, %v1988
    %v1995 = vmul.f32 %v1919, %v1988
    %v1996 = vmul.f32 %v1920, %v1988
    %v1997 = vadd.f32 %v1889, %v1989
    %v1998 = vadd.f32 %v1890, %v1990
    %v1999 = vadd.f32 %v1891, %v1991
    %v2000 = vadd.f32 %v1892, %v1992
    %v2001 = vadd.f32 %v1893, %v1993
    %v2002 = vadd.f32 %v1894, %v1994
    %v2003 = vadd.f32 %v1895, %v1995
    %v2004 = vadd.f32 %v1896, %v1996
    %s2005 = scalar_lea.vmem %s0, 128
    %v2006 = vld [vmem:[%s2005] sm:$0xff]
    %v2007 = vld [vmem:[%s2005 + $0x8] sm:$0xff]
    %v2008 = vld [vmem:[%s2005 + $0x10] sm:$0xff]
    %v2009 = vld [vmem:[%s2005 + $0x18] sm:$0xff]
    %v2010 = vld [vmem:[%s2005 + $0x20] sm:$0xff]
    %v2011 = vld [vmem:[%s2005 + $0x28] sm:$0xff]
    %v2012 = vld [vmem:[%s2005 + $0x30] sm:$0xff]
    %v2013 = vld [vmem:[%s2005 + $0x38] sm:$0xff]
    %2014 = vrot.lane.b32.xlu0 %v2006, 1
    %v2015 = vpop.permute.xlu0 %2014
    %2016 = vrot.lane.b32.xlu0 %v2007, 1
    %v2017 = vpop.permute.xlu0 %2016
    %2018 = vrot.lane.b32.xlu0 %v2008, 1
    %v2019 = vpop.permute.xlu0 %2018
    %2020 = vrot.lane.b32.xlu0 %v2009, 1
    %v2021 = vpop.permute.xlu0 %2020
    %2022 = vrot.lane.b32.xlu0 %v2010, 1
    %v2023 = vpop.permute.xlu0 %2022
    %2024 = vrot.lane.b32.xlu0 %v2011, 1
    %v2025 = vpop.permute.xlu0 %2024
    %2026 = vrot.lane.b32.xlu0 %v2012, 1
    %v2027 = vpop.permute.xlu0 %2026
    %2028 = vrot.lane.b32.xlu0 %v2013, 1
    %v2029 = vpop.permute.xlu0 %2028
    %v2030 = vsel %vm38, %v2015, 0.0
    %v2031 = vsel %vm38, %v2017, 0.0
    %v2032 = vsel %vm38, %v2019, 0.0
    %v2033 = vsel %vm38, %v2021, 0.0
    %v2034 = vsel %vm38, %v2023, 0.0
    %v2035 = vsel %vm38, %v2025, 0.0
    %v2036 = vsel %vm38, %v2027, 0.0
    %v2037 = vsel %vm38, %v2029, 0.0
    %v2038 = vrot.slane %v2030, 7
    %v2039 = vrot.slane %v2031, 7
    %v2040 = vrot.slane %v2032, 7
    %v2041 = vrot.slane %v2033, 7
    %v2042 = vrot.slane %v2034, 7
    %v2043 = vrot.slane %v2035, 7
    %v2044 = vrot.slane %v2036, 7
    %v2045 = vrot.slane %v2037, 7
    %v2046 = vsel %vm127, %v2044, %v2045
    %v2047 = vsel %vm127, %v2043, %v2044
    %v2048 = vsel %vm127, %v2042, %v2043
    %v2049 = vsel %vm127, %v2041, %v2042
    %v2050 = vsel %vm127, %v2040, %v2041
    %v2051 = vsel %vm127, %v2039, %v2040
    %v2052 = vsel %vm127, %v2038, %v2039
    %v2053 = vsel %vm127, %v2045, %v2038
    %v2054 = vsel %vm40, %v2053, 0.0
    %v2055 = vsel %vm41, %v2052, 0.0
    %v2056 = vsel %vm42, %v2051, 0.0
    %v2057 = vsel %vm43, %v2050, 0.0
    %v2058 = vsel %vm44, %v2049, 0.0
    %v2059 = vsel %vm45, %v2048, 0.0
    %v2060 = vsel %vm46, %v2047, 0.0
    %v2061 = vsel %vm47, %v2046, 0.0
    %v2062 = vld [vmem:[%s1 + $0x12] sm:$0x1]
    %v2063 = vlaneseq
    %v2064 = vshrl.u32 %v2063, 7
    %v2065 = vsub.s32 0, %v2064
    %v2066 = vrot.slane %v2062, %v2065
    %v2067 = vmul.f32 %v2054, %v2066
    %v2068 = vmul.f32 %v2055, %v2066
    %v2069 = vmul.f32 %v2056, %v2066
    %v2070 = vmul.f32 %v2057, %v2066
    %v2071 = vmul.f32 %v2058, %v2066
    %v2072 = vmul.f32 %v2059, %v2066
    %v2073 = vmul.f32 %v2060, %v2066
    %v2074 = vmul.f32 %v2061, %v2066
    %v2075 = vadd.f32 %v1934, %v2067
    %v2076 = vadd.f32 %v1935, %v2068
    %v2077 = vadd.f32 %v1936, %v2069
    %v2078 = vadd.f32 %v1937, %v2070
    %v2079 = vadd.f32 %v1938, %v2071
    %v2080 = vadd.f32 %v1939, %v2072
    %v2081 = vadd.f32 %v1940, %v2073
    %v2082 = vadd.f32 %v1941, %v2074
    %v2083 = vld [vmem:[%s165 + $0x12] sm:$0x1]
    %v2084 = vlaneseq
    %v2085 = vshrl.u32 %v2084, 7
    %v2086 = vsub.s32 0, %v2085
    %v2087 = vrot.slane %v2083, %v2086
    %v2088 = vmul.f32 %v2054, %v2087
    %v2089 = vmul.f32 %v2055, %v2087
    %v2090 = vmul.f32 %v2056, %v2087
    %v2091 = vmul.f32 %v2057, %v2087
    %v2092 = vmul.f32 %v2058, %v2087
    %v2093 = vmul.f32 %v2059, %v2087
    %v2094 = vmul.f32 %v2060, %v2087
    %v2095 = vmul.f32 %v2061, %v2087
    %v2096 = vadd.f32 %v1955, %v2088
    %v2097 = vadd.f32 %v1956, %v2089
    %v2098 = vadd.f32 %v1957, %v2090
    %v2099 = vadd.f32 %v1958, %v2091
    %v2100 = vadd.f32 %v1959, %v2092
    %v2101 = vadd.f32 %v1960, %v2093
    %v2102 = vadd.f32 %v1961, %v2094
    %v2103 = vadd.f32 %v1962, %v2095
    %v2104 = vld [vmem:[%s187 + $0x12] sm:$0x1]
    %v2105 = vlaneseq
    %v2106 = vshrl.u32 %v2105, 7
    %v2107 = vsub.s32 0, %v2106
    %v2108 = vrot.slane %v2104, %v2107
    %v2109 = vmul.f32 %v2054, %v2108
    %v2110 = vmul.f32 %v2055, %v2108
    %v2111 = vmul.f32 %v2056, %v2108
    %v2112 = vmul.f32 %v2057, %v2108
    %v2113 = vmul.f32 %v2058, %v2108
    %v2114 = vmul.f32 %v2059, %v2108
    %v2115 = vmul.f32 %v2060, %v2108
    %v2116 = vmul.f32 %v2061, %v2108
    %v2117 = vadd.f32 %v1976, %v2109
    %v2118 = vadd.f32 %v1977, %v2110
    %v2119 = vadd.f32 %v1978, %v2111
    %v2120 = vadd.f32 %v1979, %v2112
    %v2121 = vadd.f32 %v1980, %v2113
    %v2122 = vadd.f32 %v1981, %v2114
    %v2123 = vadd.f32 %v1982, %v2115
    %v2124 = vadd.f32 %v1983, %v2116
    %v2125 = vld [vmem:[%s209 + $0x12] sm:$0x1]
    %v2126 = vlaneseq
    %v2127 = vshrl.u32 %v2126, 7
    %v2128 = vsub.s32 0, %v2127
    %v2129 = vrot.slane %v2125, %v2128
    %v2130 = vmul.f32 %v2054, %v2129
    %v2131 = vmul.f32 %v2055, %v2129
    %v2132 = vmul.f32 %v2056, %v2129
    %v2133 = vmul.f32 %v2057, %v2129
    %v2134 = vmul.f32 %v2058, %v2129
    %v2135 = vmul.f32 %v2059, %v2129
    %v2136 = vmul.f32 %v2060, %v2129
    %v2137 = vmul.f32 %v2061, %v2129
    %v2138 = vadd.f32 %v1997, %v2130
    %v2139 = vadd.f32 %v1998, %v2131
    %v2140 = vadd.f32 %v1999, %v2132
    %v2141 = vadd.f32 %v2000, %v2133
    %v2142 = vadd.f32 %v2001, %v2134
    %v2143 = vadd.f32 %v2002, %v2135
    %v2144 = vadd.f32 %v2003, %v2136
    %v2145 = vadd.f32 %v2004, %v2137
    %v2146 = vld [vmem:[%s1 + $0x15] sm:$0x1]
    %v2147 = vlaneseq
    %v2148 = vshrl.u32 %v2147, 7
    %v2149 = vsub.s32 0, %v2148
    %v2150 = vrot.slane %v2146, %v2149
    %v2151 = vmul.f32 %v2030, %v2150
    %v2152 = vmul.f32 %v2031, %v2150
    %v2153 = vmul.f32 %v2032, %v2150
    %v2154 = vmul.f32 %v2033, %v2150
    %v2155 = vmul.f32 %v2034, %v2150
    %v2156 = vmul.f32 %v2035, %v2150
    %v2157 = vmul.f32 %v2036, %v2150
    %v2158 = vmul.f32 %v2037, %v2150
    %v2159 = vadd.f32 %v2075, %v2151
    %v2160 = vadd.f32 %v2076, %v2152
    %v2161 = vadd.f32 %v2077, %v2153
    %v2162 = vadd.f32 %v2078, %v2154
    %v2163 = vadd.f32 %v2079, %v2155
    %v2164 = vadd.f32 %v2080, %v2156
    %v2165 = vadd.f32 %v2081, %v2157
    %v2166 = vadd.f32 %v2082, %v2158
    %v2167 = vld [vmem:[%s165 + $0x15] sm:$0x1]
    %v2168 = vlaneseq
    %v2169 = vshrl.u32 %v2168, 7
    %v2170 = vsub.s32 0, %v2169
    %v2171 = vrot.slane %v2167, %v2170
    %v2172 = vmul.f32 %v2030, %v2171
    %v2173 = vmul.f32 %v2031, %v2171
    %v2174 = vmul.f32 %v2032, %v2171
    %v2175 = vmul.f32 %v2033, %v2171
    %v2176 = vmul.f32 %v2034, %v2171
    %v2177 = vmul.f32 %v2035, %v2171
    %v2178 = vmul.f32 %v2036, %v2171
    %v2179 = vmul.f32 %v2037, %v2171
    %v2180 = vadd.f32 %v2096, %v2172
    %v2181 = vadd.f32 %v2097, %v2173
    %v2182 = vadd.f32 %v2098, %v2174
    %v2183 = vadd.f32 %v2099, %v2175
    %v2184 = vadd.f32 %v2100, %v2176
    %v2185 = vadd.f32 %v2101, %v2177
    %v2186 = vadd.f32 %v2102, %v2178
    %v2187 = vadd.f32 %v2103, %v2179
    %v2188 = vld [vmem:[%s187 + $0x15] sm:$0x1]
    %v2189 = vlaneseq
    %v2190 = vshrl.u32 %v2189, 7
    %v2191 = vsub.s32 0, %v2190
    %v2192 = vrot.slane %v2188, %v2191
    %v2193 = vmul.f32 %v2030, %v2192
    %v2194 = vmul.f32 %v2031, %v2192
    %v2195 = vmul.f32 %v2032, %v2192
    %v2196 = vmul.f32 %v2033, %v2192
    %v2197 = vmul.f32 %v2034, %v2192
    %v2198 = vmul.f32 %v2035, %v2192
    %v2199 = vmul.f32 %v2036, %v2192
    %v2200 = vmul.f32 %v2037, %v2192
    %v2201 = vadd.f32 %v2117, %v2193
    %v2202 = vadd.f32 %v2118, %v2194
    %v2203 = vadd.f32 %v2119, %v2195
    %v2204 = vadd.f32 %v2120, %v2196
    %v2205 = vadd.f32 %v2121, %v2197
    %v2206 = vadd.f32 %v2122, %v2198
    %v2207 = vadd.f32 %v2123, %v2199
    %v2208 = vadd.f32 %v2124, %v2200
    %v2209 = vld [vmem:[%s209 + $0x15] sm:$0x1]
    %v2210 = vlaneseq
    %v2211 = vshrl.u32 %v2210, 7
    %v2212 = vsub.s32 0, %v2211
    %v2213 = vrot.slane %v2209, %v2212
    %v2214 = vmul.f32 %v2030, %v2213
    %v2215 = vmul.f32 %v2031, %v2213
    %v2216 = vmul.f32 %v2032, %v2213
    %v2217 = vmul.f32 %v2033, %v2213
    %v2218 = vmul.f32 %v2034, %v2213
    %v2219 = vmul.f32 %v2035, %v2213
    %v2220 = vmul.f32 %v2036, %v2213
    %v2221 = vmul.f32 %v2037, %v2213
    %v2222 = vadd.f32 %v2138, %v2214
    %v2223 = vadd.f32 %v2139, %v2215
    %v2224 = vadd.f32 %v2140, %v2216
    %v2225 = vadd.f32 %v2141, %v2217
    %v2226 = vadd.f32 %v2142, %v2218
    %v2227 = vadd.f32 %v2143, %v2219
    %v2228 = vadd.f32 %v2144, %v2220
    %v2229 = vadd.f32 %v2145, %v2221
    %v2230 = vrot.slane %v2030, 1
    %v2231 = vrot.slane %v2031, 1
    %v2232 = vrot.slane %v2032, 1
    %v2233 = vrot.slane %v2033, 1
    %v2234 = vrot.slane %v2034, 1
    %v2235 = vrot.slane %v2035, 1
    %v2236 = vrot.slane %v2036, 1
    %v2237 = vrot.slane %v2037, 1
    %v2238 = vsel %vm323, %v2236, %v2237
    %v2239 = vsel %vm323, %v2235, %v2236
    %v2240 = vsel %vm323, %v2234, %v2235
    %v2241 = vsel %vm323, %v2233, %v2234
    %v2242 = vsel %vm323, %v2232, %v2233
    %v2243 = vsel %vm323, %v2231, %v2232
    %v2244 = vsel %vm323, %v2230, %v2231
    %v2245 = vsel %vm323, %v2237, %v2230
    %v2246 = vsel %vm48, %v2244, 0.0
    %v2247 = vsel %vm49, %v2243, 0.0
    %v2248 = vsel %vm50, %v2242, 0.0
    %v2249 = vsel %vm51, %v2241, 0.0
    %v2250 = vsel %vm52, %v2240, 0.0
    %v2251 = vsel %vm53, %v2239, 0.0
    %v2252 = vsel %vm54, %v2238, 0.0
    %v2253 = vsel %vm55, %v2245, 0.0
    %v2254 = vld [vmem:[%s1 + $0x18] sm:$0x1]
    %v2255 = vlaneseq
    %v2256 = vshrl.u32 %v2255, 7
    %v2257 = vsub.s32 0, %v2256
    %v2258 = vrot.slane %v2254, %v2257
    %v2259 = vmul.f32 %v2246, %v2258
    %v2260 = vmul.f32 %v2247, %v2258
    %v2261 = vmul.f32 %v2248, %v2258
    %v2262 = vmul.f32 %v2249, %v2258
    %v2263 = vmul.f32 %v2250, %v2258
    %v2264 = vmul.f32 %v2251, %v2258
    %v2265 = vmul.f32 %v2252, %v2258
    %v2266 = vmul.f32 %v2253, %v2258
    %v2267 = vadd.f32 %v2159, %v2259
    %v2268 = vadd.f32 %v2160, %v2260
    %v2269 = vadd.f32 %v2161, %v2261
    %v2270 = vadd.f32 %v2162, %v2262
    %v2271 = vadd.f32 %v2163, %v2263
    %v2272 = vadd.f32 %v2164, %v2264
    %v2273 = vadd.f32 %v2165, %v2265
    %v2274 = vadd.f32 %v2166, %v2266
    %v2275 = vld [vmem:[%s165 + $0x18] sm:$0x1]
    %v2276 = vlaneseq
    %v2277 = vshrl.u32 %v2276, 7
    %v2278 = vsub.s32 0, %v2277
    %v2279 = vrot.slane %v2275, %v2278
    %v2280 = vmul.f32 %v2246, %v2279
    %v2281 = vmul.f32 %v2247, %v2279
    %v2282 = vmul.f32 %v2248, %v2279
    %v2283 = vmul.f32 %v2249, %v2279
    %v2284 = vmul.f32 %v2250, %v2279
    %v2285 = vmul.f32 %v2251, %v2279
    %v2286 = vmul.f32 %v2252, %v2279
    %v2287 = vmul.f32 %v2253, %v2279
    %v2288 = vadd.f32 %v2180, %v2280
    %v2289 = vadd.f32 %v2181, %v2281
    %v2290 = vadd.f32 %v2182, %v2282
    %v2291 = vadd.f32 %v2183, %v2283
    %v2292 = vadd.f32 %v2184, %v2284
    %v2293 = vadd.f32 %v2185, %v2285
    %v2294 = vadd.f32 %v2186, %v2286
    %v2295 = vadd.f32 %v2187, %v2287
    %v2296 = vld [vmem:[%s187 + $0x18] sm:$0x1]
    %v2297 = vlaneseq
    %v2298 = vshrl.u32 %v2297, 7
    %v2299 = vsub.s32 0, %v2298
    %v2300 = vrot.slane %v2296, %v2299
    %v2301 = vmul.f32 %v2246, %v2300
    %v2302 = vmul.f32 %v2247, %v2300
    %v2303 = vmul.f32 %v2248, %v2300
    %v2304 = vmul.f32 %v2249, %v2300
    %v2305 = vmul.f32 %v2250, %v2300
    %v2306 = vmul.f32 %v2251, %v2300
    %v2307 = vmul.f32 %v2252, %v2300
    %v2308 = vmul.f32 %v2253, %v2300
    %v2309 = vadd.f32 %v2201, %v2301
    %v2310 = vadd.f32 %v2202, %v2302
    %v2311 = vadd.f32 %v2203, %v2303
    %v2312 = vadd.f32 %v2204, %v2304
    %v2313 = vadd.f32 %v2205, %v2305
    %v2314 = vadd.f32 %v2206, %v2306
    %v2315 = vadd.f32 %v2207, %v2307
    %v2316 = vadd.f32 %v2208, %v2308
    %v2317 = vld [vmem:[%s209 + $0x18] sm:$0x1]
    %v2318 = vlaneseq
    %v2319 = vshrl.u32 %v2318, 7
    %v2320 = vsub.s32 0, %v2319
    %v2321 = vrot.slane %v2317, %v2320
    %v2322 = vmul.f32 %v2246, %v2321
    %v2323 = vmul.f32 %v2247, %v2321
    %v2324 = vmul.f32 %v2248, %v2321
    %v2325 = vmul.f32 %v2249, %v2321
    %v2326 = vmul.f32 %v2250, %v2321
    %v2327 = vmul.f32 %v2251, %v2321
    %v2328 = vmul.f32 %v2252, %v2321
    %v2329 = vmul.f32 %v2253, %v2321
    %v2330 = vadd.f32 %v2222, %v2322
    %v2331 = vadd.f32 %v2223, %v2323
    %v2332 = vadd.f32 %v2224, %v2324
    %v2333 = vadd.f32 %v2225, %v2325
    %v2334 = vadd.f32 %v2226, %v2326
    %v2335 = vadd.f32 %v2227, %v2327
    %v2336 = vadd.f32 %v2228, %v2328
    %v2337 = vadd.f32 %v2229, %v2329
    %v2338 = vrot.slane %v2006, 7
    %v2339 = vrot.slane %v2007, 7
    %v2340 = vrot.slane %v2008, 7
    %v2341 = vrot.slane %v2009, 7
    %v2342 = vrot.slane %v2010, 7
    %v2343 = vrot.slane %v2011, 7
    %v2344 = vrot.slane %v2012, 7
    %v2345 = vrot.slane %v2013, 7
    %v2346 = vsel %vm127, %v2344, %v2345
    %v2347 = vsel %vm127, %v2343, %v2344
    %v2348 = vsel %vm127, %v2342, %v2343
    %v2349 = vsel %vm127, %v2341, %v2342
    %v2350 = vsel %vm127, %v2340, %v2341
    %v2351 = vsel %vm127, %v2339, %v2340
    %v2352 = vsel %vm127, %v2338, %v2339
    %v2353 = vsel %vm127, %v2345, %v2338
    %v2354 = vsel %vm40, %v2353, 0.0
    %v2355 = vsel %vm41, %v2352, 0.0
    %v2356 = vsel %vm42, %v2351, 0.0
    %v2357 = vsel %vm43, %v2350, 0.0
    %v2358 = vsel %vm44, %v2349, 0.0
    %v2359 = vsel %vm45, %v2348, 0.0
    %v2360 = vsel %vm46, %v2347, 0.0
    %v2361 = vsel %vm47, %v2346, 0.0
    %v2362 = vld [vmem:[%s1 + $0x13] sm:$0x1]
    %v2363 = vlaneseq
    %v2364 = vshrl.u32 %v2363, 7
    %v2365 = vsub.s32 0, %v2364
    %v2366 = vrot.slane %v2362, %v2365
    %v2367 = vmul.f32 %v2354, %v2366
    %v2368 = vmul.f32 %v2355, %v2366
    %v2369 = vmul.f32 %v2356, %v2366
    %v2370 = vmul.f32 %v2357, %v2366
    %v2371 = vmul.f32 %v2358, %v2366
    %v2372 = vmul.f32 %v2359, %v2366
    %v2373 = vmul.f32 %v2360, %v2366
    %v2374 = vmul.f32 %v2361, %v2366
    %v2375 = vadd.f32 %v2267, %v2367
    %v2376 = vadd.f32 %v2268, %v2368
    %v2377 = vadd.f32 %v2269, %v2369
    %v2378 = vadd.f32 %v2270, %v2370
    %v2379 = vadd.f32 %v2271, %v2371
    %v2380 = vadd.f32 %v2272, %v2372
    %v2381 = vadd.f32 %v2273, %v2373
    %v2382 = vadd.f32 %v2274, %v2374
    %v2383 = vld [vmem:[%s165 + $0x13] sm:$0x1]
    %v2384 = vlaneseq
    %v2385 = vshrl.u32 %v2384, 7
    %v2386 = vsub.s32 0, %v2385
    %v2387 = vrot.slane %v2383, %v2386
    %v2388 = vmul.f32 %v2354, %v2387
    %v2389 = vmul.f32 %v2355, %v2387
    %v2390 = vmul.f32 %v2356, %v2387
    %v2391 = vmul.f32 %v2357, %v2387
    %v2392 = vmul.f32 %v2358, %v2387
    %v2393 = vmul.f32 %v2359, %v2387
    %v2394 = vmul.f32 %v2360, %v2387
    %v2395 = vmul.f32 %v2361, %v2387
    %v2396 = vadd.f32 %v2288, %v2388
    %v2397 = vadd.f32 %v2289, %v2389
    %v2398 = vadd.f32 %v2290, %v2390
    %v2399 = vadd.f32 %v2291, %v2391
    %v2400 = vadd.f32 %v2292, %v2392
    %v2401 = vadd.f32 %v2293, %v2393
    %v2402 = vadd.f32 %v2294, %v2394
    %v2403 = vadd.f32 %v2295, %v2395
    %v2404 = vld [vmem:[%s187 + $0x13] sm:$0x1]
    %v2405 = vlaneseq
    %v2406 = vshrl.u32 %v2405, 7
    %v2407 = vsub.s32 0, %v2406
    %v2408 = vrot.slane %v2404, %v2407
    %v2409 = vmul.f32 %v2354, %v2408
    %v2410 = vmul.f32 %v2355, %v2408
    %v2411 = vmul.f32 %v2356, %v2408
    %v2412 = vmul.f32 %v2357, %v2408
    %v2413 = vmul.f32 %v2358, %v2408
    %v2414 = vmul.f32 %v2359, %v2408
    %v2415 = vmul.f32 %v2360, %v2408
    %v2416 = vmul.f32 %v2361, %v2408
    %v2417 = vadd.f32 %v2309, %v2409
    %v2418 = vadd.f32 %v2310, %v2410
    %v2419 = vadd.f32 %v2311, %v2411
    %v2420 = vadd.f32 %v2312, %v2412
    %v2421 = vadd.f32 %v2313, %v2413
    %v2422 = vadd.f32 %v2314, %v2414
    %v2423 = vadd.f32 %v2315, %v2415
    %v2424 = vadd.f32 %v2316, %v2416
    %v2425 = vld [vmem:[%s209 + $0x13] sm:$0x1]
    %v2426 = vlaneseq
    %v2427 = vshrl.u32 %v2426, 7
    %v2428 = vsub.s32 0, %v2427
    %v2429 = vrot.slane %v2425, %v2428
    %v2430 = vmul.f32 %v2354, %v2429
    %v2431 = vmul.f32 %v2355, %v2429
    %v2432 = vmul.f32 %v2356, %v2429
    %v2433 = vmul.f32 %v2357, %v2429
    %v2434 = vmul.f32 %v2358, %v2429
    %v2435 = vmul.f32 %v2359, %v2429
    %v2436 = vmul.f32 %v2360, %v2429
    %v2437 = vmul.f32 %v2361, %v2429
    %v2438 = vadd.f32 %v2330, %v2430
    %v2439 = vadd.f32 %v2331, %v2431
    %v2440 = vadd.f32 %v2332, %v2432
    %v2441 = vadd.f32 %v2333, %v2433
    %v2442 = vadd.f32 %v2334, %v2434
    %v2443 = vadd.f32 %v2335, %v2435
    %v2444 = vadd.f32 %v2336, %v2436
    %v2445 = vadd.f32 %v2337, %v2437
    %v2446 = vld [vmem:[%s1 + $0x16] sm:$0x1]
    %v2447 = vlaneseq
    %v2448 = vshrl.u32 %v2447, 7
    %v2449 = vsub.s32 0, %v2448
    %v2450 = vrot.slane %v2446, %v2449
    %v2451 = vmul.f32 %v2006, %v2450
    %v2452 = vmul.f32 %v2007, %v2450
    %v2453 = vmul.f32 %v2008, %v2450
    %v2454 = vmul.f32 %v2009, %v2450
    %v2455 = vmul.f32 %v2010, %v2450
    %v2456 = vmul.f32 %v2011, %v2450
    %v2457 = vmul.f32 %v2012, %v2450
    %v2458 = vmul.f32 %v2013, %v2450
    %v2459 = vadd.f32 %v2375, %v2451
    %v2460 = vadd.f32 %v2376, %v2452
    %v2461 = vadd.f32 %v2377, %v2453
    %v2462 = vadd.f32 %v2378, %v2454
    %v2463 = vadd.f32 %v2379, %v2455
    %v2464 = vadd.f32 %v2380, %v2456
    %v2465 = vadd.f32 %v2381, %v2457
    %v2466 = vadd.f32 %v2382, %v2458
    %v2467 = vld [vmem:[%s165 + $0x16] sm:$0x1]
    %v2468 = vlaneseq
    %v2469 = vshrl.u32 %v2468, 7
    %v2470 = vsub.s32 0, %v2469
    %v2471 = vrot.slane %v2467, %v2470
    %v2472 = vmul.f32 %v2006, %v2471
    %v2473 = vmul.f32 %v2007, %v2471
    %v2474 = vmul.f32 %v2008, %v2471
    %v2475 = vmul.f32 %v2009, %v2471
    %v2476 = vmul.f32 %v2010, %v2471
    %v2477 = vmul.f32 %v2011, %v2471
    %v2478 = vmul.f32 %v2012, %v2471
    %v2479 = vmul.f32 %v2013, %v2471
    %v2480 = vadd.f32 %v2396, %v2472
    %v2481 = vadd.f32 %v2397, %v2473
    %v2482 = vadd.f32 %v2398, %v2474
    %v2483 = vadd.f32 %v2399, %v2475
    %v2484 = vadd.f32 %v2400, %v2476
    %v2485 = vadd.f32 %v2401, %v2477
    %v2486 = vadd.f32 %v2402, %v2478
    %v2487 = vadd.f32 %v2403, %v2479
    %v2488 = vld [vmem:[%s187 + $0x16] sm:$0x1]
    %v2489 = vlaneseq
    %v2490 = vshrl.u32 %v2489, 7
    %v2491 = vsub.s32 0, %v2490
    %v2492 = vrot.slane %v2488, %v2491
    %v2493 = vmul.f32 %v2006, %v2492
    %v2494 = vmul.f32 %v2007, %v2492
    %v2495 = vmul.f32 %v2008, %v2492
    %v2496 = vmul.f32 %v2009, %v2492
    %v2497 = vmul.f32 %v2010, %v2492
    %v2498 = vmul.f32 %v2011, %v2492
    %v2499 = vmul.f32 %v2012, %v2492
    %v2500 = vmul.f32 %v2013, %v2492
    %v2501 = vadd.f32 %v2417, %v2493
    %v2502 = vadd.f32 %v2418, %v2494
    %v2503 = vadd.f32 %v2419, %v2495
    %v2504 = vadd.f32 %v2420, %v2496
    %v2505 = vadd.f32 %v2421, %v2497
    %v2506 = vadd.f32 %v2422, %v2498
    %v2507 = vadd.f32 %v2423, %v2499
    %v2508 = vadd.f32 %v2424, %v2500
    %v2509 = vld [vmem:[%s209 + $0x16] sm:$0x1]
    %v2510 = vlaneseq
    %v2511 = vshrl.u32 %v2510, 7
    %v2512 = vsub.s32 0, %v2511
    %v2513 = vrot.slane %v2509, %v2512
    %v2514 = vmul.f32 %v2006, %v2513
    %v2515 = vmul.f32 %v2007, %v2513
    %v2516 = vmul.f32 %v2008, %v2513
    %v2517 = vmul.f32 %v2009, %v2513
    %v2518 = vmul.f32 %v2010, %v2513
    %v2519 = vmul.f32 %v2011, %v2513
    %v2520 = vmul.f32 %v2012, %v2513
    %v2521 = vmul.f32 %v2013, %v2513
    %v2522 = vadd.f32 %v2438, %v2514
    %v2523 = vadd.f32 %v2439, %v2515
    %v2524 = vadd.f32 %v2440, %v2516
    %v2525 = vadd.f32 %v2441, %v2517
    %v2526 = vadd.f32 %v2442, %v2518
    %v2527 = vadd.f32 %v2443, %v2519
    %v2528 = vadd.f32 %v2444, %v2520
    %v2529 = vadd.f32 %v2445, %v2521
    %v2530 = vrot.slane %v2006, 1
    %v2531 = vrot.slane %v2007, 1
    %v2532 = vrot.slane %v2008, 1
    %v2533 = vrot.slane %v2009, 1
    %v2534 = vrot.slane %v2010, 1
    %v2535 = vrot.slane %v2011, 1
    %v2536 = vrot.slane %v2012, 1
    %v2537 = vrot.slane %v2013, 1
    %v2538 = vsel %vm323, %v2536, %v2537
    %v2539 = vsel %vm323, %v2535, %v2536
    %v2540 = vsel %vm323, %v2534, %v2535
    %v2541 = vsel %vm323, %v2533, %v2534
    %v2542 = vsel %vm323, %v2532, %v2533
    %v2543 = vsel %vm323, %v2531, %v2532
    %v2544 = vsel %vm323, %v2530, %v2531
    %v2545 = vsel %vm323, %v2537, %v2530
    %v2546 = vsel %vm48, %v2544, 0.0
    %v2547 = vsel %vm49, %v2543, 0.0
    %v2548 = vsel %vm50, %v2542, 0.0
    %v2549 = vsel %vm51, %v2541, 0.0
    %v2550 = vsel %vm52, %v2540, 0.0
    %v2551 = vsel %vm53, %v2539, 0.0
    %v2552 = vsel %vm54, %v2538, 0.0
    %v2553 = vsel %vm55, %v2545, 0.0
    %v2554 = vld [vmem:[%s1 + $0x19] sm:$0x1]
    %v2555 = vlaneseq
    %v2556 = vshrl.u32 %v2555, 7
    %v2557 = vsub.s32 0, %v2556
    %v2558 = vrot.slane %v2554, %v2557
    %v2559 = vmul.f32 %v2546, %v2558
    %v2560 = vmul.f32 %v2547, %v2558
    %v2561 = vmul.f32 %v2548, %v2558
    %v2562 = vmul.f32 %v2549, %v2558
    %v2563 = vmul.f32 %v2550, %v2558
    %v2564 = vmul.f32 %v2551, %v2558
    %v2565 = vmul.f32 %v2552, %v2558
    %v2566 = vmul.f32 %v2553, %v2558
    %v2567 = vadd.f32 %v2459, %v2559
    %v2568 = vadd.f32 %v2460, %v2560
    %v2569 = vadd.f32 %v2461, %v2561
    %v2570 = vadd.f32 %v2462, %v2562
    %v2571 = vadd.f32 %v2463, %v2563
    %v2572 = vadd.f32 %v2464, %v2564
    %v2573 = vadd.f32 %v2465, %v2565
    %v2574 = vadd.f32 %v2466, %v2566
    %v2575 = vld [vmem:[%s165 + $0x19] sm:$0x1]
    %v2576 = vlaneseq
    %v2577 = vshrl.u32 %v2576, 7
    %v2578 = vsub.s32 0, %v2577
    %v2579 = vrot.slane %v2575, %v2578
    %v2580 = vmul.f32 %v2546, %v2579
    %v2581 = vmul.f32 %v2547, %v2579
    %v2582 = vmul.f32 %v2548, %v2579
    %v2583 = vmul.f32 %v2549, %v2579
    %v2584 = vmul.f32 %v2550, %v2579
    %v2585 = vmul.f32 %v2551, %v2579
    %v2586 = vmul.f32 %v2552, %v2579
    %v2587 = vmul.f32 %v2553, %v2579
    %v2588 = vadd.f32 %v2480, %v2580
    %v2589 = vadd.f32 %v2481, %v2581
    %v2590 = vadd.f32 %v2482, %v2582
    %v2591 = vadd.f32 %v2483, %v2583
    %v2592 = vadd.f32 %v2484, %v2584
    %v2593 = vadd.f32 %v2485, %v2585
    %v2594 = vadd.f32 %v2486, %v2586
    %v2595 = vadd.f32 %v2487, %v2587
    %v2596 = vld [vmem:[%s187 + $0x19] sm:$0x1]
    %v2597 = vlaneseq
    %v2598 = vshrl.u32 %v2597, 7
    %v2599 = vsub.s32 0, %v2598
    %v2600 = vrot.slane %v2596, %v2599
    %v2601 = vmul.f32 %v2546, %v2600
    %v2602 = vmul.f32 %v2547, %v2600
    %v2603 = vmul.f32 %v2548, %v2600
    %v2604 = vmul.f32 %v2549, %v2600
    %v2605 = vmul.f32 %v2550, %v2600
    %v2606 = vmul.f32 %v2551, %v2600
    %v2607 = vmul.f32 %v2552, %v2600
    %v2608 = vmul.f32 %v2553, %v2600
    %v2609 = vadd.f32 %v2501, %v2601
    %v2610 = vadd.f32 %v2502, %v2602
    %v2611 = vadd.f32 %v2503, %v2603
    %v2612 = vadd.f32 %v2504, %v2604
    %v2613 = vadd.f32 %v2505, %v2605
    %v2614 = vadd.f32 %v2506, %v2606
    %v2615 = vadd.f32 %v2507, %v2607
    %v2616 = vadd.f32 %v2508, %v2608
    %v2617 = vld [vmem:[%s209 + $0x19] sm:$0x1]
    %v2618 = vlaneseq
    %v2619 = vshrl.u32 %v2618, 7
    %v2620 = vsub.s32 0, %v2619
    %v2621 = vrot.slane %v2617, %v2620
    %v2622 = vmul.f32 %v2546, %v2621
    %v2623 = vmul.f32 %v2547, %v2621
    %v2624 = vmul.f32 %v2548, %v2621
    %v2625 = vmul.f32 %v2549, %v2621
    %v2626 = vmul.f32 %v2550, %v2621
    %v2627 = vmul.f32 %v2551, %v2621
    %v2628 = vmul.f32 %v2552, %v2621
    %v2629 = vmul.f32 %v2553, %v2621
    %v2630 = vadd.f32 %v2522, %v2622
    %v2631 = vadd.f32 %v2523, %v2623
    %v2632 = vadd.f32 %v2524, %v2624
    %v2633 = vadd.f32 %v2525, %v2625
    %v2634 = vadd.f32 %v2526, %v2626
    %v2635 = vadd.f32 %v2527, %v2627
    %v2636 = vadd.f32 %v2528, %v2628
    %v2637 = vadd.f32 %v2529, %v2629
    %2638 = vrot.lane.b32.xlu0 %v2006, 127
    %v2639 = vpop.permute.xlu0 %2638
    %2640 = vrot.lane.b32.xlu0 %v2007, 127
    %v2641 = vpop.permute.xlu0 %2640
    %2642 = vrot.lane.b32.xlu0 %v2008, 127
    %v2643 = vpop.permute.xlu0 %2642
    %2644 = vrot.lane.b32.xlu0 %v2009, 127
    %v2645 = vpop.permute.xlu0 %2644
    %2646 = vrot.lane.b32.xlu0 %v2010, 127
    %v2647 = vpop.permute.xlu0 %2646
    %2648 = vrot.lane.b32.xlu0 %v2011, 127
    %v2649 = vpop.permute.xlu0 %2648
    %2650 = vrot.lane.b32.xlu0 %v2012, 127
    %v2651 = vpop.permute.xlu0 %2650
    %2652 = vrot.lane.b32.xlu0 %v2013, 127
    %v2653 = vpop.permute.xlu0 %2652
    %v2654 = vsel %vm39, %v2639, 0.0
    %v2655 = vsel %vm39, %v2641, 0.0
    %v2656 = vsel %vm39, %v2643, 0.0
    %v2657 = vsel %vm39, %v2645, 0.0
    %v2658 = vsel %vm39, %v2647, 0.0
    %v2659 = vsel %vm39, %v2649, 0.0
    %v2660 = vsel %vm39, %v2651, 0.0
    %v2661 = vsel %vm39, %v2653, 0.0
    %v2662 = vrot.slane %v2654, 7
    %v2663 = vrot.slane %v2655, 7
    %v2664 = vrot.slane %v2656, 7
    %v2665 = vrot.slane %v2657, 7
    %v2666 = vrot.slane %v2658, 7
    %v2667 = vrot.slane %v2659, 7
    %v2668 = vrot.slane %v2660, 7
    %v2669 = vrot.slane %v2661, 7
    %v2670 = vsel %vm127, %v2668, %v2669
    %v2671 = vsel %vm127, %v2667, %v2668
    %v2672 = vsel %vm127, %v2666, %v2667
    %v2673 = vsel %vm127, %v2665, %v2666
    %v2674 = vsel %vm127, %v2664, %v2665
    %v2675 = vsel %vm127, %v2663, %v2664
    %v2676 = vsel %vm127, %v2662, %v2663
    %v2677 = vsel %vm127, %v2669, %v2662
    %v2678 = vsel %vm40, %v2677, 0.0
    %v2679 = vsel %vm41, %v2676, 0.0
    %v2680 = vsel %vm42, %v2675, 0.0
    %v2681 = vsel %vm43, %v2674, 0.0
    %v2682 = vsel %vm44, %v2673, 0.0
    %v2683 = vsel %vm45, %v2672, 0.0
    %v2684 = vsel %vm46, %v2671, 0.0
    %v2685 = vsel %vm47, %v2670, 0.0
    %v2686 = vld [vmem:[%s1 + $0x14] sm:$0x1]
    %v2687 = vlaneseq
    %v2688 = vshrl.u32 %v2687, 7
    %v2689 = vsub.s32 0, %v2688
    %v2690 = vrot.slane %v2686, %v2689
    %v2691 = vmul.f32 %v2678, %v2690
    %v2692 = vmul.f32 %v2679, %v2690
    %v2693 = vmul.f32 %v2680, %v2690
    %v2694 = vmul.f32 %v2681, %v2690
    %v2695 = vmul.f32 %v2682, %v2690
    %v2696 = vmul.f32 %v2683, %v2690
    %v2697 = vmul.f32 %v2684, %v2690
    %v2698 = vmul.f32 %v2685, %v2690
    %v2699 = vadd.f32 %v2567, %v2691
    %v2700 = vadd.f32 %v2568, %v2692
    %v2701 = vadd.f32 %v2569, %v2693
    %v2702 = vadd.f32 %v2570, %v2694
    %v2703 = vadd.f32 %v2571, %v2695
    %v2704 = vadd.f32 %v2572, %v2696
    %v2705 = vadd.f32 %v2573, %v2697
    %v2706 = vadd.f32 %v2574, %v2698
    %v2707 = vld [vmem:[%s165 + $0x14] sm:$0x1]
    %v2708 = vlaneseq
    %v2709 = vshrl.u32 %v2708, 7
    %v2710 = vsub.s32 0, %v2709
    %v2711 = vrot.slane %v2707, %v2710
    %v2712 = vmul.f32 %v2678, %v2711
    %v2713 = vmul.f32 %v2679, %v2711
    %v2714 = vmul.f32 %v2680, %v2711
    %v2715 = vmul.f32 %v2681, %v2711
    %v2716 = vmul.f32 %v2682, %v2711
    %v2717 = vmul.f32 %v2683, %v2711
    %v2718 = vmul.f32 %v2684, %v2711
    %v2719 = vmul.f32 %v2685, %v2711
    %v2720 = vadd.f32 %v2588, %v2712
    %v2721 = vadd.f32 %v2589, %v2713
    %v2722 = vadd.f32 %v2590, %v2714
    %v2723 = vadd.f32 %v2591, %v2715
    %v2724 = vadd.f32 %v2592, %v2716
    %v2725 = vadd.f32 %v2593, %v2717
    %v2726 = vadd.f32 %v2594, %v2718
    %v2727 = vadd.f32 %v2595, %v2719
    %v2728 = vld [vmem:[%s187 + $0x14] sm:$0x1]
    %v2729 = vlaneseq
    %v2730 = vshrl.u32 %v2729, 7
    %v2731 = vsub.s32 0, %v2730
    %v2732 = vrot.slane %v2728, %v2731
    %v2733 = vmul.f32 %v2678, %v2732
    %v2734 = vmul.f32 %v2679, %v2732
    %v2735 = vmul.f32 %v2680, %v2732
    %v2736 = vmul.f32 %v2681, %v2732
    %v2737 = vmul.f32 %v2682, %v2732
    %v2738 = vmul.f32 %v2683, %v2732
    %v2739 = vmul.f32 %v2684, %v2732
    %v2740 = vmul.f32 %v2685, %v2732
    %v2741 = vadd.f32 %v2609, %v2733
    %v2742 = vadd.f32 %v2610, %v2734
    %v2743 = vadd.f32 %v2611, %v2735
    %v2744 = vadd.f32 %v2612, %v2736
    %v2745 = vadd.f32 %v2613, %v2737
    %v2746 = vadd.f32 %v2614, %v2738
    %v2747 = vadd.f32 %v2615, %v2739
    %v2748 = vadd.f32 %v2616, %v2740
    %v2749 = vld [vmem:[%s209 + $0x14] sm:$0x1]
    %v2750 = vlaneseq
    %v2751 = vshrl.u32 %v2750, 7
    %v2752 = vsub.s32 0, %v2751
    %v2753 = vrot.slane %v2749, %v2752
    %v2754 = vmul.f32 %v2678, %v2753
    %v2755 = vmul.f32 %v2679, %v2753
    %v2756 = vmul.f32 %v2680, %v2753
    %v2757 = vmul.f32 %v2681, %v2753
    %v2758 = vmul.f32 %v2682, %v2753
    %v2759 = vmul.f32 %v2683, %v2753
    %v2760 = vmul.f32 %v2684, %v2753
    %v2761 = vmul.f32 %v2685, %v2753
    %v2762 = vadd.f32 %v2630, %v2754
    %v2763 = vadd.f32 %v2631, %v2755
    %v2764 = vadd.f32 %v2632, %v2756
    %v2765 = vadd.f32 %v2633, %v2757
    %v2766 = vadd.f32 %v2634, %v2758
    %v2767 = vadd.f32 %v2635, %v2759
    %v2768 = vadd.f32 %v2636, %v2760
    %v2769 = vadd.f32 %v2637, %v2761
    %v2770 = vld [vmem:[%s1 + $0x17] sm:$0x1]
    %v2771 = vlaneseq
    %v2772 = vshrl.u32 %v2771, 7
    %v2773 = vsub.s32 0, %v2772
    %v2774 = vrot.slane %v2770, %v2773
    %v2775 = vmul.f32 %v2654, %v2774
    %v2776 = vmul.f32 %v2655, %v2774
    %v2777 = vmul.f32 %v2656, %v2774
    %v2778 = vmul.f32 %v2657, %v2774
    %v2779 = vmul.f32 %v2658, %v2774
    %v2780 = vmul.f32 %v2659, %v2774
    %v2781 = vmul.f32 %v2660, %v2774
    %v2782 = vmul.f32 %v2661, %v2774
    %v2783 = vadd.f32 %v2699, %v2775
    %v2784 = vadd.f32 %v2700, %v2776
    %v2785 = vadd.f32 %v2701, %v2777
    %v2786 = vadd.f32 %v2702, %v2778
    %v2787 = vadd.f32 %v2703, %v2779
    %v2788 = vadd.f32 %v2704, %v2780
    %v2789 = vadd.f32 %v2705, %v2781
    %v2790 = vadd.f32 %v2706, %v2782
    %v2791 = vld [vmem:[%s165 + $0x17] sm:$0x1]
    %v2792 = vlaneseq
    %v2793 = vshrl.u32 %v2792, 7
    %v2794 = vsub.s32 0, %v2793
    %v2795 = vrot.slane %v2791, %v2794
    %v2796 = vmul.f32 %v2654, %v2795
    %v2797 = vmul.f32 %v2655, %v2795
    %v2798 = vmul.f32 %v2656, %v2795
    %v2799 = vmul.f32 %v2657, %v2795
    %v2800 = vmul.f32 %v2658, %v2795
    %v2801 = vmul.f32 %v2659, %v2795
    %v2802 = vmul.f32 %v2660, %v2795
    %v2803 = vmul.f32 %v2661, %v2795
    %v2804 = vadd.f32 %v2720, %v2796
    %v2805 = vadd.f32 %v2721, %v2797
    %v2806 = vadd.f32 %v2722, %v2798
    %v2807 = vadd.f32 %v2723, %v2799
    %v2808 = vadd.f32 %v2724, %v2800
    %v2809 = vadd.f32 %v2725, %v2801
    %v2810 = vadd.f32 %v2726, %v2802
    %v2811 = vadd.f32 %v2727, %v2803
    %v2812 = vld [vmem:[%s187 + $0x17] sm:$0x1]
    %v2813 = vlaneseq
    %v2814 = vshrl.u32 %v2813, 7
    %v2815 = vsub.s32 0, %v2814
    %v2816 = vrot.slane %v2812, %v2815
    %v2817 = vmul.f32 %v2654, %v2816
    %v2818 = vmul.f32 %v2655, %v2816
    %v2819 = vmul.f32 %v2656, %v2816
    %v2820 = vmul.f32 %v2657, %v2816
    %v2821 = vmul.f32 %v2658, %v2816
    %v2822 = vmul.f32 %v2659, %v2816
    %v2823 = vmul.f32 %v2660, %v2816
    %v2824 = vmul.f32 %v2661, %v2816
    %v2825 = vadd.f32 %v2741, %v2817
    %v2826 = vadd.f32 %v2742, %v2818
    %v2827 = vadd.f32 %v2743, %v2819
    %v2828 = vadd.f32 %v2744, %v2820
    %v2829 = vadd.f32 %v2745, %v2821
    %v2830 = vadd.f32 %v2746, %v2822
    %v2831 = vadd.f32 %v2747, %v2823
    %v2832 = vadd.f32 %v2748, %v2824
    %v2833 = vld [vmem:[%s209 + $0x17] sm:$0x1]
    %v2834 = vlaneseq
    %v2835 = vshrl.u32 %v2834, 7
    %v2836 = vsub.s32 0, %v2835
    %v2837 = vrot.slane %v2833, %v2836
    %v2838 = vmul.f32 %v2654, %v2837
    %v2839 = vmul.f32 %v2655, %v2837
    %v2840 = vmul.f32 %v2656, %v2837
    %v2841 = vmul.f32 %v2657, %v2837
    %v2842 = vmul.f32 %v2658, %v2837
    %v2843 = vmul.f32 %v2659, %v2837
    %v2844 = vmul.f32 %v2660, %v2837
    %v2845 = vmul.f32 %v2661, %v2837
    %v2846 = vadd.f32 %v2762, %v2838
    %v2847 = vadd.f32 %v2763, %v2839
    %v2848 = vadd.f32 %v2764, %v2840
    %v2849 = vadd.f32 %v2765, %v2841
    %v2850 = vadd.f32 %v2766, %v2842
    %v2851 = vadd.f32 %v2767, %v2843
    %v2852 = vadd.f32 %v2768, %v2844
    %v2853 = vadd.f32 %v2769, %v2845
    %v2854 = vrot.slane %v2654, 1
    %v2855 = vrot.slane %v2655, 1
    %v2856 = vrot.slane %v2656, 1
    %v2857 = vrot.slane %v2657, 1
    %v2858 = vrot.slane %v2658, 1
    %v2859 = vrot.slane %v2659, 1
    %v2860 = vrot.slane %v2660, 1
    %v2861 = vrot.slane %v2661, 1
    %v2862 = vsel %vm323, %v2860, %v2861
    %v2863 = vsel %vm323, %v2859, %v2860
    %v2864 = vsel %vm323, %v2858, %v2859
    %v2865 = vsel %vm323, %v2857, %v2858
    %v2866 = vsel %vm323, %v2856, %v2857
    %v2867 = vsel %vm323, %v2855, %v2856
    %v2868 = vsel %vm323, %v2854, %v2855
    %v2869 = vsel %vm323, %v2861, %v2854
    %v2870 = vsel %vm48, %v2868, 0.0
    %v2871 = vsel %vm49, %v2867, 0.0
    %v2872 = vsel %vm50, %v2866, 0.0
    %v2873 = vsel %vm51, %v2865, 0.0
    %v2874 = vsel %vm52, %v2864, 0.0
    %v2875 = vsel %vm53, %v2863, 0.0
    %v2876 = vsel %vm54, %v2862, 0.0
    %v2877 = vsel %vm55, %v2869, 0.0
    %v2878 = vld [vmem:[%s1 + $0x1a] sm:$0x1]
    %v2879 = vlaneseq
    %v2880 = vshrl.u32 %v2879, 7
    %v2881 = vsub.s32 0, %v2880
    %v2882 = vrot.slane %v2878, %v2881
    %v2883 = vmul.f32 %v2870, %v2882
    %v2884 = vmul.f32 %v2871, %v2882
    %v2885 = vmul.f32 %v2872, %v2882
    %v2886 = vmul.f32 %v2873, %v2882
    %v2887 = vmul.f32 %v2874, %v2882
    %v2888 = vmul.f32 %v2875, %v2882
    %v2889 = vmul.f32 %v2876, %v2882
    %v2890 = vmul.f32 %v2877, %v2882
    %v2891 = vadd.f32 %v2783, %v2883
    %v2892 = vadd.f32 %v2784, %v2884
    %v2893 = vadd.f32 %v2785, %v2885
    %v2894 = vadd.f32 %v2786, %v2886
    %v2895 = vadd.f32 %v2787, %v2887
    %v2896 = vadd.f32 %v2788, %v2888
    %v2897 = vadd.f32 %v2789, %v2889
    %v2898 = vadd.f32 %v2790, %v2890
    %v2899 = vld [vmem:[%s165 + $0x1a] sm:$0x1]
    %v2900 = vlaneseq
    %v2901 = vshrl.u32 %v2900, 7
    %v2902 = vsub.s32 0, %v2901
    %v2903 = vrot.slane %v2899, %v2902
    %v2904 = vmul.f32 %v2870, %v2903
    %v2905 = vmul.f32 %v2871, %v2903
    %v2906 = vmul.f32 %v2872, %v2903
    %v2907 = vmul.f32 %v2873, %v2903
    %v2908 = vmul.f32 %v2874, %v2903
    %v2909 = vmul.f32 %v2875, %v2903
    %v2910 = vmul.f32 %v2876, %v2903
    %v2911 = vmul.f32 %v2877, %v2903
    %v2912 = vadd.f32 %v2804, %v2904
    %v2913 = vadd.f32 %v2805, %v2905
    %v2914 = vadd.f32 %v2806, %v2906
    %v2915 = vadd.f32 %v2807, %v2907
    %v2916 = vadd.f32 %v2808, %v2908
    %v2917 = vadd.f32 %v2809, %v2909
    %v2918 = vadd.f32 %v2810, %v2910
    %v2919 = vadd.f32 %v2811, %v2911
    %v2920 = vld [vmem:[%s187 + $0x1a] sm:$0x1]
    %v2921 = vlaneseq
    %v2922 = vshrl.u32 %v2921, 7
    %v2923 = vsub.s32 0, %v2922
    %v2924 = vrot.slane %v2920, %v2923
    %v2925 = vmul.f32 %v2870, %v2924
    %v2926 = vmul.f32 %v2871, %v2924
    %v2927 = vmul.f32 %v2872, %v2924
    %v2928 = vmul.f32 %v2873, %v2924
    %v2929 = vmul.f32 %v2874, %v2924
    %v2930 = vmul.f32 %v2875, %v2924
    %v2931 = vmul.f32 %v2876, %v2924
    %v2932 = vmul.f32 %v2877, %v2924
    %v2933 = vadd.f32 %v2825, %v2925
    %v2934 = vadd.f32 %v2826, %v2926
    %v2935 = vadd.f32 %v2827, %v2927
    %v2936 = vadd.f32 %v2828, %v2928
    %v2937 = vadd.f32 %v2829, %v2929
    %v2938 = vadd.f32 %v2830, %v2930
    %v2939 = vadd.f32 %v2831, %v2931
    %v2940 = vadd.f32 %v2832, %v2932
    %v2941 = vld [vmem:[%s209 + $0x1a] sm:$0x1]
    %v2942 = vlaneseq
    %v2943 = vshrl.u32 %v2942, 7
    %v2944 = vsub.s32 0, %v2943
    %v2945 = vrot.slane %v2941, %v2944
    %v2946 = vmul.f32 %v2870, %v2945
    %v2947 = vmul.f32 %v2871, %v2945
    %v2948 = vmul.f32 %v2872, %v2945
    %v2949 = vmul.f32 %v2873, %v2945
    %v2950 = vmul.f32 %v2874, %v2945
    %v2951 = vmul.f32 %v2875, %v2945
    %v2952 = vmul.f32 %v2876, %v2945
    %v2953 = vmul.f32 %v2877, %v2945
    %v2954 = vadd.f32 %v2846, %v2946
    %v2955 = vadd.f32 %v2847, %v2947
    %v2956 = vadd.f32 %v2848, %v2948
    %v2957 = vadd.f32 %v2849, %v2949
    %v2958 = vadd.f32 %v2850, %v2950
    %v2959 = vadd.f32 %v2851, %v2951
    %v2960 = vadd.f32 %v2852, %v2952
    %v2961 = vadd.f32 %v2853, %v2953
    %2962 = vrot.lane.b32.xlu0 %v2891, 64
    %v2963 = vpop.permute.xlu0 %2962
    %2964 = vrot.lane.b32.xlu0 %v2892, 64
    %v2965 = vpop.permute.xlu0 %2964
    %2966 = vrot.lane.b32.xlu0 %v2893, 64
    %v2967 = vpop.permute.xlu0 %2966
    %2968 = vrot.lane.b32.xlu0 %v2894, 64
    %v2969 = vpop.permute.xlu0 %2968
    %2970 = vrot.lane.b32.xlu0 %v2895, 64
    %v2971 = vpop.permute.xlu0 %2970
    %2972 = vrot.lane.b32.xlu0 %v2896, 64
    %v2973 = vpop.permute.xlu0 %2972
    %2974 = vrot.lane.b32.xlu0 %v2897, 64
    %v2975 = vpop.permute.xlu0 %2974
    %2976 = vrot.lane.b32.xlu0 %v2898, 64
    %v2977 = vpop.permute.xlu0 %2976
    %vm2978 = vcmask 523264
    %2979 = vst.msk [vmem:[#allocation2] sm:$0xff] %vm2978, %v2891
    %2980 = vst.msk [vmem:[#allocation2 + $0x8] sm:$0xff] %vm2978, %v2892
    %2981 = vst.msk [vmem:[#allocation2 + $0x10] sm:$0xff] %vm2978, %v2893
    %2982 = vst.msk [vmem:[#allocation2 + $0x18] sm:$0xff] %vm2978, %v2894
    %2983 = vst.msk [vmem:[#allocation2 + $0x20] sm:$0xff] %vm2978, %v2895
    %2984 = vst.msk [vmem:[#allocation2 + $0x28] sm:$0xff] %vm2978, %v2896
    %2985 = vst.msk [vmem:[#allocation2 + $0x30] sm:$0xff] %vm2978, %v2897
    %2986 = vst.msk [vmem:[#allocation2 + $0x38] sm:$0xff] %vm2978, %v2898
    %s2987 = scalar_lea.vmem [#allocation2], 64
    %2988 = vst.msk [vmem:[%s2987] sm:$0xff] %vm2978, %v2963
    %2989 = vst.msk [vmem:[%s2987 + $0x8] sm:$0xff] %vm2978, %v2965
    %2990 = vst.msk [vmem:[%s2987 + $0x10] sm:$0xff] %vm2978, %v2967
    %2991 = vst.msk [vmem:[%s2987 + $0x18] sm:$0xff] %vm2978, %v2969
    %2992 = vst.msk [vmem:[%s2987 + $0x20] sm:$0xff] %vm2978, %v2971
    %2993 = vst.msk [vmem:[%s2987 + $0x28] sm:$0xff] %vm2978, %v2973
    %2994 = vst.msk [vmem:[%s2987 + $0x30] sm:$0xff] %vm2978, %v2975
    %2995 = vst.msk [vmem:[%s2987 + $0x38] sm:$0xff] %vm2978, %v2977
    %2996 = vrot.lane.b32.xlu0 %v2912, 64
    %v2997 = vpop.permute.xlu0 %2996
    %2998 = vrot.lane.b32.xlu0 %v2913, 64
    %v2999 = vpop.permute.xlu0 %2998
    %3000 = vrot.lane.b32.xlu0 %v2914, 64
    %v3001 = vpop.permute.xlu0 %3000
    %3002 = vrot.lane.b32.xlu0 %v2915, 64
    %v3003 = vpop.permute.xlu0 %3002
    %3004 = vrot.lane.b32.xlu0 %v2916, 64
    %v3005 = vpop.permute.xlu0 %3004
    %3006 = vrot.lane.b32.xlu0 %v2917, 64
    %v3007 = vpop.permute.xlu0 %3006
    %3008 = vrot.lane.b32.xlu0 %v2918, 64
    %v3009 = vpop.permute.xlu0 %3008
    %3010 = vrot.lane.b32.xlu0 %v2919, 64
    %v3011 = vpop.permute.xlu0 %3010
    %s3012 = scalar_lea.vmem [#allocation2], 128
    %3013 = vst.msk [vmem:[%s3012] sm:$0xff] %vm2978, %v2912
    %3014 = vst.msk [vmem:[%s3012 + $0x8] sm:$0xff] %vm2978, %v2913
    %3015 = vst.msk [vmem:[%s3012 + $0x10] sm:$0xff] %vm2978, %v2914
    %3016 = vst.msk [vmem:[%s3012 + $0x18] sm:$0xff] %vm2978, %v2915
    %3017 = vst.msk [vmem:[%s3012 + $0x20] sm:$0xff] %vm2978, %v2916
    %3018 = vst.msk [vmem:[%s3012 + $0x28] sm:$0xff] %vm2978, %v2917
    %3019 = vst.msk [vmem:[%s3012 + $0x30] sm:$0xff] %vm2978, %v2918
    %3020 = vst.msk [vmem:[%s3012 + $0x38] sm:$0xff] %vm2978, %v2919
    %s3021 = scalar_lea.vmem [#allocation2], 192
    %3022 = vst.msk [vmem:[%s3021] sm:$0xff] %vm2978, %v2997
    %3023 = vst.msk [vmem:[%s3021 + $0x8] sm:$0xff] %vm2978, %v2999
    %3024 = vst.msk [vmem:[%s3021 + $0x10] sm:$0xff] %vm2978, %v3001
    %3025 = vst.msk [vmem:[%s3021 + $0x18] sm:$0xff] %vm2978, %v3003
    %3026 = vst.msk [vmem:[%s3021 + $0x20] sm:$0xff] %vm2978, %v3005
    %3027 = vst.msk [vmem:[%s3021 + $0x28] sm:$0xff] %vm2978, %v3007
    %3028 = vst.msk [vmem:[%s3021 + $0x30] sm:$0xff] %vm2978, %v3009
    %3029 = vst.msk [vmem:[%s3021 + $0x38] sm:$0xff] %vm2978, %v3011
    %3030 = vrot.lane.b32.xlu0 %v2933, 64
    %v3031 = vpop.permute.xlu0 %3030
    %3032 = vrot.lane.b32.xlu0 %v2934, 64
    %v3033 = vpop.permute.xlu0 %3032
    %3034 = vrot.lane.b32.xlu0 %v2935, 64
    %v3035 = vpop.permute.xlu0 %3034
    %3036 = vrot.lane.b32.xlu0 %v2936, 64
    %v3037 = vpop.permute.xlu0 %3036
    %3038 = vrot.lane.b32.xlu0 %v2937, 64
    %v3039 = vpop.permute.xlu0 %3038
    %3040 = vrot.lane.b32.xlu0 %v2938, 64
    %v3041 = vpop.permute.xlu0 %3040
    %3042 = vrot.lane.b32.xlu0 %v2939, 64
    %v3043 = vpop.permute.xlu0 %3042
    %3044 = vrot.lane.b32.xlu0 %v2940, 64
    %v3045 = vpop.permute.xlu0 %3044
    %s3046 = scalar_lea.vmem [#allocation2], 256
    %3047 = vst.msk [vmem:[%s3046] sm:$0xff] %vm2978, %v2933
    %3048 = vst.msk [vmem:[%s3046 + $0x8] sm:$0xff] %vm2978, %v2934
    %3049 = vst.msk [vmem:[%s3046 + $0x10] sm:$0xff] %vm2978, %v2935
    %3050 = vst.msk [vmem:[%s3046 + $0x18] sm:$0xff] %vm2978, %v2936
    %3051 = vst.msk [vmem:[%s3046 + $0x20] sm:$0xff] %vm2978, %v2937
    %3052 = vst.msk [vmem:[%s3046 + $0x28] sm:$0xff] %vm2978, %v2938
    %3053 = vst.msk [vmem:[%s3046 + $0x30] sm:$0xff] %vm2978, %v2939
    %3054 = vst.msk [vmem:[%s3046 + $0x38] sm:$0xff] %vm2978, %v2940
    %s3055 = scalar_lea.vmem [#allocation2], 320
    %3056 = vst.msk [vmem:[%s3055] sm:$0xff] %vm2978, %v3031
    %3057 = vst.msk [vmem:[%s3055 + $0x8] sm:$0xff] %vm2978, %v3033
    %3058 = vst.msk [vmem:[%s3055 + $0x10] sm:$0xff] %vm2978, %v3035
    %3059 = vst.msk [vmem:[%s3055 + $0x18] sm:$0xff] %vm2978, %v3037
    %3060 = vst.msk [vmem:[%s3055 + $0x20] sm:$0xff] %vm2978, %v3039
    %3061 = vst.msk [vmem:[%s3055 + $0x28] sm:$0xff] %vm2978, %v3041
    %3062 = vst.msk [vmem:[%s3055 + $0x30] sm:$0xff] %vm2978, %v3043
    %3063 = vst.msk [vmem:[%s3055 + $0x38] sm:$0xff] %vm2978, %v3045
    %3064 = vrot.lane.b32.xlu0 %v2954, 64
    %v3065 = vpop.permute.xlu0 %3064
    %3066 = vrot.lane.b32.xlu0 %v2955, 64
    %v3067 = vpop.permute.xlu0 %3066
    %3068 = vrot.lane.b32.xlu0 %v2956, 64
    %v3069 = vpop.permute.xlu0 %3068
    %3070 = vrot.lane.b32.xlu0 %v2957, 64
    %v3071 = vpop.permute.xlu0 %3070
    %3072 = vrot.lane.b32.xlu0 %v2958, 64
    %v3073 = vpop.permute.xlu0 %3072
    %3074 = vrot.lane.b32.xlu0 %v2959, 64
    %v3075 = vpop.permute.xlu0 %3074
    %3076 = vrot.lane.b32.xlu0 %v2960, 64
    %v3077 = vpop.permute.xlu0 %3076
    %3078 = vrot.lane.b32.xlu0 %v2961, 64
    %v3079 = vpop.permute.xlu0 %3078
    %s3080 = scalar_lea.vmem [#allocation2], 384
    %3081 = vst.msk [vmem:[%s3080] sm:$0xff] %vm2978, %v2954
    %3082 = vst.msk [vmem:[%s3080 + $0x8] sm:$0xff] %vm2978, %v2955
    %3083 = vst.msk [vmem:[%s3080 + $0x10] sm:$0xff] %vm2978, %v2956
    %3084 = vst.msk [vmem:[%s3080 + $0x18] sm:$0xff] %vm2978, %v2957
    %3085 = vst.msk [vmem:[%s3080 + $0x20] sm:$0xff] %vm2978, %v2958
    %3086 = vst.msk [vmem:[%s3080 + $0x28] sm:$0xff] %vm2978, %v2959
    %3087 = vst.msk [vmem:[%s3080 + $0x30] sm:$0xff] %vm2978, %v2960
    %3088 = vst.msk [vmem:[%s3080 + $0x38] sm:$0xff] %vm2978, %v2961
    %s3089 = scalar_lea.vmem [#allocation2], 448
    %3090 = vst.msk [vmem:[%s3089] sm:$0xff] %vm2978, %v3065
    %3091 = vst.msk [vmem:[%s3089 + $0x8] sm:$0xff] %vm2978, %v3067
    %3092 = vst.msk [vmem:[%s3089 + $0x10] sm:$0xff] %vm2978, %v3069
    %3093 = vst.msk [vmem:[%s3089 + $0x18] sm:$0xff] %vm2978, %v3071
    %3094 = vst.msk [vmem:[%s3089 + $0x20] sm:$0xff] %vm2978, %v3073
    %3095 = vst.msk [vmem:[%s3089 + $0x28] sm:$0xff] %vm2978, %v3075
    %3096 = vst.msk [vmem:[%s3089 + $0x30] sm:$0xff] %vm2978, %v3077
    %3097 = vst.msk [vmem:[%s3089 + $0x38] sm:$0xff] %vm2978, %v3079
    // Predicated region
    $region14: #{_conv2d_forward.1} parent=1 // pred_check
      _
    $region15: #{_conv2d_forward.1} parent=1 // pred_check_branch
      %3099 = sbr.rel (0) target = $region17
    $region16: #{_conv2d_forward.1} parent=1 // pred_region
      %s3101 = ssub.s32 8192, 8192
      %3102 = vsyncadd [#allocation3], %s3101
      %s3103 = sshll.u32 [#allocation2], 4
      %s3104 = int_to_ptr.vmem [resolvable:$true] %s3103
      %3109 = dma.vmem_to_hbm [thread:$0]  %s3104, 8192, %s3, [#allocation3], 128, 128, 8
    $region17: #{_conv2d_forward.1} parent=1 // pred_fallthru
      _
    // Predicated region
    $region18: #{_conv2d_forward.1} parent=1 // pred_check
      _
    $region19: #{_conv2d_forward.1} parent=1 // pred_check_branch
      %3111 = sbr.rel (0) target = $region21
    $region20: #{_conv2d_forward.1} parent=1 // pred_region
      %3112 = dma.done [#allocation3], 8192
    $region21: #{_conv2d_forward.1} parent=1 // pred_fallthru
      _
    %3113 = vsyncpa [#allocation3], 1

</llo_original>
